<compile_context>
chip_gen: v7x
topology: tpu7x:2x2x1
jax: 0.10.0
libtpu: 0.0.40
codegen_flags: <defaults>
</compile_context>

<pallas_src>
import math

import jax
import jax.numpy as jnp
import numpy as np
from jax.experimental import pallas as pl
from jax.experimental.pallas import tpu as pltpu

EPS = 1e-6  # RMSNorm epsilon


def _full_spec(shape):
    # grid=(1,) -> single block covering the whole (small) array.
    return pl.BlockSpec(shape, lambda i: (0,) * len(shape))


def _rms(x, w):
    var = jnp.mean(x * x, axis=-1, keepdims=True)
    return x * jax.lax.rsqrt(var + EPS) * w


# --------------------------- fused whole-model kernel -------------------------
def _make_fused_kernel(n, hidden, n_heads, n_layers, time_cols, attn_width):
    hs = hidden // n_heads
    scale = 1.0 / math.sqrt(hs)

    def kernel(x_ref, time_ref, sin_ref, cos_ref, subr_ref, subc_ref,
               innw_ref, outnw_ref, normw_ref,
               wq_ref, wqr_ref, wk_ref, wkr_ref, wv_ref,
               wff1_ref, wff2_ref, woa_ref, wof_ref, o_ref):
        # ---- invariants, computed once and reused by every layer ----
        # block-diagonal + causal + local-window mask, built from iota + subject ids
        row = jax.lax.broadcasted_iota(jnp.int32, (n, n), 0)
        col = jax.lax.broadcasted_iota(jnp.int32, (n, n), 1)
        same = subr_ref[...] == subc_ref[...]                     # (N,1)==(1,N) -> (N,N)
        allowed = same & (row >= col) & ((row - col) < attn_width)
        bias = jnp.where(allowed, 0.0, -1e30).astype(jnp.float32)

        feat = jax.lax.broadcasted_iota(jnp.int32, (n, hidden), 1)
        time_mask = feat >= (hidden - time_cols)
        tfull = time_ref[...]                                     # time in last cols
        sin = sin_ref[...]                                        # (N, hs), same for all heads
        cos = cos_ref[...]

        # in_norm
        x = _rms(x_ref[...], innw_ref[...])                       # (N, H) residual stream

        for l in range(n_layers):                                 # static unroll
            xn = _rms(x, normw_ref[l])
            # x[:, -time_cols:] = concat(time, time**2)
            xn = jnp.where(time_mask, tfull, xn)

            # ---- feed-forward (swiglu), no lane slicing: ff1/ff2 are separate dots
            f1 = jnp.dot(xn, wff1_ref[l], preferred_element_type=jnp.float32)
            f2 = jnp.dot(xn, wff2_ref[l], preferred_element_type=jnp.float32)
            out = jnp.dot(f1 * jax.nn.sigmoid(f1) * f2, wof_ref[l],
                          preferred_element_type=jnp.float32)     # (N, H)

            # ---- attention, per head with pre-split lane-0-aligned weights
            for h in range(n_heads):
                idx = l * n_heads + h
                q = jnp.dot(xn, wq_ref[idx], preferred_element_type=jnp.float32)
                qr = jnp.dot(xn, wqr_ref[idx], preferred_element_type=jnp.float32)
                k = jnp.dot(xn, wk_ref[idx], preferred_element_type=jnp.float32)
                kr = jnp.dot(xn, wkr_ref[idx], preferred_element_type=jnp.float32)
                v = jnp.dot(xn, wv_ref[idx], preferred_element_type=jnp.float32)
                # rotary: rot already folded into wqr/wkr offline
                qh = q * cos + qr * sin
                kh = k * cos + kr * sin
                s = jax.lax.dot_general(qh, kh, (((1,), (1,)), ((), ())),
                                        preferred_element_type=jnp.float32)
                s = s * scale + bias
                m = jnp.max(s, axis=-1, keepdims=True)
                p = jnp.exp(s - m)
                p = p / jnp.sum(p, axis=-1, keepdims=True)
                oh = jnp.dot(p, v, preferred_element_type=jnp.float32)        # (N, hs)
                out = out + jnp.dot(oh, woa_ref[idx],
                                    preferred_element_type=jnp.float32)       # (N, H)

            x = x + out                                           # residual add

        # out_norm
        o_ref[...] = _rms(x, outnw_ref[...])

    return kernel


# --------------------------- plain-JAX glue (setup) ---------------------------
def _rotate_matrix(hidden):
    """Constant matrix R s.t. x @ R == rotate_every_two_v2(x)."""
    r = np.zeros((hidden, hidden), np.float32)
    for i in range(hidden // 2):
        r[2 * i + 1, 2 * i] = -1.0
        r[2 * i, 2 * i + 1] = 1.0
    return jnp.asarray(r)


def _pos_embed_head(ages, head_dim):
    """fixed_pos_embedding -> per-head (N, head_dim) sin/cos (identical for all heads)."""
    inv_freq = 1.0 / (10000.0 ** jnp.linspace(0.0, 2.0, head_dim // 2))
    t = ages.astype(jnp.float32)[:, None] * inv_freq[None, :]
    n = ages.shape[0]
    sin = jnp.stack([jnp.sin(t), jnp.sin(t)], axis=-1).reshape(n, head_dim)
    cos = jnp.stack([jnp.cos(t), jnp.cos(t)], axis=-1).reshape(n, head_dim)
    return sin, cos


def femr_transformer(params, tokens, time_data, ages, subject_lengths,
                     *, n_heads, attention_width):
    x0 = params["embed"][tokens]                          # embedding gather (glue)
    n, hidden = x0.shape
    hs = hidden // n_heads
    layers = params["layers"]
    n_layers = len(layers)
    inter = layers[0]["wo"].shape[0] - hidden

    all_time = jnp.concatenate([time_data, time_data ** 2], axis=-1).astype(x0.dtype)
    time_cols = all_time.shape[-1]
    time_full = jnp.zeros((n, hidden), x0.dtype).at[:, hidden - time_cols:].set(all_time)

    sin_h, cos_h = _pos_embed_head(ages, hs)

    # per-token subject id, as (N,1) and (1,N) int32 for in-kernel mask construction
    sub = np.concatenate([np.full(l, i, np.int32) for i, l in enumerate(subject_lengths)])
    sub_row = jnp.asarray(sub.reshape(n, 1))
    sub_col = jnp.asarray(sub.reshape(1, n))

    rot = _rotate_matrix(hidden)

    # ---- offline weight preprocessing: split wi/wo, fold rotate matrix into q/k
    normw, wq, wqr, wk, wkr, wv, wff1, wff2, woa, wof = ([] for _ in range(10))
    for lyr in layers:
        wi = lyr["wi"]                                    # (H, 2I + 3H): [ff1|ff2|q|k|v]
        wo = lyr["wo"]                                    # (H + I, H):   [attn; ff]
        normw.append(lyr["norm"].reshape(1, hidden))
        wff1.append(wi[:, :inter])
        wff2.append(wi[:, inter:2 * inter])
        q_w = wi[:, 2 * inter: 2 * inter + hidden]
        k_w = wi[:, 2 * inter + hidden: 2 * inter + 2 * hidden]
        v_w = wi[:, 2 * inter + 2 * hidden:]
        q_rot = q_w @ rot
        k_rot = k_w @ rot
        for h in range(n_heads):
            sl = slice(h * hs, (h + 1) * hs)
            wq.append(q_w[:, sl]);  wqr.append(q_rot[:, sl])
            wk.append(k_w[:, sl]);  wkr.append(k_rot[:, sl])
            wv.append(v_w[:, sl])
            woa.append(wo[sl, :])
        wof.append(wo[hidden:, :])

    normw_s = jnp.stack(normw)                            # (L, 1, H)
    wq_s, wqr_s = jnp.stack(wq), jnp.stack(wqr)           # (L*NH, H, hs)
    wk_s, wkr_s = jnp.stack(wk), jnp.stack(wkr)
    wv_s = jnp.stack(wv)
    wff1_s, wff2_s = jnp.stack(wff1), jnp.stack(wff2)     # (L, H, I)
    woa_s = jnp.stack(woa)                                # (L*NH, hs, H)
    wof_s = jnp.stack(wof)                                # (L, I, H)

    kernel = _make_fused_kernel(n, hidden, n_heads, n_layers, time_cols, attention_width)
    args = (x0, time_full, sin_h, cos_h, sub_row, sub_col,
            params["in_norm"].reshape(1, hidden), params["out_norm"].reshape(1, hidden),
            normw_s, wq_s, wqr_s, wk_s, wkr_s, wv_s, wff1_s, wff2_s, woa_s, wof_s)

    return pl.pallas_call(
        kernel,
        out_shape=jax.ShapeDtypeStruct((n, hidden), x0.dtype),
        grid=(1,),
        in_specs=[_full_spec(a.shape) for a in args],
        out_specs=_full_spec((n, hidden)),
        compiler_params=pltpu.CompilerParams(dimension_semantics=("arbitrary",)),
    )(*args)


# ------------------------------ pure-JAX reference ----------------------------
def _ref_rmsnorm(x, w):
    var = jnp.mean(x * x, axis=-1, keepdims=True)
    return x * jax.lax.rsqrt(var + EPS) * w


def _ref_attn_bias(subject_lengths, n, attention_width):
    sub = np.concatenate([np.full(l, i) for i, l in enumerate(subject_lengths)])
    pos = np.arange(n)
    allowed = (sub[:, None] == sub[None, :]) \
        & (pos[:, None] >= pos[None, :]) \
        & (pos[:, None] - pos[None, :] < attention_width)
    return jnp.asarray(np.where(allowed, 0.0, -1e30).astype(np.float32))


def _ref_layer(x, time_full, time_cols, sin_f, cos_f, bias, rot, normw, wi, wo, n_heads):
    n, hidden = x.shape
    inter = wo.shape[0] - hidden
    hs = hidden // n_heads
    xn = _ref_rmsnorm(x, normw)
    col = jnp.arange(hidden)[None, :]
    xn = jnp.where(col >= hidden - time_cols, time_full, xn)
    t = xn @ wi
    ff = t[:, : 2 * inter]
    qkv = t[:, 2 * inter:]
    q, k, v = qkv[:, :hidden], qkv[:, hidden: 2 * hidden], qkv[:, 2 * hidden:]
    qr = q * cos_f + (q @ rot) * sin_f
    kr = k * cos_f + (k @ rot) * sin_f
    scale = 1.0 / math.sqrt(hs)
    heads = []
    for h in range(n_heads):
        sl = slice(h * hs, (h + 1) * hs)
        s = qr[:, sl] @ kr[:, sl].T * scale + bias
        heads.append(jax.nn.softmax(s, axis=-1) @ v[:, sl])
    attn = jnp.concatenate(heads, axis=-1)
    x1, x2 = ff[:, :inter], ff[:, inter:]
    ffa = x1 * jax.nn.sigmoid(x1) * x2
    return x + jnp.concatenate([attn, ffa], axis=-1) @ wo


def femr_transformer_ref(params, tokens, time_data, ages, subject_lengths,
                         *, n_heads, attention_width):
    x = params["embed"][tokens]
    x = _ref_rmsnorm(x, params["in_norm"])
    n, hidden = x.shape
    hs = hidden // n_heads
    all_time = jnp.concatenate([time_data, time_data ** 2], axis=-1).astype(x.dtype)
    time_cols = all_time.shape[-1]
    time_full = jnp.zeros((n, hidden), x.dtype).at[:, hidden - time_cols:].set(all_time)
    sin_h, cos_h = _pos_embed_head(ages, hs)
    sin_f, cos_f = jnp.tile(sin_h, (1, n_heads)), jnp.tile(cos_h, (1, n_heads))
    bias = _ref_attn_bias(subject_lengths, n, attention_width)
    rot = _rotate_matrix(hidden)
    for layer in params["layers"]:
        x = _ref_layer(x, time_full, time_cols, sin_f, cos_f, bias, rot,
                       layer["norm"], layer["wi"], layer["wo"], n_heads)
    return _ref_rmsnorm(x, params["out_norm"])


# ------------------------------------ main ------------------------------------
if __name__ == "__main__":
    N, H, I, NH, L, V = 8, 32, 64, 2, 2, 100
    ATTN_WIDTH = 4
    subject_lengths = [5, 3]          # sums to N; block-diagonal attention groups

    key = jax.random.PRNGKey(0)
    ks = jax.random.split(key, 8)
    tokens = jax.random.randint(ks[0], (N,), 0, V)
    ages = jnp.cumsum(jax.random.uniform(ks[1], (N,), minval=0.0, maxval=5.0)).astype(jnp.float32)
    time_data = jax.random.normal(ks[2], (N, 2), dtype=jnp.float32)

    params = {
        "embed": 0.02 * jax.random.normal(ks[3], (V, H), dtype=jnp.float32),
        "in_norm": jnp.ones((H,), jnp.float32),
        "out_norm": jnp.ones((H,), jnp.float32),
        "layers": [],
    }
    for i in range(L):
        kk = jax.random.fold_in(ks[4], i)
        k1, k2 = jax.random.split(kk)
        params["layers"].append({
            "norm": jnp.ones((H,), jnp.float32),
            # input_proj: hidden -> 3*hidden + 2*intermediate (swiglu), no bias
            "wi": 0.02 * jax.random.normal(k1, (H, 3 * H + 2 * I), dtype=jnp.float32),
            # output_proj: hidden + intermediate -> hidden, no bias
            "wo": 0.02 * jax.random.normal(k2, (H + I, H), dtype=jnp.float32),
        })

    out = femr_transformer(params, tokens, time_data, ages, subject_lengths,
                           n_heads=NH, attention_width=ATTN_WIDTH)
    out = jax.block_until_ready(out)

    ref = femr_transformer_ref(params, tokens, time_data, ages, subject_lengths,
                               n_heads=NH, attention_width=ATTN_WIDTH)
    np.testing.assert_allclose(np.asarray(out), np.asarray(ref), rtol=2e-4, atol=2e-4)
    assert out.shape == (N, H)
    print("KERNEL_OK")
</pallas_src>

<mosaic_0001>
module attributes {stable_mosaic.version = 11 : i64} {
  func.func @kernel(%arg0: i32, %arg1: memref<8x32xf32, #tpu.memory_space<vmem>>, %arg2: memref<8x32xf32, #tpu.memory_space<vmem>>, %arg3: memref<8x16xf32, #tpu.memory_space<vmem>>, %arg4: memref<8x16xf32, #tpu.memory_space<vmem>>, %arg5: memref<8x1xi32, #tpu.memory_space<vmem>>, %arg6: memref<1x8xi32, #tpu.memory_space<vmem>>, %arg7: memref<1x32xf32, #tpu.memory_space<vmem>>, %arg8: memref<1x32xf32, #tpu.memory_space<vmem>>, %arg9: memref<2x1x32xf32, #tpu.memory_space<vmem>>, %arg10: memref<4x32x16xf32, #tpu.memory_space<vmem>>, %arg11: memref<4x32x16xf32, #tpu.memory_space<vmem>>, %arg12: memref<4x32x16xf32, #tpu.memory_space<vmem>>, %arg13: memref<4x32x16xf32, #tpu.memory_space<vmem>>, %arg14: memref<4x32x16xf32, #tpu.memory_space<vmem>>, %arg15: memref<2x32x64xf32, #tpu.memory_space<vmem>>, %arg16: memref<2x32x64xf32, #tpu.memory_space<vmem>>, %arg17: memref<4x16x32xf32, #tpu.memory_space<vmem>>, %arg18: memref<2x64x32xf32, #tpu.memory_space<vmem>>, %arg19: memref<8x32xf32, #tpu.memory_space<vmem>>) attributes {dimension_semantics = [#tpu.dimension_semantics<arbitrary>], iteration_bounds = array<i64: 1>, scalar_prefetch = 0 : i64, scratch_operands = 0 : i64, tpu.core_type = #tpu.core_type<tc>, window_params = [{pipeline_mode = #tpu.pipeline_mode<synchronous>, transform_indices = @transform_0, window_bounds = array<i64: 8, 32>}, {pipeline_mode = #tpu.pipeline_mode<synchronous>, transform_indices = @transform_1, window_bounds = array<i64: 8, 32>}, {pipeline_mode = #tpu.pipeline_mode<synchronous>, transform_indices = @transform_2, window_bounds = array<i64: 8, 16>}, {pipeline_mode = #tpu.pipeline_mode<synchronous>, transform_indices = @transform_3, window_bounds = array<i64: 8, 16>}, {pipeline_mode = #tpu.pipeline_mode<synchronous>, transform_indices = @transform_4, window_bounds = array<i64: 8, 1>}, {pipeline_mode = #tpu.pipeline_mode<synchronous>, transform_indices = @transform_5, window_bounds = array<i64: 1, 8>}, {pipeline_mode = #tpu.pipeline_mode<synchronous>, transform_indices = @transform_6, window_bounds = array<i64: 1, 32>}, {pipeline_mode = #tpu.pipeline_mode<synchronous>, transform_indices = @transform_7, window_bounds = array<i64: 1, 32>}, {pipeline_mode = #tpu.pipeline_mode<synchronous>, transform_indices = @transform_8, window_bounds = array<i64: 2, 1, 32>}, {pipeline_mode = #tpu.pipeline_mode<synchronous>, transform_indices = @transform_9, window_bounds = array<i64: 4, 32, 16>}, {pipeline_mode = #tpu.pipeline_mode<synchronous>, transform_indices = @transform_10, window_bounds = array<i64: 4, 32, 16>}, {pipeline_mode = #tpu.pipeline_mode<synchronous>, transform_indices = @transform_11, window_bounds = array<i64: 4, 32, 16>}, {pipeline_mode = #tpu.pipeline_mode<synchronous>, transform_indices = @transform_12, window_bounds = array<i64: 4, 32, 16>}, {pipeline_mode = #tpu.pipeline_mode<synchronous>, transform_indices = @transform_13, window_bounds = array<i64: 4, 32, 16>}, {pipeline_mode = #tpu.pipeline_mode<synchronous>, transform_indices = @transform_14, window_bounds = array<i64: 2, 32, 64>}, {pipeline_mode = #tpu.pipeline_mode<synchronous>, transform_indices = @transform_15, window_bounds = array<i64: 2, 32, 64>}, {pipeline_mode = #tpu.pipeline_mode<synchronous>, transform_indices = @transform_16, window_bounds = array<i64: 4, 16, 32>}, {pipeline_mode = #tpu.pipeline_mode<synchronous>, transform_indices = @transform_17, window_bounds = array<i64: 2, 64, 32>}, {pipeline_mode = #tpu.pipeline_mode<synchronous>, transform_indices = @transform_18, window_bounds = array<i64: 8, 32>}]} {
    %0 = tpu.iota {dimensions = array<i32: 0>} : vector<8x8xi32>
    %1 = tpu.iota {dimensions = array<i32: 1>} : vector<8x8xi32>
    %c0 = arith.constant 0 : index
    %c0_0 = arith.constant 0 : index
    %2 = vector.load %arg5[%c0, %c0_0] : memref<8x1xi32, #tpu.memory_space<vmem>>, vector<8x1xi32>
    %c0_1 = arith.constant 0 : index
    %c0_2 = arith.constant 0 : index
    %3 = vector.load %arg6[%c0_1, %c0_2] : memref<1x8xi32, #tpu.memory_space<vmem>>, vector<1x8xi32>
    %4 = vector.broadcast %2 : vector<8x1xi32> to vector<8x8xi32>
    %5 = vector.broadcast %3 : vector<1x8xi32> to vector<8x8xi32>
    %6 = arith.cmpi eq, %4, %5 : vector<8x8xi32>
    %7 = arith.cmpi sge, %0, %1 : vector<8x8xi32>
    %8 = arith.andi %6, %7 : vector<8x8xi1>
    %9 = arith.subi %0, %1 : vector<8x8xi32>
    %c4_i32 = arith.constant 4 : i32
    %10 = vector.broadcast %c4_i32 : i32 to vector<8x8xi32>
    %11 = arith.cmpi slt, %9, %10 : vector<8x8xi32>
    %12 = arith.andi %8, %11 : vector<8x8xi1>
    %cst = arith.constant 0.000000e+00 : f32
    %cst_3 = arith.constant -1.000000e+30 : f32
    %13 = vector.broadcast %cst : f32 to vector<8x8xf32>
    %14 = vector.broadcast %cst_3 : f32 to vector<8x8xf32>
    %15 = arith.select %12, %13, %14 : vector<8x8xi1>, vector<8x8xf32>
    %16 = tpu.iota {dimensions = array<i32: 1>} : vector<8x32xi32>
    %c28_i32 = arith.constant 28 : i32
    %17 = vector.broadcast %c28_i32 : i32 to vector<8x32xi32>
    %18 = arith.cmpi sge, %16, %17 : vector<8x32xi32>
    %c0_4 = arith.constant 0 : index
    %c0_5 = arith.constant 0 : index
    %19 = vector.load %arg2[%c0_4, %c0_5] : memref<8x32xf32, #tpu.memory_space<vmem>>, vector<8x32xf32>
    %c0_6 = arith.constant 0 : index
    %c0_7 = arith.constant 0 : index
    %20 = vector.load %arg3[%c0_6, %c0_7] : memref<8x16xf32, #tpu.memory_space<vmem>>, vector<8x16xf32>
    %c0_8 = arith.constant 0 : index
    %c0_9 = arith.constant 0 : index
    %21 = vector.load %arg4[%c0_8, %c0_9] : memref<8x16xf32, #tpu.memory_space<vmem>>, vector<8x16xf32>
    %c0_10 = arith.constant 0 : index
    %c0_11 = arith.constant 0 : index
    %22 = vector.load %arg1[%c0_10, %c0_11] : memref<8x32xf32, #tpu.memory_space<vmem>>, vector<8x32xf32>
    %c0_12 = arith.constant 0 : index
    %c0_13 = arith.constant 0 : index
    %23 = vector.load %arg7[%c0_12, %c0_13] : memref<1x32xf32, #tpu.memory_space<vmem>>, vector<1x32xf32>
    %24 = arith.mulf %22, %22 : vector<8x32xf32>
    %cst_14 = arith.constant dense<0.000000e+00> : vector<8xf32>
    %25 = vector.multi_reduction <add>, %24, %cst_14 [1] : vector<8x32xf32> to vector<8xf32>
    %26 = vector.shape_cast %25 : vector<8xf32> to vector<8x1xf32>
    %cst_15 = arith.constant 3.200000e+01 : f32
    %27 = vector.broadcast %cst_15 : f32 to vector<8x1xf32>
    %28 = arith.divf %26, %27 : vector<8x1xf32>
    %cst_16 = arith.constant 9.99999997E-7 : f32
    %29 = vector.broadcast %cst_16 : f32 to vector<8x1xf32>
    %30 = arith.addf %28, %29 : vector<8x1xf32>
    %31 = math.rsqrt %30 : vector<8x1xf32>
    %32 = vector.broadcast %31 : vector<8x1xf32> to vector<8x32xf32>
    %33 = arith.mulf %22, %32 : vector<8x32xf32>
    %34 = vector.broadcast %23 : vector<1x32xf32> to vector<8x32xf32>
    %35 = arith.mulf %33, %34 : vector<8x32xf32>
    %c0_17 = arith.constant 0 : index
    %c0_18 = arith.constant 0 : index
    %c0_19 = arith.constant 0 : index
    %36 = vector.load %arg9[%c0_17, %c0_18, %c0_19] : memref<2x1x32xf32, #tpu.memory_space<vmem>>, vector<1x1x32xf32>
    %37 = vector.shape_cast %36 : vector<1x1x32xf32> to vector<1x32xf32>
    %38 = arith.mulf %35, %35 : vector<8x32xf32>
    %cst_20 = arith.constant dense<0.000000e+00> : vector<8xf32>
    %39 = vector.multi_reduction <add>, %38, %cst_20 [1] : vector<8x32xf32> to vector<8xf32>
    %40 = vector.shape_cast %39 : vector<8xf32> to vector<8x1xf32>
    %cst_21 = arith.constant 3.200000e+01 : f32
    %41 = vector.broadcast %cst_21 : f32 to vector<8x1xf32>
    %42 = arith.divf %40, %41 : vector<8x1xf32>
    %cst_22 = arith.constant 9.99999997E-7 : f32
    %43 = vector.broadcast %cst_22 : f32 to vector<8x1xf32>
    %44 = arith.addf %42, %43 : vector<8x1xf32>
    %45 = math.rsqrt %44 : vector<8x1xf32>
    %46 = vector.broadcast %45 : vector<8x1xf32> to vector<8x32xf32>
    %47 = arith.mulf %35, %46 : vector<8x32xf32>
    %48 = vector.broadcast %37 : vector<1x32xf32> to vector<8x32xf32>
    %49 = arith.mulf %47, %48 : vector<8x32xf32>
    %50 = arith.select %18, %19, %49 : vector<8x32xi1>, vector<8x32xf32>
    %c0_23 = arith.constant 0 : index
    %c0_24 = arith.constant 0 : index
    %c0_25 = arith.constant 0 : index
    %51 = vector.load %arg15[%c0_23, %c0_24, %c0_25] : memref<2x32x64xf32, #tpu.memory_space<vmem>>, vector<1x32x64xf32>
    %52 = vector.shape_cast %51 : vector<1x32x64xf32> to vector<32x64xf32>
    %cst_26 = arith.constant dense<0.000000e+00> : vector<8x64xf32>
    %53 = tpu.matmul %50, %52, %cst_26 {dimension_numbers = #tpu.dot_dimension_numbers<[1], [0], [0], [1], [0, 0, 1, 1], [], []>} : vector<8x32xf32>, vector<32x64xf32>, vector<8x64xf32> -> vector<8x64xf32>
    %c0_27 = arith.constant 0 : index
    %c0_28 = arith.constant 0 : index
    %c0_29 = arith.constant 0 : index
    %54 = vector.load %arg16[%c0_27, %c0_28, %c0_29] : memref<2x32x64xf32, #tpu.memory_space<vmem>>, vector<1x32x64xf32>
    %55 = vector.shape_cast %54 : vector<1x32x64xf32> to vector<32x64xf32>
    %cst_30 = arith.constant dense<0.000000e+00> : vector<8x64xf32>
    %56 = tpu.matmul %50, %55, %cst_30 {dimension_numbers = #tpu.dot_dimension_numbers<[1], [0], [0], [1], [0, 0, 1, 1], [], []>} : vector<8x32xf32>, vector<32x64xf32>, vector<8x64xf32> -> vector<8x64xf32>
    %57 = arith.negf %53 : vector<8x64xf32>
    %58 = math.exp %57 : vector<8x64xf32>
    %cst_31 = arith.constant 1.000000e+00 : f32
    %59 = vector.broadcast %cst_31 : f32 to vector<8x64xf32>
    %60 = arith.addf %59, %58 : vector<8x64xf32>
    %61 = arith.divf %59, %60 : vector<8x64xf32>
    %62 = arith.mulf %53, %61 : vector<8x64xf32>
    %63 = arith.mulf %62, %56 : vector<8x64xf32>
    %c0_32 = arith.constant 0 : index
    %c0_33 = arith.constant 0 : index
    %c0_34 = arith.constant 0 : index
    %64 = vector.load %arg18[%c0_32, %c0_33, %c0_34] : memref<2x64x32xf32, #tpu.memory_space<vmem>>, vector<1x64x32xf32>
    %65 = vector.shape_cast %64 : vector<1x64x32xf32> to vector<64x32xf32>
    %cst_35 = arith.constant dense<0.000000e+00> : vector<8x32xf32>
    %66 = tpu.matmul %63, %65, %cst_35 {dimension_numbers = #tpu.dot_dimension_numbers<[1], [0], [0], [1], [0, 0, 1, 1], [], []>} : vector<8x64xf32>, vector<64x32xf32>, vector<8x32xf32> -> vector<8x32xf32>
    %c0_36 = arith.constant 0 : index
    %c0_37 = arith.constant 0 : index
    %c0_38 = arith.constant 0 : index
    %67 = vector.load %arg10[%c0_36, %c0_37, %c0_38] : memref<4x32x16xf32, #tpu.memory_space<vmem>>, vector<1x32x16xf32>
    %68 = vector.shape_cast %67 : vector<1x32x16xf32> to vector<32x16xf32>
    %cst_39 = arith.constant dense<0.000000e+00> : vector<8x16xf32>
    %69 = tpu.matmul %50, %68, %cst_39 {dimension_numbers = #tpu.dot_dimension_numbers<[1], [0], [0], [1], [0, 0, 1, 1], [], []>} : vector<8x32xf32>, vector<32x16xf32>, vector<8x16xf32> -> vector<8x16xf32>
    %c0_40 = arith.constant 0 : index
    %c0_41 = arith.constant 0 : index
    %c0_42 = arith.constant 0 : index
    %70 = vector.load %arg11[%c0_40, %c0_41, %c0_42] : memref<4x32x16xf32, #tpu.memory_space<vmem>>, vector<1x32x16xf32>
    %71 = vector.shape_cast %70 : vector<1x32x16xf32> to vector<32x16xf32>
    %cst_43 = arith.constant dense<0.000000e+00> : vector<8x16xf32>
    %72 = tpu.matmul %50, %71, %cst_43 {dimension_numbers = #tpu.dot_dimension_numbers<[1], [0], [0], [1], [0, 0, 1, 1], [], []>} : vector<8x32xf32>, vector<32x16xf32>, vector<8x16xf32> -> vector<8x16xf32>
    %c0_44 = arith.constant 0 : index
    %c0_45 = arith.constant 0 : index
    %c0_46 = arith.constant 0 : index
    %73 = vector.load %arg12[%c0_44, %c0_45, %c0_46] : memref<4x32x16xf32, #tpu.memory_space<vmem>>, vector<1x32x16xf32>
    %74 = vector.shape_cast %73 : vector<1x32x16xf32> to vector<32x16xf32>
    %cst_47 = arith.constant dense<0.000000e+00> : vector<8x16xf32>
    %75 = tpu.matmul %50, %74, %cst_47 {dimension_numbers = #tpu.dot_dimension_numbers<[1], [0], [0], [1], [0, 0, 1, 1], [], []>} : vector<8x32xf32>, vector<32x16xf32>, vector<8x16xf32> -> vector<8x16xf32>
    %c0_48 = arith.constant 0 : index
    %c0_49 = arith.constant 0 : index
    %c0_50 = arith.constant 0 : index
    %76 = vector.load %arg13[%c0_48, %c0_49, %c0_50] : memref<4x32x16xf32, #tpu.memory_space<vmem>>, vector<1x32x16xf32>
    %77 = vector.shape_cast %76 : vector<1x32x16xf32> to vector<32x16xf32>
    %cst_51 = arith.constant dense<0.000000e+00> : vector<8x16xf32>
    %78 = tpu.matmul %50, %77, %cst_51 {dimension_numbers = #tpu.dot_dimension_numbers<[1], [0], [0], [1], [0, 0, 1, 1], [], []>} : vector<8x32xf32>, vector<32x16xf32>, vector<8x16xf32> -> vector<8x16xf32>
    %c0_52 = arith.constant 0 : index
    %c0_53 = arith.constant 0 : index
    %c0_54 = arith.constant 0 : index
    %79 = vector.load %arg14[%c0_52, %c0_53, %c0_54] : memref<4x32x16xf32, #tpu.memory_space<vmem>>, vector<1x32x16xf32>
    %80 = vector.shape_cast %79 : vector<1x32x16xf32> to vector<32x16xf32>
    %cst_55 = arith.constant dense<0.000000e+00> : vector<8x16xf32>
    %81 = tpu.matmul %50, %80, %cst_55 {dimension_numbers = #tpu.dot_dimension_numbers<[1], [0], [0], [1], [0, 0, 1, 1], [], []>} : vector<8x32xf32>, vector<32x16xf32>, vector<8x16xf32> -> vector<8x16xf32>
    %82 = arith.mulf %69, %21 : vector<8x16xf32>
    %83 = arith.mulf %72, %20 : vector<8x16xf32>
    %84 = arith.addf %82, %83 : vector<8x16xf32>
    %85 = arith.mulf %75, %21 : vector<8x16xf32>
    %86 = arith.mulf %78, %20 : vector<8x16xf32>
    %87 = arith.addf %85, %86 : vector<8x16xf32>
    %cst_56 = arith.constant dense<0.000000e+00> : vector<8x8xf32>
    %88 = tpu.matmul %84, %87, %cst_56 {dimension_numbers = #tpu.dot_dimension_numbers<[1], [1], [0], [0], [0, 0, 1, 0], [], []>} : vector<8x16xf32>, vector<8x16xf32>, vector<8x8xf32> -> vector<8x8xf32>
    %cst_57 = arith.constant 2.500000e-01 : f32
    %89 = vector.broadcast %cst_57 : f32 to vector<8x8xf32>
    %90 = arith.mulf %88, %89 : vector<8x8xf32>
    %91 = arith.addf %90, %15 : vector<8x8xf32>
    %cst_58 = arith.constant dense<0xFF800000> : vector<8xf32>
    %92 = vector.multi_reduction <maximumf>, %91, %cst_58 [1] : vector<8x8xf32> to vector<8xf32>
    %93 = vector.shape_cast %92 : vector<8xf32> to vector<8x1xf32>
    %94 = vector.broadcast %93 : vector<8x1xf32> to vector<8x8xf32>
    %95 = arith.subf %91, %94 : vector<8x8xf32>
    %96 = math.exp %95 : vector<8x8xf32>
    %cst_59 = arith.constant dense<0.000000e+00> : vector<8xf32>
    %97 = vector.multi_reduction <add>, %96, %cst_59 [1] : vector<8x8xf32> to vector<8xf32>
    %98 = vector.shape_cast %97 : vector<8xf32> to vector<8x1xf32>
    %99 = vector.broadcast %98 : vector<8x1xf32> to vector<8x8xf32>
    %100 = arith.divf %96, %99 : vector<8x8xf32>
    %cst_60 = arith.constant dense<0.000000e+00> : vector<8x16xf32>
    %101 = tpu.matmul %100, %81, %cst_60 {dimension_numbers = #tpu.dot_dimension_numbers<[1], [0], [0], [1], [0, 0, 1, 1], [], []>} : vector<8x8xf32>, vector<8x16xf32>, vector<8x16xf32> -> vector<8x16xf32>
    %c0_61 = arith.constant 0 : index
    %c0_62 = arith.constant 0 : index
    %c0_63 = arith.constant 0 : index
    %102 = vector.load %arg17[%c0_61, %c0_62, %c0_63] : memref<4x16x32xf32, #tpu.memory_space<vmem>>, vector<1x16x32xf32>
    %103 = vector.shape_cast %102 : vector<1x16x32xf32> to vector<16x32xf32>
    %cst_64 = arith.constant dense<0.000000e+00> : vector<8x32xf32>
    %104 = tpu.matmul %101, %103, %cst_64 {dimension_numbers = #tpu.dot_dimension_numbers<[1], [0], [0], [1], [0, 0, 1, 1], [], []>} : vector<8x16xf32>, vector<16x32xf32>, vector<8x32xf32> -> vector<8x32xf32>
    %105 = arith.addf %66, %104 : vector<8x32xf32>
    %c1 = arith.constant 1 : index
    %c0_65 = arith.constant 0 : index
    %c0_66 = arith.constant 0 : index
    %106 = vector.load %arg10[%c1, %c0_65, %c0_66] : memref<4x32x16xf32, #tpu.memory_space<vmem>>, vector<1x32x16xf32>
    %107 = vector.shape_cast %106 : vector<1x32x16xf32> to vector<32x16xf32>
    %cst_67 = arith.constant dense<0.000000e+00> : vector<8x16xf32>
    %108 = tpu.matmul %50, %107, %cst_67 {dimension_numbers = #tpu.dot_dimension_numbers<[1], [0], [0], [1], [0, 0, 1, 1], [], []>} : vector<8x32xf32>, vector<32x16xf32>, vector<8x16xf32> -> vector<8x16xf32>
    %c1_68 = arith.constant 1 : index
    %c0_69 = arith.constant 0 : index
    %c0_70 = arith.constant 0 : index
    %109 = vector.load %arg11[%c1_68, %c0_69, %c0_70] : memref<4x32x16xf32, #tpu.memory_space<vmem>>, vector<1x32x16xf32>
    %110 = vector.shape_cast %109 : vector<1x32x16xf32> to vector<32x16xf32>
    %cst_71 = arith.constant dense<0.000000e+00> : vector<8x16xf32>
    %111 = tpu.matmul %50, %110, %cst_71 {dimension_numbers = #tpu.dot_dimension_numbers<[1], [0], [0], [1], [0, 0, 1, 1], [], []>} : vector<8x32xf32>, vector<32x16xf32>, vector<8x16xf32> -> vector<8x16xf32>
    %c1_72 = arith.constant 1 : index
    %c0_73 = arith.constant 0 : index
    %c0_74 = arith.constant 0 : index
    %112 = vector.load %arg12[%c1_72, %c0_73, %c0_74] : memref<4x32x16xf32, #tpu.memory_space<vmem>>, vector<1x32x16xf32>
    %113 = vector.shape_cast %112 : vector<1x32x16xf32> to vector<32x16xf32>
    %cst_75 = arith.constant dense<0.000000e+00> : vector<8x16xf32>
    %114 = tpu.matmul %50, %113, %cst_75 {dimension_numbers = #tpu.dot_dimension_numbers<[1], [0], [0], [1], [0, 0, 1, 1], [], []>} : vector<8x32xf32>, vector<32x16xf32>, vector<8x16xf32> -> vector<8x16xf32>
    %c1_76 = arith.constant 1 : index
    %c0_77 = arith.constant 0 : index
    %c0_78 = arith.constant 0 : index
    %115 = vector.load %arg13[%c1_76, %c0_77, %c0_78] : memref<4x32x16xf32, #tpu.memory_space<vmem>>, vector<1x32x16xf32>
    %116 = vector.shape_cast %115 : vector<1x32x16xf32> to vector<32x16xf32>
    %cst_79 = arith.constant dense<0.000000e+00> : vector<8x16xf32>
    %117 = tpu.matmul %50, %116, %cst_79 {dimension_numbers = #tpu.dot_dimension_numbers<[1], [0], [0], [1], [0, 0, 1, 1], [], []>} : vector<8x32xf32>, vector<32x16xf32>, vector<8x16xf32> -> vector<8x16xf32>
    %c1_80 = arith.constant 1 : index
    %c0_81 = arith.constant 0 : index
    %c0_82 = arith.constant 0 : index
    %118 = vector.load %arg14[%c1_80, %c0_81, %c0_82] : memref<4x32x16xf32, #tpu.memory_space<vmem>>, vector<1x32x16xf32>
    %119 = vector.shape_cast %118 : vector<1x32x16xf32> to vector<32x16xf32>
    %cst_83 = arith.constant dense<0.000000e+00> : vector<8x16xf32>
    %120 = tpu.matmul %50, %119, %cst_83 {dimension_numbers = #tpu.dot_dimension_numbers<[1], [0], [0], [1], [0, 0, 1, 1], [], []>} : vector<8x32xf32>, vector<32x16xf32>, vector<8x16xf32> -> vector<8x16xf32>
    %121 = arith.mulf %108, %21 : vector<8x16xf32>
    %122 = arith.mulf %111, %20 : vector<8x16xf32>
    %123 = arith.addf %121, %122 : vector<8x16xf32>
    %124 = arith.mulf %114, %21 : vector<8x16xf32>
    %125 = arith.mulf %117, %20 : vector<8x16xf32>
    %126 = arith.addf %124, %125 : vector<8x16xf32>
    %cst_84 = arith.constant dense<0.000000e+00> : vector<8x8xf32>
    %127 = tpu.matmul %123, %126, %cst_84 {dimension_numbers = #tpu.dot_dimension_numbers<[1], [1], [0], [0], [0, 0, 1, 0], [], []>} : vector<8x16xf32>, vector<8x16xf32>, vector<8x8xf32> -> vector<8x8xf32>
    %cst_85 = arith.constant 2.500000e-01 : f32
    %128 = vector.broadcast %cst_85 : f32 to vector<8x8xf32>
    %129 = arith.mulf %127, %128 : vector<8x8xf32>
    %130 = arith.addf %129, %15 : vector<8x8xf32>
    %cst_86 = arith.constant dense<0xFF800000> : vector<8xf32>
    %131 = vector.multi_reduction <maximumf>, %130, %cst_86 [1] : vector<8x8xf32> to vector<8xf32>
    %132 = vector.shape_cast %131 : vector<8xf32> to vector<8x1xf32>
    %133 = vector.broadcast %132 : vector<8x1xf32> to vector<8x8xf32>
    %134 = arith.subf %130, %133 : vector<8x8xf32>
    %135 = math.exp %134 : vector<8x8xf32>
    %cst_87 = arith.constant dense<0.000000e+00> : vector<8xf32>
    %136 = vector.multi_reduction <add>, %135, %cst_87 [1] : vector<8x8xf32> to vector<8xf32>
    %137 = vector.shape_cast %136 : vector<8xf32> to vector<8x1xf32>
    %138 = vector.broadcast %137 : vector<8x1xf32> to vector<8x8xf32>
    %139 = arith.divf %135, %138 : vector<8x8xf32>
    %cst_88 = arith.constant dense<0.000000e+00> : vector<8x16xf32>
    %140 = tpu.matmul %139, %120, %cst_88 {dimension_numbers = #tpu.dot_dimension_numbers<[1], [0], [0], [1], [0, 0, 1, 1], [], []>} : vector<8x8xf32>, vector<8x16xf32>, vector<8x16xf32> -> vector<8x16xf32>
    %c1_89 = arith.constant 1 : index
    %c0_90 = arith.constant 0 : index
    %c0_91 = arith.constant 0 : index
    %141 = vector.load %arg17[%c1_89, %c0_90, %c0_91] : memref<4x16x32xf32, #tpu.memory_space<vmem>>, vector<1x16x32xf32>
    %142 = vector.shape_cast %141 : vector<1x16x32xf32> to vector<16x32xf32>
    %cst_92 = arith.constant dense<0.000000e+00> : vector<8x32xf32>
    %143 = tpu.matmul %140, %142, %cst_92 {dimension_numbers = #tpu.dot_dimension_numbers<[1], [0], [0], [1], [0, 0, 1, 1], [], []>} : vector<8x16xf32>, vector<16x32xf32>, vector<8x32xf32> -> vector<8x32xf32>
    %144 = arith.addf %105, %143 : vector<8x32xf32>
    %145 = arith.addf %35, %144 : vector<8x32xf32>
    %c1_93 = arith.constant 1 : index
    %c0_94 = arith.constant 0 : index
    %c0_95 = arith.constant 0 : index
    %146 = vector.load %arg9[%c1_93, %c0_94, %c0_95] : memref<2x1x32xf32, #tpu.memory_space<vmem>>, vector<1x1x32xf32>
    %147 = vector.shape_cast %146 : vector<1x1x32xf32> to vector<1x32xf32>
    %148 = arith.mulf %145, %145 : vector<8x32xf32>
    %cst_96 = arith.constant dense<0.000000e+00> : vector<8xf32>
    %149 = vector.multi_reduction <add>, %148, %cst_96 [1] : vector<8x32xf32> to vector<8xf32>
    %150 = vector.shape_cast %149 : vector<8xf32> to vector<8x1xf32>
    %cst_97 = arith.constant 3.200000e+01 : f32
    %151 = vector.broadcast %cst_97 : f32 to vector<8x1xf32>
    %152 = arith.divf %150, %151 : vector<8x1xf32>
    %cst_98 = arith.constant 9.99999997E-7 : f32
    %153 = vector.broadcast %cst_98 : f32 to vector<8x1xf32>
    %154 = arith.addf %152, %153 : vector<8x1xf32>
    %155 = math.rsqrt %154 : vector<8x1xf32>
    %156 = vector.broadcast %155 : vector<8x1xf32> to vector<8x32xf32>
    %157 = arith.mulf %145, %156 : vector<8x32xf32>
    %158 = vector.broadcast %147 : vector<1x32xf32> to vector<8x32xf32>
    %159 = arith.mulf %157, %158 : vector<8x32xf32>
    %160 = arith.select %18, %19, %159 : vector<8x32xi1>, vector<8x32xf32>
    %c1_99 = arith.constant 1 : index
    %c0_100 = arith.constant 0 : index
    %c0_101 = arith.constant 0 : index
    %161 = vector.load %arg15[%c1_99, %c0_100, %c0_101] : memref<2x32x64xf32, #tpu.memory_space<vmem>>, vector<1x32x64xf32>
    %162 = vector.shape_cast %161 : vector<1x32x64xf32> to vector<32x64xf32>
    %cst_102 = arith.constant dense<0.000000e+00> : vector<8x64xf32>
    %163 = tpu.matmul %160, %162, %cst_102 {dimension_numbers = #tpu.dot_dimension_numbers<[1], [0], [0], [1], [0, 0, 1, 1], [], []>} : vector<8x32xf32>, vector<32x64xf32>, vector<8x64xf32> -> vector<8x64xf32>
    %c1_103 = arith.constant 1 : index
    %c0_104 = arith.constant 0 : index
    %c0_105 = arith.constant 0 : index
    %164 = vector.load %arg16[%c1_103, %c0_104, %c0_105] : memref<2x32x64xf32, #tpu.memory_space<vmem>>, vector<1x32x64xf32>
    %165 = vector.shape_cast %164 : vector<1x32x64xf32> to vector<32x64xf32>
    %cst_106 = arith.constant dense<0.000000e+00> : vector<8x64xf32>
    %166 = tpu.matmul %160, %165, %cst_106 {dimension_numbers = #tpu.dot_dimension_numbers<[1], [0], [0], [1], [0, 0, 1, 1], [], []>} : vector<8x32xf32>, vector<32x64xf32>, vector<8x64xf32> -> vector<8x64xf32>
    %167 = arith.negf %163 : vector<8x64xf32>
    %168 = math.exp %167 : vector<8x64xf32>
    %cst_107 = arith.constant 1.000000e+00 : f32
    %169 = vector.broadcast %cst_107 : f32 to vector<8x64xf32>
    %170 = arith.addf %169, %168 : vector<8x64xf32>
    %171 = arith.divf %169, %170 : vector<8x64xf32>
    %172 = arith.mulf %163, %171 : vector<8x64xf32>
    %173 = arith.mulf %172, %166 : vector<8x64xf32>
    %c1_108 = arith.constant 1 : index
    %c0_109 = arith.constant 0 : index
    %c0_110 = arith.constant 0 : index
    %174 = vector.load %arg18[%c1_108, %c0_109, %c0_110] : memref<2x64x32xf32, #tpu.memory_space<vmem>>, vector<1x64x32xf32>
    %175 = vector.shape_cast %174 : vector<1x64x32xf32> to vector<64x32xf32>
    %cst_111 = arith.constant dense<0.000000e+00> : vector<8x32xf32>
    %176 = tpu.matmul %173, %175, %cst_111 {dimension_numbers = #tpu.dot_dimension_numbers<[1], [0], [0], [1], [0, 0, 1, 1], [], []>} : vector<8x64xf32>, vector<64x32xf32>, vector<8x32xf32> -> vector<8x32xf32>
    %c2 = arith.constant 2 : index
    %c0_112 = arith.constant 0 : index
    %c0_113 = arith.constant 0 : index
    %177 = vector.load %arg10[%c2, %c0_112, %c0_113] : memref<4x32x16xf32, #tpu.memory_space<vmem>>, vector<1x32x16xf32>
    %178 = vector.shape_cast %177 : vector<1x32x16xf32> to vector<32x16xf32>
    %cst_114 = arith.constant dense<0.000000e+00> : vector<8x16xf32>
    %179 = tpu.matmul %160, %178, %cst_114 {dimension_numbers = #tpu.dot_dimension_numbers<[1], [0], [0], [1], [0, 0, 1, 1], [], []>} : vector<8x32xf32>, vector<32x16xf32>, vector<8x16xf32> -> vector<8x16xf32>
    %c2_115 = arith.constant 2 : index
    %c0_116 = arith.constant 0 : index
    %c0_117 = arith.constant 0 : index
    %180 = vector.load %arg11[%c2_115, %c0_116, %c0_117] : memref<4x32x16xf32, #tpu.memory_space<vmem>>, vector<1x32x16xf32>
    %181 = vector.shape_cast %180 : vector<1x32x16xf32> to vector<32x16xf32>
    %cst_118 = arith.constant dense<0.000000e+00> : vector<8x16xf32>
    %182 = tpu.matmul %160, %181, %cst_118 {dimension_numbers = #tpu.dot_dimension_numbers<[1], [0], [0], [1], [0, 0, 1, 1], [], []>} : vector<8x32xf32>, vector<32x16xf32>, vector<8x16xf32> -> vector<8x16xf32>
    %c2_119 = arith.constant 2 : index
    %c0_120 = arith.constant 0 : index
    %c0_121 = arith.constant 0 : index
    %183 = vector.load %arg12[%c2_119, %c0_120, %c0_121] : memref<4x32x16xf32, #tpu.memory_space<vmem>>, vector<1x32x16xf32>
    %184 = vector.shape_cast %183 : vector<1x32x16xf32> to vector<32x16xf32>
    %cst_122 = arith.constant dense<0.000000e+00> : vector<8x16xf32>
    %185 = tpu.matmul %160, %184, %cst_122 {dimension_numbers = #tpu.dot_dimension_numbers<[1], [0], [0], [1], [0, 0, 1, 1], [], []>} : vector<8x32xf32>, vector<32x16xf32>, vector<8x16xf32> -> vector<8x16xf32>
    %c2_123 = arith.constant 2 : index
    %c0_124 = arith.constant 0 : index
    %c0_125 = arith.constant 0 : index
    %186 = vector.load %arg13[%c2_123, %c0_124, %c0_125] : memref<4x32x16xf32, #tpu.memory_space<vmem>>, vector<1x32x16xf32>
    %187 = vector.shape_cast %186 : vector<1x32x16xf32> to vector<32x16xf32>
    %cst_126 = arith.constant dense<0.000000e+00> : vector<8x16xf32>
    %188 = tpu.matmul %160, %187, %cst_126 {dimension_numbers = #tpu.dot_dimension_numbers<[1], [0], [0], [1], [0, 0, 1, 1], [], []>} : vector<8x32xf32>, vector<32x16xf32>, vector<8x16xf32> -> vector<8x16xf32>
    %c2_127 = arith.constant 2 : index
    %c0_128 = arith.constant 0 : index
    %c0_129 = arith.constant 0 : index
    %189 = vector.load %arg14[%c2_127, %c0_128, %c0_129] : memref<4x32x16xf32, #tpu.memory_space<vmem>>, vector<1x32x16xf32>
    %190 = vector.shape_cast %189 : vector<1x32x16xf32> to vector<32x16xf32>
    %cst_130 = arith.constant dense<0.000000e+00> : vector<8x16xf32>
    %191 = tpu.matmul %160, %190, %cst_130 {dimension_numbers = #tpu.dot_dimension_numbers<[1], [0], [0], [1], [0, 0, 1, 1], [], []>} : vector<8x32xf32>, vector<32x16xf32>, vector<8x16xf32> -> vector<8x16xf32>
    %192 = arith.mulf %179, %21 : vector<8x16xf32>
    %193 = arith.mulf %182, %20 : vector<8x16xf32>
    %194 = arith.addf %192, %193 : vector<8x16xf32>
    %195 = arith.mulf %185, %21 : vector<8x16xf32>
    %196 = arith.mulf %188, %20 : vector<8x16xf32>
    %197 = arith.addf %195, %196 : vector<8x16xf32>
    %cst_131 = arith.constant dense<0.000000e+00> : vector<8x8xf32>
    %198 = tpu.matmul %194, %197, %cst_131 {dimension_numbers = #tpu.dot_dimension_numbers<[1], [1], [0], [0], [0, 0, 1, 0], [], []>} : vector<8x16xf32>, vector<8x16xf32>, vector<8x8xf32> -> vector<8x8xf32>
    %cst_132 = arith.constant 2.500000e-01 : f32
    %199 = vector.broadcast %cst_132 : f32 to vector<8x8xf32>
    %200 = arith.mulf %198, %199 : vector<8x8xf32>
    %201 = arith.addf %200, %15 : vector<8x8xf32>
    %cst_133 = arith.constant dense<0xFF800000> : vector<8xf32>
    %202 = vector.multi_reduction <maximumf>, %201, %cst_133 [1] : vector<8x8xf32> to vector<8xf32>
    %203 = vector.shape_cast %202 : vector<8xf32> to vector<8x1xf32>
    %204 = vector.broadcast %203 : vector<8x1xf32> to vector<8x8xf32>
    %205 = arith.subf %201, %204 : vector<8x8xf32>
    %206 = math.exp %205 : vector<8x8xf32>
    %cst_134 = arith.constant dense<0.000000e+00> : vector<8xf32>
    %207 = vector.multi_reduction <add>, %206, %cst_134 [1] : vector<8x8xf32> to vector<8xf32>
    %208 = vector.shape_cast %207 : vector<8xf32> to vector<8x1xf32>
    %209 = vector.broadcast %208 : vector<8x1xf32> to vector<8x8xf32>
    %210 = arith.divf %206, %209 : vector<8x8xf32>
    %cst_135 = arith.constant dense<0.000000e+00> : vector<8x16xf32>
    %211 = tpu.matmul %210, %191, %cst_135 {dimension_numbers = #tpu.dot_dimension_numbers<[1], [0], [0], [1], [0, 0, 1, 1], [], []>} : vector<8x8xf32>, vector<8x16xf32>, vector<8x16xf32> -> vector<8x16xf32>
    %c2_136 = arith.constant 2 : index
    %c0_137 = arith.constant 0 : index
    %c0_138 = arith.constant 0 : index
    %212 = vector.load %arg17[%c2_136, %c0_137, %c0_138] : memref<4x16x32xf32, #tpu.memory_space<vmem>>, vector<1x16x32xf32>
    %213 = vector.shape_cast %212 : vector<1x16x32xf32> to vector<16x32xf32>
    %cst_139 = arith.constant dense<0.000000e+00> : vector<8x32xf32>
    %214 = tpu.matmul %211, %213, %cst_139 {dimension_numbers = #tpu.dot_dimension_numbers<[1], [0], [0], [1], [0, 0, 1, 1], [], []>} : vector<8x16xf32>, vector<16x32xf32>, vector<8x32xf32> -> vector<8x32xf32>
    %215 = arith.addf %176, %214 : vector<8x32xf32>
    %c3 = arith.constant 3 : index
    %c0_140 = arith.constant 0 : index
    %c0_141 = arith.constant 0 : index
    %216 = vector.load %arg10[%c3, %c0_140, %c0_141] : memref<4x32x16xf32, #tpu.memory_space<vmem>>, vector<1x32x16xf32>
    %217 = vector.shape_cast %216 : vector<1x32x16xf32> to vector<32x16xf32>
    %cst_142 = arith.constant dense<0.000000e+00> : vector<8x16xf32>
    %218 = tpu.matmul %160, %217, %cst_142 {dimension_numbers = #tpu.dot_dimension_numbers<[1], [0], [0], [1], [0, 0, 1, 1], [], []>} : vector<8x32xf32>, vector<32x16xf32>, vector<8x16xf32> -> vector<8x16xf32>
    %c3_143 = arith.constant 3 : index
    %c0_144 = arith.constant 0 : index
    %c0_145 = arith.constant 0 : index
    %219 = vector.load %arg11[%c3_143, %c0_144, %c0_145] : memref<4x32x16xf32, #tpu.memory_space<vmem>>, vector<1x32x16xf32>
    %220 = vector.shape_cast %219 : vector<1x32x16xf32> to vector<32x16xf32>
    %cst_146 = arith.constant dense<0.000000e+00> : vector<8x16xf32>
    %221 = tpu.matmul %160, %220, %cst_146 {dimension_numbers = #tpu.dot_dimension_numbers<[1], [0], [0], [1], [0, 0, 1, 1], [], []>} : vector<8x32xf32>, vector<32x16xf32>, vector<8x16xf32> -> vector<8x16xf32>
    %c3_147 = arith.constant 3 : index
    %c0_148 = arith.constant 0 : index
    %c0_149 = arith.constant 0 : index
    %222 = vector.load %arg12[%c3_147, %c0_148, %c0_149] : memref<4x32x16xf32, #tpu.memory_space<vmem>>, vector<1x32x16xf32>
    %223 = vector.shape_cast %222 : vector<1x32x16xf32> to vector<32x16xf32>
    %cst_150 = arith.constant dense<0.000000e+00> : vector<8x16xf32>
    %224 = tpu.matmul %160, %223, %cst_150 {dimension_numbers = #tpu.dot_dimension_numbers<[1], [0], [0], [1], [0, 0, 1, 1], [], []>} : vector<8x32xf32>, vector<32x16xf32>, vector<8x16xf32> -> vector<8x16xf32>
    %c3_151 = arith.constant 3 : index
    %c0_152 = arith.constant 0 : index
    %c0_153 = arith.constant 0 : index
    %225 = vector.load %arg13[%c3_151, %c0_152, %c0_153] : memref<4x32x16xf32, #tpu.memory_space<vmem>>, vector<1x32x16xf32>
    %226 = vector.shape_cast %225 : vector<1x32x16xf32> to vector<32x16xf32>
    %cst_154 = arith.constant dense<0.000000e+00> : vector<8x16xf32>
    %227 = tpu.matmul %160, %226, %cst_154 {dimension_numbers = #tpu.dot_dimension_numbers<[1], [0], [0], [1], [0, 0, 1, 1], [], []>} : vector<8x32xf32>, vector<32x16xf32>, vector<8x16xf32> -> vector<8x16xf32>
    %c3_155 = arith.constant 3 : index
    %c0_156 = arith.constant 0 : index
    %c0_157 = arith.constant 0 : index
    %228 = vector.load %arg14[%c3_155, %c0_156, %c0_157] : memref<4x32x16xf32, #tpu.memory_space<vmem>>, vector<1x32x16xf32>
    %229 = vector.shape_cast %228 : vector<1x32x16xf32> to vector<32x16xf32>
    %cst_158 = arith.constant dense<0.000000e+00> : vector<8x16xf32>
    %230 = tpu.matmul %160, %229, %cst_158 {dimension_numbers = #tpu.dot_dimension_numbers<[1], [0], [0], [1], [0, 0, 1, 1], [], []>} : vector<8x32xf32>, vector<32x16xf32>, vector<8x16xf32> -> vector<8x16xf32>
    %231 = arith.mulf %218, %21 : vector<8x16xf32>
    %232 = arith.mulf %221, %20 : vector<8x16xf32>
    %233 = arith.addf %231, %232 : vector<8x16xf32>
    %234 = arith.mulf %224, %21 : vector<8x16xf32>
    %235 = arith.mulf %227, %20 : vector<8x16xf32>
    %236 = arith.addf %234, %235 : vector<8x16xf32>
    %cst_159 = arith.constant dense<0.000000e+00> : vector<8x8xf32>
    %237 = tpu.matmul %233, %236, %cst_159 {dimension_numbers = #tpu.dot_dimension_numbers<[1], [1], [0], [0], [0, 0, 1, 0], [], []>} : vector<8x16xf32>, vector<8x16xf32>, vector<8x8xf32> -> vector<8x8xf32>
    %cst_160 = arith.constant 2.500000e-01 : f32
    %238 = vector.broadcast %cst_160 : f32 to vector<8x8xf32>
    %239 = arith.mulf %237, %238 : vector<8x8xf32>
    %240 = arith.addf %239, %15 : vector<8x8xf32>
    %cst_161 = arith.constant dense<0xFF800000> : vector<8xf32>
    %241 = vector.multi_reduction <maximumf>, %240, %cst_161 [1] : vector<8x8xf32> to vector<8xf32>
    %242 = vector.shape_cast %241 : vector<8xf32> to vector<8x1xf32>
    %243 = vector.broadcast %242 : vector<8x1xf32> to vector<8x8xf32>
    %244 = arith.subf %240, %243 : vector<8x8xf32>
    %245 = math.exp %244 : vector<8x8xf32>
    %cst_162 = arith.constant dense<0.000000e+00> : vector<8xf32>
    %246 = vector.multi_reduction <add>, %245, %cst_162 [1] : vector<8x8xf32> to vector<8xf32>
    %247 = vector.shape_cast %246 : vector<8xf32> to vector<8x1xf32>
    %248 = vector.broadcast %247 : vector<8x1xf32> to vector<8x8xf32>
    %249 = arith.divf %245, %248 : vector<8x8xf32>
    %cst_163 = arith.constant dense<0.000000e+00> : vector<8x16xf32>
    %250 = tpu.matmul %249, %230, %cst_163 {dimension_numbers = #tpu.dot_dimension_numbers<[1], [0], [0], [1], [0, 0, 1, 1], [], []>} : vector<8x8xf32>, vector<8x16xf32>, vector<8x16xf32> -> vector<8x16xf32>
    %c3_164 = arith.constant 3 : index
    %c0_165 = arith.constant 0 : index
    %c0_166 = arith.constant 0 : index
    %251 = vector.load %arg17[%c3_164, %c0_165, %c0_166] : memref<4x16x32xf32, #tpu.memory_space<vmem>>, vector<1x16x32xf32>
    %252 = vector.shape_cast %251 : vector<1x16x32xf32> to vector<16x32xf32>
    %cst_167 = arith.constant dense<0.000000e+00> : vector<8x32xf32>
    %253 = tpu.matmul %250, %252, %cst_167 {dimension_numbers = #tpu.dot_dimension_numbers<[1], [0], [0], [1], [0, 0, 1, 1], [], []>} : vector<8x16xf32>, vector<16x32xf32>, vector<8x32xf32> -> vector<8x32xf32>
    %254 = arith.addf %215, %253 : vector<8x32xf32>
    %255 = arith.addf %145, %254 : vector<8x32xf32>
    %c0_168 = arith.constant 0 : index
    %c0_169 = arith.constant 0 : index
    %256 = vector.load %arg8[%c0_168, %c0_169] : memref<1x32xf32, #tpu.memory_space<vmem>>, vector<1x32xf32>
    %257 = arith.mulf %255, %255 : vector<8x32xf32>
    %cst_170 = arith.constant dense<0.000000e+00> : vector<8xf32>
    %258 = vector.multi_reduction <add>, %257, %cst_170 [1] : vector<8x32xf32> to vector<8xf32>
    %259 = vector.shape_cast %258 : vector<8xf32> to vector<8x1xf32>
    %cst_171 = arith.constant 3.200000e+01 : f32
    %260 = vector.broadcast %cst_171 : f32 to vector<8x1xf32>
    %261 = arith.divf %259, %260 : vector<8x1xf32>
    %cst_172 = arith.constant 9.99999997E-7 : f32
    %262 = vector.broadcast %cst_172 : f32 to vector<8x1xf32>
    %263 = arith.addf %261, %262 : vector<8x1xf32>
    %264 = math.rsqrt %263 : vector<8x1xf32>
    %265 = vector.broadcast %264 : vector<8x1xf32> to vector<8x32xf32>
    %266 = arith.mulf %255, %265 : vector<8x32xf32>
    %267 = vector.broadcast %256 : vector<1x32xf32> to vector<8x32xf32>
    %268 = arith.mulf %266, %267 : vector<8x32xf32>
    %c0_173 = arith.constant 0 : index
    %c0_174 = arith.constant 0 : index
    %269 = vector.load %arg19[%c0_173, %c0_174] : memref<8x32xf32, #tpu.memory_space<vmem>>, vector<8x32xf32>
    tpu.vector_store %arg19[%c0_173, %c0_174], %268 {strides = array<i32>} : memref<8x32xf32, #tpu.memory_space<vmem>>, vector<8x32xf32>,
    return
  }
  func.func @transform_0(%arg0: i32) -> (i32, i32) {
    %c0_i32 = arith.constant 0 : i32
    %c0_i32_0 = arith.constant 0 : i32
    %c0_i32_1 = arith.constant 0 : i32
    return %c0_i32, %c0_i32_0 : i32, i32
  }
  func.func @transform_1(%arg0: i32) -> (i32, i32) {
    %c0_i32 = arith.constant 0 : i32
    %c0_i32_0 = arith.constant 0 : i32
    %c0_i32_1 = arith.constant 0 : i32
    return %c0_i32, %c0_i32_0 : i32, i32
  }
  func.func @transform_2(%arg0: i32) -> (i32, i32) {
    %c0_i32 = arith.constant 0 : i32
    %c0_i32_0 = arith.constant 0 : i32
    %c0_i32_1 = arith.constant 0 : i32
    return %c0_i32, %c0_i32_0 : i32, i32
  }
  func.func @transform_3(%arg0: i32) -> (i32, i32) {
    %c0_i32 = arith.constant 0 : i32
    %c0_i32_0 = arith.constant 0 : i32
    %c0_i32_1 = arith.constant 0 : i32
    return %c0_i32, %c0_i32_0 : i32, i32
  }
  func.func @transform_4(%arg0: i32) -> (i32, i32) {
    %c0_i32 = arith.constant 0 : i32
    %c0_i32_0 = arith.constant 0 : i32
    %c0_i32_1 = arith.constant 0 : i32
    return %c0_i32, %c0_i32_0 : i32, i32
  }
  func.func @transform_5(%arg0: i32) -> (i32, i32) {
    %c0_i32 = arith.constant 0 : i32
    %c0_i32_0 = arith.constant 0 : i32
    %c0_i32_1 = arith.constant 0 : i32
    return %c0_i32, %c0_i32_0 : i32, i32
  }
  func.func @transform_6(%arg0: i32) -> (i32, i32) {
    %c0_i32 = arith.constant 0 : i32
    %c0_i32_0 = arith.constant 0 : i32
    %c0_i32_1 = arith.constant 0 : i32
    return %c0_i32, %c0_i32_0 : i32, i32
  }
  func.func @transform_7(%arg0: i32) -> (i32, i32) {
    %c0_i32 = arith.constant 0 : i32
    %c0_i32_0 = arith.constant 0 : i32
    %c0_i32_1 = arith.constant 0 : i32
    return %c0_i32, %c0_i32_0 : i32, i32
  }
  func.func @transform_8(%arg0: i32) -> (i32, i32, i32) {
    %c0_i32 = arith.constant 0 : i32
    %c0_i32_0 = arith.constant 0 : i32
    %c0_i32_1 = arith.constant 0 : i32
    %c0_i32_2 = arith.constant 0 : i32
    return %c0_i32, %c0_i32_0, %c0_i32_1 : i32, i32, i32
  }
  func.func @transform_9(%arg0: i32) -> (i32, i32, i32) {
    %c0_i32 = arith.constant 0 : i32
    %c0_i32_0 = arith.constant 0 : i32
    %c0_i32_1 = arith.constant 0 : i32
    %c0_i32_2 = arith.constant 0 : i32
    return %c0_i32, %c0_i32_0, %c0_i32_1 : i32, i32, i32
  }
  func.func @transform_10(%arg0: i32) -> (i32, i32, i32) {
    %c0_i32 = arith.constant 0 : i32
    %c0_i32_0 = arith.constant 0 : i32
    %c0_i32_1 = arith.constant 0 : i32
    %c0_i32_2 = arith.constant 0 : i32
    return %c0_i32, %c0_i32_0, %c0_i32_1 : i32, i32, i32
  }
  func.func @transform_11(%arg0: i32) -> (i32, i32, i32) {
    %c0_i32 = arith.constant 0 : i32
    %c0_i32_0 = arith.constant 0 : i32
    %c0_i32_1 = arith.constant 0 : i32
    %c0_i32_2 = arith.constant 0 : i32
    return %c0_i32, %c0_i32_0, %c0_i32_1 : i32, i32, i32
  }
  func.func @transform_12(%arg0: i32) -> (i32, i32, i32) {
    %c0_i32 = arith.constant 0 : i32
    %c0_i32_0 = arith.constant 0 : i32
    %c0_i32_1 = arith.constant 0 : i32
    %c0_i32_2 = arith.constant 0 : i32
    return %c0_i32, %c0_i32_0, %c0_i32_1 : i32, i32, i32
  }
  func.func @transform_13(%arg0: i32) -> (i32, i32, i32) {
    %c0_i32 = arith.constant 0 : i32
    %c0_i32_0 = arith.constant 0 : i32
    %c0_i32_1 = arith.constant 0 : i32
    %c0_i32_2 = arith.constant 0 : i32
    return %c0_i32, %c0_i32_0, %c0_i32_1 : i32, i32, i32
  }
  func.func @transform_14(%arg0: i32) -> (i32, i32, i32) {
    %c0_i32 = arith.constant 0 : i32
    %c0_i32_0 = arith.constant 0 : i32
    %c0_i32_1 = arith.constant 0 : i32
    %c0_i32_2 = arith.constant 0 : i32
    return %c0_i32, %c0_i32_0, %c0_i32_1 : i32, i32, i32
  }
  func.func @transform_15(%arg0: i32) -> (i32, i32, i32) {
    %c0_i32 = arith.constant 0 : i32
    %c0_i32_0 = arith.constant 0 : i32
    %c0_i32_1 = arith.constant 0 : i32
    %c0_i32_2 = arith.constant 0 : i32
    return %c0_i32, %c0_i32_0, %c0_i32_1 : i32, i32, i32
  }
  func.func @transform_16(%arg0: i32) -> (i32, i32, i32) {
    %c0_i32 = arith.constant 0 : i32
    %c0_i32_0 = arith.constant 0 : i32
    %c0_i32_1 = arith.constant 0 : i32
    %c0_i32_2 = arith.constant 0 : i32
    return %c0_i32, %c0_i32_0, %c0_i32_1 : i32, i32, i32
  }
  func.func @transform_17(%arg0: i32) -> (i32, i32, i32) {
    %c0_i32 = arith.constant 0 : i32
    %c0_i32_0 = arith.constant 0 : i32
    %c0_i32_1 = arith.constant 0 : i32
    %c0_i32_2 = arith.constant 0 : i32
    return %c0_i32, %c0_i32_0, %c0_i32_1 : i32, i32, i32
  }
  func.func @transform_18(%arg0: i32) -> (i32, i32) {
    %c0_i32 = arith.constant 0 : i32
    %c0_i32_0 = arith.constant 0 : i32
    %c0_i32_1 = arith.constant 0 : i32
    return %c0_i32, %c0_i32_0 : i32, i32
  }
}

</mosaic_0001>

<llo_original>
// kernel: tpu_custom_call.1
$region0: #{tpu_custom_call.1}
  #allocation0 [shape = 'u32[]', space=smem, size = 0x4, offset = 0x4, fixed_abs, tag = 'smem constant byte address 0x4 - core index']
  #allocation1 [shape = 'u32[144,128]{1,0:T(1,128)}', space=vmem, size = 0x12000, scoped, tag = 'internal scratch']
  %s0 = inlined_call_operand.vmem [shape: f32[8,32], index: 0, kind: input, shape index: {}]
  %s1 = inlined_call_operand.vmem [shape: f32[8,32], index: 1, kind: input, shape index: {}]
  %s2 = inlined_call_operand.vmem [shape: f32[8,16], index: 2, kind: input, shape index: {}]
  %s3 = inlined_call_operand.vmem [shape: f32[8,16], index: 3, kind: input, shape index: {}]
  %s4 = inlined_call_operand.vmem [shape: s32[8,1], index: 4, kind: input, shape index: {}]
  %s5 = inlined_call_operand.vmem [shape: s32[1,8], index: 5, kind: input, shape index: {}]
  %s6 = inlined_call_operand.vmem [shape: f32[1,32], index: 6, kind: input, shape index: {}]
  %s7 = inlined_call_operand.vmem [shape: f32[1,32], index: 7, kind: input, shape index: {}]
  %s8 = inlined_call_operand.vmem [shape: f32[2,1,32], index: 8, kind: input, shape index: {}]
  %s9 = inlined_call_operand.vmem [shape: f32[4,32,16], index: 9, kind: input, shape index: {}]
  %s10 = inlined_call_operand.vmem [shape: f32[4,32,16], index: 10, kind: input, shape index: {}]
  %s11 = inlined_call_operand.vmem [shape: f32[4,32,16], index: 11, kind: input, shape index: {}]
  %s12 = inlined_call_operand.vmem [shape: f32[4,32,16], index: 12, kind: input, shape index: {}]
  %s13 = inlined_call_operand.vmem [shape: f32[4,32,16], index: 13, kind: input, shape index: {}]
  %s14 = inlined_call_operand.vmem [shape: f32[2,32,64], index: 14, kind: input, shape index: {}]
  %s15 = inlined_call_operand.vmem [shape: f32[2,32,64], index: 15, kind: input, shape index: {}]
  %s16 = inlined_call_operand.vmem [shape: f32[4,16,32], index: 16, kind: input, shape index: {}]
  %s17 = inlined_call_operand.vmem [shape: f32[2,64,32], index: 17, kind: input, shape index: {}]
  %s18 = inlined_call_operand.hbm [shape: f32[8,32], index: 18, kind: output, shape index: {}]
  %s19 = sld [smem:[#allocation0]]
  $region82: #{tpu_custom_call.1} parent=0
    _
  %s21 = ssub.s32 1, %s19
  %s22 = scalar_select 0, %s21, %s19
  $region1: #{tpu_custom_call.1} parent=0
    #allocation2 [shape = 'u8[4096]{0}', space=vmem, size = 0x1000, scoped, tag = 'output window, operand 0, single buffered']
    #allocation3 [shape = 's32[1]{0}', space=sflag, size = 0x4, scoped, tag = 'scoped memory for tpu_custom_call.1']
    %23 = vsyncpa [#allocation3], 0
    // Predicated region
    $region2: #{tpu_custom_call.1} parent=1 // pred_check
      _
    $region3: #{tpu_custom_call.1} parent=1 // pred_check_branch
      %25 = sbr.rel (0) target = $region5
    $region4: #{tpu_custom_call.1} parent=1 // pred_region
      _
    $region5: #{tpu_custom_call.1} parent=1 // pred_fallthru
      _
    // Predicated region
    $region6: #{tpu_custom_call.1} parent=1 // pred_check
      _
    $region7: #{tpu_custom_call.1} parent=1 // pred_check_branch
      %27 = sbr.rel (0) target = $region9
    $region8: #{tpu_custom_call.1} parent=1 // pred_region
      _
    $region9: #{tpu_custom_call.1} parent=1 // pred_fallthru
      _
    // Predicated region
    $region10: #{tpu_custom_call.1} parent=1 // pred_check
      _
    $region11: #{tpu_custom_call.1} parent=1 // pred_check_branch
      %29 = sbr.rel (0) target = $region13
    $region12: #{tpu_custom_call.1} parent=1 // pred_region
      _
    $region13: #{tpu_custom_call.1} parent=1 // pred_fallthru
      _
    // Predicated region
    $region14: #{tpu_custom_call.1} parent=1 // pred_check
      _
    $region15: #{tpu_custom_call.1} parent=1 // pred_check_branch
      %31 = sbr.rel (0) target = $region17
    $region16: #{tpu_custom_call.1} parent=1 // pred_region
      _
    $region17: #{tpu_custom_call.1} parent=1 // pred_fallthru
      _
    // Predicated region
    $region18: #{tpu_custom_call.1} parent=1 // pred_check
      _
    $region19: #{tpu_custom_call.1} parent=1 // pred_check_branch
      %33 = sbr.rel (0) target = $region21
    $region20: #{tpu_custom_call.1} parent=1 // pred_region
      _
    $region21: #{tpu_custom_call.1} parent=1 // pred_fallthru
      _
    // Predicated region
    $region22: #{tpu_custom_call.1} parent=1 // pred_check
      _
    $region23: #{tpu_custom_call.1} parent=1 // pred_check_branch
      %35 = sbr.rel (0) target = $region25
    $region24: #{tpu_custom_call.1} parent=1 // pred_region
      _
    $region25: #{tpu_custom_call.1} parent=1 // pred_fallthru
      _
    // Predicated region
    $region26: #{tpu_custom_call.1} parent=1 // pred_check
      _
    $region27: #{tpu_custom_call.1} parent=1 // pred_check_branch
      %37 = sbr.rel (0) target = $region29
    $region28: #{tpu_custom_call.1} parent=1 // pred_region
      _
    $region29: #{tpu_custom_call.1} parent=1 // pred_fallthru
      _
    // Predicated region
    $region30: #{tpu_custom_call.1} parent=1 // pred_check
      _
    $region31: #{tpu_custom_call.1} parent=1 // pred_check_branch
      %39 = sbr.rel (0) target = $region33
    $region32: #{tpu_custom_call.1} parent=1 // pred_region
      _
    $region33: #{tpu_custom_call.1} parent=1 // pred_fallthru
      _
    // Predicated region
    $region34: #{tpu_custom_call.1} parent=1 // pred_check
      _
    $region35: #{tpu_custom_call.1} parent=1 // pred_check_branch
      %41 = sbr.rel (0) target = $region37
    $region36: #{tpu_custom_call.1} parent=1 // pred_region
      _
    $region37: #{tpu_custom_call.1} parent=1 // pred_fallthru
      _
    // Predicated region
    $region38: #{tpu_custom_call.1} parent=1 // pred_check
      _
    $region39: #{tpu_custom_call.1} parent=1 // pred_check_branch
      %43 = sbr.rel (0) target = $region41
    $region40: #{tpu_custom_call.1} parent=1 // pred_region
      _
    $region41: #{tpu_custom_call.1} parent=1 // pred_fallthru
      _
    // Predicated region
    $region42: #{tpu_custom_call.1} parent=1 // pred_check
      _
    $region43: #{tpu_custom_call.1} parent=1 // pred_check_branch
      %45 = sbr.rel (0) target = $region45
    $region44: #{tpu_custom_call.1} parent=1 // pred_region
      _
    $region45: #{tpu_custom_call.1} parent=1 // pred_fallthru
      _
    // Predicated region
    $region46: #{tpu_custom_call.1} parent=1 // pred_check
      _
    $region47: #{tpu_custom_call.1} parent=1 // pred_check_branch
      %47 = sbr.rel (0) target = $region49
    $region48: #{tpu_custom_call.1} parent=1 // pred_region
      _
    $region49: #{tpu_custom_call.1} parent=1 // pred_fallthru
      _
    // Predicated region
    $region50: #{tpu_custom_call.1} parent=1 // pred_check
      _
    $region51: #{tpu_custom_call.1} parent=1 // pred_check_branch
      %49 = sbr.rel (0) target = $region53
    $region52: #{tpu_custom_call.1} parent=1 // pred_region
      _
    $region53: #{tpu_custom_call.1} parent=1 // pred_fallthru
      _
    // Predicated region
    $region54: #{tpu_custom_call.1} parent=1 // pred_check
      _
    $region55: #{tpu_custom_call.1} parent=1 // pred_check_branch
      %51 = sbr.rel (0) target = $region57
    $region56: #{tpu_custom_call.1} parent=1 // pred_region
      _
    $region57: #{tpu_custom_call.1} parent=1 // pred_fallthru
      _
    // Predicated region
    $region58: #{tpu_custom_call.1} parent=1 // pred_check
      _
    $region59: #{tpu_custom_call.1} parent=1 // pred_check_branch
      %53 = sbr.rel (0) target = $region61
    $region60: #{tpu_custom_call.1} parent=1 // pred_region
      _
    $region61: #{tpu_custom_call.1} parent=1 // pred_fallthru
      _
    // Predicated region
    $region62: #{tpu_custom_call.1} parent=1 // pred_check
      _
    $region63: #{tpu_custom_call.1} parent=1 // pred_check_branch
      %55 = sbr.rel (0) target = $region65
    $region64: #{tpu_custom_call.1} parent=1 // pred_region
      _
    $region65: #{tpu_custom_call.1} parent=1 // pred_fallthru
      _
    // Predicated region
    $region66: #{tpu_custom_call.1} parent=1 // pred_check
      _
    $region67: #{tpu_custom_call.1} parent=1 // pred_check_branch
      %57 = sbr.rel (0) target = $region69
    $region68: #{tpu_custom_call.1} parent=1 // pred_region
      _
    $region69: #{tpu_custom_call.1} parent=1 // pred_fallthru
      _
    // Predicated region
    $region70: #{tpu_custom_call.1} parent=1 // pred_check
      _
    $region71: #{tpu_custom_call.1} parent=1 // pred_check_branch
      %59 = sbr.rel (0) target = $region73
    $region72: #{tpu_custom_call.1} parent=1 // pred_region
      _
    $region73: #{tpu_custom_call.1} parent=1 // pred_fallthru
      _
    %v60 = vlaneseq
    %v61 = vshrl.u32 %v60, 7
    %v62 = vlaneseq
    %v63 = vand.u32 %v62, 127
    %v64 = vld [vmem:[%s4] sm:$0xff]
    %v65 = vld [vmem:[%s5] sm:$0x1]
    %66 = vset.pattern.permute.xlu0 0
    %67 = vperm.xlu0 %66, %v64
    %v68 = vpop.permute.xlu0 %67
    %v69 = vlaneseq
    %v70 = vshrl.u32 %v69, 7
    %v71 = vsub.s32 0, %v70
    %v72 = vrot.slane %v65, %v71
    %vm73 = vcmp.eq.s32.totalorder %v68, %v72
    %vm74 = vcmp.ge.s32.totalorder %v61, %v63
    %vm75 = vmand %vm73, %vm74
    %v76 = vsub.s32 %v61, %v63
    %vm77 = vcmp.lt.s32.totalorder %v76, 4
    %vm78 = vmand %vm75, %vm77
    %v79 = vsel %vm78, 0.0, -1e+30
    %vm80 = vcmp.ge.s32.totalorder %v63, 28
    %v81 = vld [vmem:[%s1] sm:$0xff]
    %v82 = vld [vmem:[%s2] sm:$0xff]
    %v83 = vld [vmem:[%s3] sm:$0xff]
    %v84 = vld [vmem:[%s0] sm:$0xff]
    %v85 = vld [vmem:[%s6] sm:$0x1]
    %v86 = vmul.f32 %v84, %v84
    %vm87 = vcmask 261120
    %v88 = vsel %vm87, %v86, 0.0
    %89 = vadd.xlane.f32.xlu0 %v88
    %v90 = vpop.xlane.xlu0 %89
    %v91 = vrcp.pop 32.0
    %v92 = vmul.f32 %v90, %v91
    %v93 = vadd.f32 %v92, 1e-06
    %v94 = vrsqrt.pop %v93
    %v95 = vmul.f32 %v84, %v94
    %v97 = vlaneseq
    %v98 = vshrl.u32 %v97, 7
    %v99 = vsub.s32 0, %v98
    %v100 = vrot.slane %v85, %v99
    %v102 = vmul.f32 %v95, %v100
    %v103 = vld [vmem:[%s8] sm:$0x1]
    %v104 = vmul.f32 %v102, %v102
    %v105 = vsel %vm87, %v104, 0.0
    %106 = vadd.xlane.f32.xlu0 %v105
    %v107 = vpop.xlane.xlu0 %106
    %v108 = vmul.f32 %v107, %v91
    %v109 = vadd.f32 %v108, 1e-06
    %v110 = vrsqrt.pop %v109
    %v111 = vmul.f32 %v102, %v110
    %v113 = vlaneseq
    %v114 = vshrl.u32 %v113, 7
    %v115 = vsub.s32 0, %v114
    %v116 = vrot.slane %v103, %v115
    %v118 = vmul.f32 %v111, %v116
    %v119 = vsel %vm80, %v81, %v118
    %v120 = vld [vmem:[%s14] sm:$0xff]
    %v121 = vld [vmem:[%s14 + $0x8] sm:$0xff]
    %v122 = vld [vmem:[%s14 + $0x10] sm:$0xff]
    %v123 = vld [vmem:[%s14 + $0x18] sm:$0xff]
    %v125 = vsel %vm87, %v119, 0
    %127 = vmatprep.subr.mxu0 0.0
    %128 = vmatpush1.msra.mxu0 %v120
    %129 = vmatprep.subr.mxu0 0.0
    %130 = vmatpush1.msra.mxu0 %v121
    %131 = vmatprep.subr.mxu0 0.0
    %132 = vmatpush1.msra.mxu0 %v122
    %133 = vmatprep.subr.mxu0 0.0
    %134 = vmatpush1.msra.mxu0 %v123
    %135 = vmatprep.subr.mxu0 0.0
    %136 = vmatpush1.msra.mxu0 0.0
    %137 = vmatprep.subr.mxu0 0.0
    %138 = vmatpush1.msra.mxu0 0.0
    %139 = vmatprep.subr.mxu0 0.0
    %140 = vmatpush1.msra.mxu0 0.0
    %141 = vmatprep.subr.mxu0 0.0
    %142 = vmatpush1.msra.mxu0 0.0
    %143 = vmatprep.subr.mxu0 0.0
    %144 = vmatpush1.msra.mxu0 0.0
    %145 = vmatprep.subr.mxu0 0.0
    %146 = vmatpush1.msra.mxu0 0.0
    %147 = vmatprep.subr.mxu0 0.0
    %148 = vmatpush1.msra.mxu0 0.0
    %149 = vmatprep.subr.mxu0 0.0
    %150 = vmatpush1.msra.mxu0 0.0
    %151 = vmatprep.subr.mxu0 0.0
    %152 = vmatpush1.msra.mxu0 0.0
    %153 = vmatprep.subr.mxu0 0.0
    %154 = vmatpush1.msra.mxu0 0.0
    %155 = vmatprep.subr.mxu0 0.0
    %156 = vmatpush1.msra.mxu0 0.0
    %157 = vmatprep.subr.mxu0 0.0
    %158 = vmatpush1.msra.mxu0 0.0
    %159 = vmatprep.subr.mxu0 0.0
    %160 = vmatpush1.msra.mxu0 0.0
    %161 = vmatprep.subr.mxu0 0.0
    %162 = vmatpush1.msra.mxu0 0.0
    %163 = vmatprep.subr.mxu0 0.0
    %164 = vmatpush1.msra.mxu0 0.0
    %165 = vmatprep.subr.mxu0 0.0
    %166 = vmatpush1.msra.mxu0 0.0
    %167 = vmatprep.subr.mxu0 0.0
    %168 = vmatpush1.msra.mxu0 0.0
    %169 = vmatprep.subr.mxu0 0.0
    %170 = vmatpush1.msra.mxu0 0.0
    %171 = vmatprep.subr.mxu0 0.0
    %172 = vmatpush1.msra.mxu0 0.0
    %173 = vmatprep.subr.mxu0 0.0
    %174 = vmatpush1.msra.mxu0 0.0
    %175 = vmatprep.subr.mxu0 0.0
    %176 = vmatpush1.msra.mxu0 0.0
    %177 = vmatprep.subr.mxu0 0.0
    %178 = vmatpush1.msra.mxu0 0.0
    %179 = vmatprep.subr.mxu0 0.0
    %180 = vmatpush1.msra.mxu0 0.0
    %181 = vmatprep.subr.mxu0 0.0
    %182 = vmatpush1.msra.mxu0 0.0
    %183 = vmatprep.subr.mxu0 0.0
    %184 = vmatpush1.msra.mxu0 0.0
    %185 = vmatprep.subr.mxu0 0.0
    %186 = vmatpush1.msra.mxu0 0.0
    %187 = vmatprep.subr.mxu0 0.0
    %188 = vmatpush1.msra.mxu0 0.0
    %189 = vmatprep.subr.mxu0 0.0
    %190 = vmatpush1.msra.mxu0 0.0
    %191 = vmatprep.mubr.f32.mxu0 0.0
    %192 = vmatmul.mubr.f32.gmra.mrb[0].mxu0 %v125
    %v193 = vpop.f32.mrb[0].mxu0
    %v194 = vadd.f32 0.0, %v193
    %v195 = vpop.f32.mrb[0].mxu0
    %196 = vdwg.mxu0
    %v197 = vld [vmem:[%s15] sm:$0xff]
    %v198 = vld [vmem:[%s15 + $0x8] sm:$0xff]
    %v199 = vld [vmem:[%s15 + $0x10] sm:$0xff]
    %v200 = vld [vmem:[%s15 + $0x18] sm:$0xff]
    %201 = vmatprep.subr.mxu0 0.0
    %202 = vmatpush1.msra.mxu0 %v197
    %203 = vmatprep.subr.mxu0 0.0
    %204 = vmatpush1.msra.mxu0 %v198
    %205 = vmatprep.subr.mxu0 0.0
    %206 = vmatpush1.msra.mxu0 %v199
    %207 = vmatprep.subr.mxu0 0.0
    %208 = vmatpush1.msra.mxu0 %v200
    %209 = vmatprep.subr.mxu0 0.0
    %210 = vmatpush1.msra.mxu0 0.0
    %211 = vmatprep.subr.mxu0 0.0
    %212 = vmatpush1.msra.mxu0 0.0
    %213 = vmatprep.subr.mxu0 0.0
    %214 = vmatpush1.msra.mxu0 0.0
    %215 = vmatprep.subr.mxu0 0.0
    %216 = vmatpush1.msra.mxu0 0.0
    %217 = vmatprep.subr.mxu0 0.0
    %218 = vmatpush1.msra.mxu0 0.0
    %219 = vmatprep.subr.mxu0 0.0
    %220 = vmatpush1.msra.mxu0 0.0
    %221 = vmatprep.subr.mxu0 0.0
    %222 = vmatpush1.msra.mxu0 0.0
    %223 = vmatprep.subr.mxu0 0.0
    %224 = vmatpush1.msra.mxu0 0.0
    %225 = vmatprep.subr.mxu0 0.0
    %226 = vmatpush1.msra.mxu0 0.0
    %227 = vmatprep.subr.mxu0 0.0
    %228 = vmatpush1.msra.mxu0 0.0
    %229 = vmatprep.subr.mxu0 0.0
    %230 = vmatpush1.msra.mxu0 0.0
    %231 = vmatprep.subr.mxu0 0.0
    %232 = vmatpush1.msra.mxu0 0.0
    %233 = vmatprep.subr.mxu0 0.0
    %234 = vmatpush1.msra.mxu0 0.0
    %235 = vmatprep.subr.mxu0 0.0
    %236 = vmatpush1.msra.mxu0 0.0
    %237 = vmatprep.subr.mxu0 0.0
    %238 = vmatpush1.msra.mxu0 0.0
    %239 = vmatprep.subr.mxu0 0.0
    %240 = vmatpush1.msra.mxu0 0.0
    %241 = vmatprep.subr.mxu0 0.0
    %242 = vmatpush1.msra.mxu0 0.0
    %243 = vmatprep.subr.mxu0 0.0
    %244 = vmatpush1.msra.mxu0 0.0
    %245 = vmatprep.subr.mxu0 0.0
    %246 = vmatpush1.msra.mxu0 0.0
    %247 = vmatprep.subr.mxu0 0.0
    %248 = vmatpush1.msra.mxu0 0.0
    %249 = vmatprep.subr.mxu0 0.0
    %250 = vmatpush1.msra.mxu0 0.0
    %251 = vmatprep.subr.mxu0 0.0
    %252 = vmatpush1.msra.mxu0 0.0
    %253 = vmatprep.subr.mxu0 0.0
    %254 = vmatpush1.msra.mxu0 0.0
    %255 = vmatprep.subr.mxu0 0.0
    %256 = vmatpush1.msra.mxu0 0.0
    %257 = vmatprep.subr.mxu0 0.0
    %258 = vmatpush1.msra.mxu0 0.0
    %259 = vmatprep.subr.mxu0 0.0
    %260 = vmatpush1.msra.mxu0 0.0
    %261 = vmatprep.subr.mxu0 0.0
    %262 = vmatpush1.msra.mxu0 0.0
    %263 = vmatprep.subr.mxu0 0.0
    %264 = vmatpush1.msra.mxu0 0.0
    %265 = vmatprep.mubr.f32.mxu0 0.0
    %266 = vmatmul.mubr.f32.gmra.mrb[0].mxu0 %v125
    %v267 = vpop.f32.mrb[0].mxu0
    %v268 = vadd.f32 0.0, %v267
    %v269 = vpop.f32.mrb[0].mxu0
    %270 = vdwg.mxu0
    %v271 = vxor.u32 %v194, 2147483648
    %v272 = vmul.f32 %v271, 1.442695
    %v273 = vpow.pop %v272
    %v274 = vadd.f32 %v273, 1.0
    %v275 = vrcp.pop %v274
    %v276 = vmul.f32 1.0, %v275
    %v277 = vmul.f32 %v194, %v276
    %v278 = vmul.f32 %v277, %v268
    %v279 = vld [vmem:[%s17] sm:$0xff]
    %v280 = vld [vmem:[%s17 + $0x8] sm:$0xff]
    %v281 = vld [vmem:[%s17 + $0x10] sm:$0xff]
    %v282 = vld [vmem:[%s17 + $0x18] sm:$0xff]
    %v283 = vld [vmem:[%s17 + $0x20] sm:$0xff]
    %v284 = vld [vmem:[%s17 + $0x28] sm:$0xff]
    %v285 = vld [vmem:[%s17 + $0x30] sm:$0xff]
    %v286 = vld [vmem:[%s17 + $0x38] sm:$0xff]
    %v287 = vld [vmem:[%s9] sm:$0xff]
    %v288 = vld [vmem:[%s9 + $0x8] sm:$0xff]
    %v289 = vld [vmem:[%s9 + $0x10] sm:$0xff]
    %v290 = vld [vmem:[%s9 + $0x18] sm:$0xff]
    %291 = vmatprep.subr.mxu0 0.0
    %292 = vmatpush1.msra.mxu0 %v287
    %293 = vmatprep.subr.mxu0 0.0
    %294 = vmatpush1.msra.mxu0 %v288
    %295 = vmatprep.subr.mxu0 0.0
    %296 = vmatpush1.msra.mxu0 %v289
    %297 = vmatprep.subr.mxu0 0.0
    %298 = vmatpush1.msra.mxu0 %v290
    %299 = vmatprep.subr.mxu0 0.0
    %300 = vmatpush1.msra.mxu0 0.0
    %301 = vmatprep.subr.mxu0 0.0
    %302 = vmatpush1.msra.mxu0 0.0
    %303 = vmatprep.subr.mxu0 0.0
    %304 = vmatpush1.msra.mxu0 0.0
    %305 = vmatprep.subr.mxu0 0.0
    %306 = vmatpush1.msra.mxu0 0.0
    %307 = vmatprep.subr.mxu0 0.0
    %308 = vmatpush1.msra.mxu0 0.0
    %309 = vmatprep.subr.mxu0 0.0
    %310 = vmatpush1.msra.mxu0 0.0
    %311 = vmatprep.subr.mxu0 0.0
    %312 = vmatpush1.msra.mxu0 0.0
    %313 = vmatprep.subr.mxu0 0.0
    %314 = vmatpush1.msra.mxu0 0.0
    %315 = vmatprep.subr.mxu0 0.0
    %316 = vmatpush1.msra.mxu0 0.0
    %317 = vmatprep.subr.mxu0 0.0
    %318 = vmatpush1.msra.mxu0 0.0
    %319 = vmatprep.subr.mxu0 0.0
    %320 = vmatpush1.msra.mxu0 0.0
    %321 = vmatprep.subr.mxu0 0.0
    %322 = vmatpush1.msra.mxu0 0.0
    %323 = vmatprep.subr.mxu0 0.0
    %324 = vmatpush1.msra.mxu0 0.0
    %325 = vmatprep.subr.mxu0 0.0
    %326 = vmatpush1.msra.mxu0 0.0
    %327 = vmatprep.subr.mxu0 0.0
    %328 = vmatpush1.msra.mxu0 0.0
    %329 = vmatprep.subr.mxu0 0.0
    %330 = vmatpush1.msra.mxu0 0.0
    %331 = vmatprep.subr.mxu0 0.0
    %332 = vmatpush1.msra.mxu0 0.0
    %333 = vmatprep.subr.mxu0 0.0
    %334 = vmatpush1.msra.mxu0 0.0
    %335 = vmatprep.subr.mxu0 0.0
    %336 = vmatpush1.msra.mxu0 0.0
    %337 = vmatprep.subr.mxu0 0.0
    %338 = vmatpush1.msra.mxu0 0.0
    %339 = vmatprep.subr.mxu0 0.0
    %340 = vmatpush1.msra.mxu0 0.0
    %341 = vmatprep.subr.mxu0 0.0
    %342 = vmatpush1.msra.mxu0 0.0
    %343 = vmatprep.subr.mxu0 0.0
    %344 = vmatpush1.msra.mxu0 0.0
    %345 = vmatprep.subr.mxu0 0.0
    %346 = vmatpush1.msra.mxu0 0.0
    %347 = vmatprep.subr.mxu0 0.0
    %348 = vmatpush1.msra.mxu0 0.0
    %349 = vmatprep.subr.mxu0 0.0
    %350 = vmatpush1.msra.mxu0 0.0
    %351 = vmatprep.subr.mxu0 0.0
    %352 = vmatpush1.msra.mxu0 0.0
    %353 = vmatprep.subr.mxu0 0.0
    %354 = vmatpush1.msra.mxu0 0.0
    %355 = vmatprep.mubr.f32.mxu0 0.0
    %356 = vmatmul.mubr.f32.gmra.mrb[0].mxu0 %v125
    %v357 = vpop.f32.mrb[0].mxu0
    %v358 = vadd.f32 0.0, %v357
    %v359 = vpop.f32.mrb[0].mxu0
    %360 = vdwg.mxu0
    %v361 = vld [vmem:[%s10] sm:$0xff]
    %v362 = vld [vmem:[%s10 + $0x8] sm:$0xff]
    %v363 = vld [vmem:[%s10 + $0x10] sm:$0xff]
    %v364 = vld [vmem:[%s10 + $0x18] sm:$0xff]
    %365 = vmatprep.subr.mxu0 0.0
    %366 = vmatpush1.msra.mxu0 %v361
    %367 = vmatprep.subr.mxu0 0.0
    %368 = vmatpush1.msra.mxu0 %v362
    %369 = vmatprep.subr.mxu0 0.0
    %370 = vmatpush1.msra.mxu0 %v363
    %371 = vmatprep.subr.mxu0 0.0
    %372 = vmatpush1.msra.mxu0 %v364
    %373 = vmatprep.subr.mxu0 0.0
    %374 = vmatpush1.msra.mxu0 0.0
    %375 = vmatprep.subr.mxu0 0.0
    %376 = vmatpush1.msra.mxu0 0.0
    %377 = vmatprep.subr.mxu0 0.0
    %378 = vmatpush1.msra.mxu0 0.0
    %379 = vmatprep.subr.mxu0 0.0
    %380 = vmatpush1.msra.mxu0 0.0
    %381 = vmatprep.subr.mxu0 0.0
    %382 = vmatpush1.msra.mxu0 0.0
    %383 = vmatprep.subr.mxu0 0.0
    %384 = vmatpush1.msra.mxu0 0.0
    %385 = vmatprep.subr.mxu0 0.0
    %386 = vmatpush1.msra.mxu0 0.0
    %387 = vmatprep.subr.mxu0 0.0
    %388 = vmatpush1.msra.mxu0 0.0
    %389 = vmatprep.subr.mxu0 0.0
    %390 = vmatpush1.msra.mxu0 0.0
    %391 = vmatprep.subr.mxu0 0.0
    %392 = vmatpush1.msra.mxu0 0.0
    %393 = vmatprep.subr.mxu0 0.0
    %394 = vmatpush1.msra.mxu0 0.0
    %395 = vmatprep.subr.mxu0 0.0
    %396 = vmatpush1.msra.mxu0 0.0
    %397 = vmatprep.subr.mxu0 0.0
    %398 = vmatpush1.msra.mxu0 0.0
    %399 = vmatprep.subr.mxu0 0.0
    %400 = vmatpush1.msra.mxu0 0.0
    %401 = vmatprep.subr.mxu0 0.0
    %402 = vmatpush1.msra.mxu0 0.0
    %403 = vmatprep.subr.mxu0 0.0
    %404 = vmatpush1.msra.mxu0 0.0
    %405 = vmatprep.subr.mxu0 0.0
    %406 = vmatpush1.msra.mxu0 0.0
    %407 = vmatprep.subr.mxu0 0.0
    %408 = vmatpush1.msra.mxu0 0.0
    %409 = vmatprep.subr.mxu0 0.0
    %410 = vmatpush1.msra.mxu0 0.0
    %411 = vmatprep.subr.mxu0 0.0
    %412 = vmatpush1.msra.mxu0 0.0
    %413 = vmatprep.subr.mxu0 0.0
    %414 = vmatpush1.msra.mxu0 0.0
    %415 = vmatprep.subr.mxu0 0.0
    %416 = vmatpush1.msra.mxu0 0.0
    %417 = vmatprep.subr.mxu0 0.0
    %418 = vmatpush1.msra.mxu0 0.0
    %419 = vmatprep.subr.mxu0 0.0
    %420 = vmatpush1.msra.mxu0 0.0
    %421 = vmatprep.subr.mxu0 0.0
    %422 = vmatpush1.msra.mxu0 0.0
    %423 = vmatprep.subr.mxu0 0.0
    %424 = vmatpush1.msra.mxu0 0.0
    %425 = vmatprep.subr.mxu0 0.0
    %426 = vmatpush1.msra.mxu0 0.0
    %427 = vmatprep.subr.mxu0 0.0
    %428 = vmatpush1.msra.mxu0 0.0
    %429 = vmatprep.mubr.f32.mxu0 0.0
    %430 = vmatmul.mubr.f32.gmra.mrb[0].mxu0 %v125
    %v431 = vpop.f32.mrb[0].mxu0
    %v432 = vadd.f32 0.0, %v431
    %v433 = vpop.f32.mrb[0].mxu0
    %434 = vdwg.mxu0
    %v435 = vld [vmem:[%s11] sm:$0xff]
    %v436 = vld [vmem:[%s11 + $0x8] sm:$0xff]
    %v437 = vld [vmem:[%s11 + $0x10] sm:$0xff]
    %v438 = vld [vmem:[%s11 + $0x18] sm:$0xff]
    %439 = vmatprep.subr.mxu0 0.0
    %440 = vmatpush1.msra.mxu0 %v435
    %441 = vmatprep.subr.mxu0 0.0
    %442 = vmatpush1.msra.mxu0 %v436
    %443 = vmatprep.subr.mxu0 0.0
    %444 = vmatpush1.msra.mxu0 %v437
    %445 = vmatprep.subr.mxu0 0.0
    %446 = vmatpush1.msra.mxu0 %v438
    %447 = vmatprep.subr.mxu0 0.0
    %448 = vmatpush1.msra.mxu0 0.0
    %449 = vmatprep.subr.mxu0 0.0
    %450 = vmatpush1.msra.mxu0 0.0
    %451 = vmatprep.subr.mxu0 0.0
    %452 = vmatpush1.msra.mxu0 0.0
    %453 = vmatprep.subr.mxu0 0.0
    %454 = vmatpush1.msra.mxu0 0.0
    %455 = vmatprep.subr.mxu0 0.0
    %456 = vmatpush1.msra.mxu0 0.0
    %457 = vmatprep.subr.mxu0 0.0
    %458 = vmatpush1.msra.mxu0 0.0
    %459 = vmatprep.subr.mxu0 0.0
    %460 = vmatpush1.msra.mxu0 0.0
    %461 = vmatprep.subr.mxu0 0.0
    %462 = vmatpush1.msra.mxu0 0.0
    %463 = vmatprep.subr.mxu0 0.0
    %464 = vmatpush1.msra.mxu0 0.0
    %465 = vmatprep.subr.mxu0 0.0
    %466 = vmatpush1.msra.mxu0 0.0
    %467 = vmatprep.subr.mxu0 0.0
    %468 = vmatpush1.msra.mxu0 0.0
    %469 = vmatprep.subr.mxu0 0.0
    %470 = vmatpush1.msra.mxu0 0.0
    %471 = vmatprep.subr.mxu0 0.0
    %472 = vmatpush1.msra.mxu0 0.0
    %473 = vmatprep.subr.mxu0 0.0
    %474 = vmatpush1.msra.mxu0 0.0
    %475 = vmatprep.subr.mxu0 0.0
    %476 = vmatpush1.msra.mxu0 0.0
    %477 = vmatprep.subr.mxu0 0.0
    %478 = vmatpush1.msra.mxu0 0.0
    %479 = vmatprep.subr.mxu0 0.0
    %480 = vmatpush1.msra.mxu0 0.0
    %481 = vmatprep.subr.mxu0 0.0
    %482 = vmatpush1.msra.mxu0 0.0
    %483 = vmatprep.subr.mxu0 0.0
    %484 = vmatpush1.msra.mxu0 0.0
    %485 = vmatprep.subr.mxu0 0.0
    %486 = vmatpush1.msra.mxu0 0.0
    %487 = vmatprep.subr.mxu0 0.0
    %488 = vmatpush1.msra.mxu0 0.0
    %489 = vmatprep.subr.mxu0 0.0
    %490 = vmatpush1.msra.mxu0 0.0
    %491 = vmatprep.subr.mxu0 0.0
    %492 = vmatpush1.msra.mxu0 0.0
    %493 = vmatprep.subr.mxu0 0.0
    %494 = vmatpush1.msra.mxu0 0.0
    %495 = vmatprep.subr.mxu0 0.0
    %496 = vmatpush1.msra.mxu0 0.0
    %497 = vmatprep.subr.mxu0 0.0
    %498 = vmatpush1.msra.mxu0 0.0
    %499 = vmatprep.subr.mxu0 0.0
    %500 = vmatpush1.msra.mxu0 0.0
    %501 = vmatprep.subr.mxu0 0.0
    %502 = vmatpush1.msra.mxu0 0.0
    %503 = vmatprep.mubr.f32.mxu0 0.0
    %504 = vmatmul.mubr.f32.gmra.mrb[0].mxu0 %v125
    %v505 = vpop.f32.mrb[0].mxu0
    %v506 = vadd.f32 0.0, %v505
    %v507 = vpop.f32.mrb[0].mxu0
    %508 = vdwg.mxu0
    %v509 = vld [vmem:[%s12] sm:$0xff]
    %v510 = vld [vmem:[%s12 + $0x8] sm:$0xff]
    %v511 = vld [vmem:[%s12 + $0x10] sm:$0xff]
    %v512 = vld [vmem:[%s12 + $0x18] sm:$0xff]
    %513 = vmatprep.subr.mxu0 0.0
    %514 = vmatpush1.msra.mxu0 %v509
    %515 = vmatprep.subr.mxu0 0.0
    %516 = vmatpush1.msra.mxu0 %v510
    %517 = vmatprep.subr.mxu0 0.0
    %518 = vmatpush1.msra.mxu0 %v511
    %519 = vmatprep.subr.mxu0 0.0
    %520 = vmatpush1.msra.mxu0 %v512
    %521 = vmatprep.subr.mxu0 0.0
    %522 = vmatpush1.msra.mxu0 0.0
    %523 = vmatprep.subr.mxu0 0.0
    %524 = vmatpush1.msra.mxu0 0.0
    %525 = vmatprep.subr.mxu0 0.0
    %526 = vmatpush1.msra.mxu0 0.0
    %527 = vmatprep.subr.mxu0 0.0
    %528 = vmatpush1.msra.mxu0 0.0
    %529 = vmatprep.subr.mxu0 0.0
    %530 = vmatpush1.msra.mxu0 0.0
    %531 = vmatprep.subr.mxu0 0.0
    %532 = vmatpush1.msra.mxu0 0.0
    %533 = vmatprep.subr.mxu0 0.0
    %534 = vmatpush1.msra.mxu0 0.0
    %535 = vmatprep.subr.mxu0 0.0
    %536 = vmatpush1.msra.mxu0 0.0
    %537 = vmatprep.subr.mxu0 0.0
    %538 = vmatpush1.msra.mxu0 0.0
    %539 = vmatprep.subr.mxu0 0.0
    %540 = vmatpush1.msra.mxu0 0.0
    %541 = vmatprep.subr.mxu0 0.0
    %542 = vmatpush1.msra.mxu0 0.0
    %543 = vmatprep.subr.mxu0 0.0
    %544 = vmatpush1.msra.mxu0 0.0
    %545 = vmatprep.subr.mxu0 0.0
    %546 = vmatpush1.msra.mxu0 0.0
    %547 = vmatprep.subr.mxu0 0.0
    %548 = vmatpush1.msra.mxu0 0.0
    %549 = vmatprep.subr.mxu0 0.0
    %550 = vmatpush1.msra.mxu0 0.0
    %551 = vmatprep.subr.mxu0 0.0
    %552 = vmatpush1.msra.mxu0 0.0
    %553 = vmatprep.subr.mxu0 0.0
    %554 = vmatpush1.msra.mxu0 0.0
    %555 = vmatprep.subr.mxu0 0.0
    %556 = vmatpush1.msra.mxu0 0.0
    %557 = vmatprep.subr.mxu0 0.0
    %558 = vmatpush1.msra.mxu0 0.0
    %559 = vmatprep.subr.mxu0 0.0
    %560 = vmatpush1.msra.mxu0 0.0
    %561 = vmatprep.subr.mxu0 0.0
    %562 = vmatpush1.msra.mxu0 0.0
    %563 = vmatprep.subr.mxu0 0.0
    %564 = vmatpush1.msra.mxu0 0.0
    %565 = vmatprep.subr.mxu0 0.0
    %566 = vmatpush1.msra.mxu0 0.0
    %567 = vmatprep.subr.mxu0 0.0
    %568 = vmatpush1.msra.mxu0 0.0
    %569 = vmatprep.subr.mxu0 0.0
    %570 = vmatpush1.msra.mxu0 0.0
    %571 = vmatprep.subr.mxu0 0.0
    %572 = vmatpush1.msra.mxu0 0.0
    %573 = vmatprep.subr.mxu0 0.0
    %574 = vmatpush1.msra.mxu0 0.0
    %575 = vmatprep.subr.mxu0 0.0
    %576 = vmatpush1.msra.mxu0 0.0
    %577 = vmatprep.mubr.f32.mxu0 0.0
    %578 = vmatmul.mubr.f32.gmra.mrb[0].mxu0 %v125
    %v579 = vpop.f32.mrb[0].mxu0
    %v580 = vadd.f32 0.0, %v579
    %v581 = vpop.f32.mrb[0].mxu0
    %582 = vdwg.mxu0
    %v583 = vld [vmem:[%s13] sm:$0xff]
    %v584 = vld [vmem:[%s13 + $0x8] sm:$0xff]
    %v585 = vld [vmem:[%s13 + $0x10] sm:$0xff]
    %v586 = vld [vmem:[%s13 + $0x18] sm:$0xff]
    %587 = vmatprep.subr.mxu0 0.0
    %588 = vmatpush1.msra.mxu0 %v583
    %589 = vmatprep.subr.mxu0 0.0
    %590 = vmatpush1.msra.mxu0 %v584
    %591 = vmatprep.subr.mxu0 0.0
    %592 = vmatpush1.msra.mxu0 %v585
    %593 = vmatprep.subr.mxu0 0.0
    %594 = vmatpush1.msra.mxu0 %v586
    %595 = vmatprep.subr.mxu0 0.0
    %596 = vmatpush1.msra.mxu0 0.0
    %597 = vmatprep.subr.mxu0 0.0
    %598 = vmatpush1.msra.mxu0 0.0
    %599 = vmatprep.subr.mxu0 0.0
    %600 = vmatpush1.msra.mxu0 0.0
    %601 = vmatprep.subr.mxu0 0.0
    %602 = vmatpush1.msra.mxu0 0.0
    %603 = vmatprep.subr.mxu0 0.0
    %604 = vmatpush1.msra.mxu0 0.0
    %605 = vmatprep.subr.mxu0 0.0
    %606 = vmatpush1.msra.mxu0 0.0
    %607 = vmatprep.subr.mxu0 0.0
    %608 = vmatpush1.msra.mxu0 0.0
    %609 = vmatprep.subr.mxu0 0.0
    %610 = vmatpush1.msra.mxu0 0.0
    %611 = vmatprep.subr.mxu0 0.0
    %612 = vmatpush1.msra.mxu0 0.0
    %613 = vmatprep.subr.mxu0 0.0
    %614 = vmatpush1.msra.mxu0 0.0
    %615 = vmatprep.subr.mxu0 0.0
    %616 = vmatpush1.msra.mxu0 0.0
    %617 = vmatprep.subr.mxu0 0.0
    %618 = vmatpush1.msra.mxu0 0.0
    %619 = vmatprep.subr.mxu0 0.0
    %620 = vmatpush1.msra.mxu0 0.0
    %621 = vmatprep.subr.mxu0 0.0
    %622 = vmatpush1.msra.mxu0 0.0
    %623 = vmatprep.subr.mxu0 0.0
    %624 = vmatpush1.msra.mxu0 0.0
    %625 = vmatprep.subr.mxu0 0.0
    %626 = vmatpush1.msra.mxu0 0.0
    %627 = vmatprep.subr.mxu0 0.0
    %628 = vmatpush1.msra.mxu0 0.0
    %629 = vmatprep.subr.mxu0 0.0
    %630 = vmatpush1.msra.mxu0 0.0
    %631 = vmatprep.subr.mxu0 0.0
    %632 = vmatpush1.msra.mxu0 0.0
    %633 = vmatprep.subr.mxu0 0.0
    %634 = vmatpush1.msra.mxu0 0.0
    %635 = vmatprep.subr.mxu0 0.0
    %636 = vmatpush1.msra.mxu0 0.0
    %637 = vmatprep.subr.mxu0 0.0
    %638 = vmatpush1.msra.mxu0 0.0
    %639 = vmatprep.subr.mxu0 0.0
    %640 = vmatpush1.msra.mxu0 0.0
    %641 = vmatprep.subr.mxu0 0.0
    %642 = vmatpush1.msra.mxu0 0.0
    %643 = vmatprep.subr.mxu0 0.0
    %644 = vmatpush1.msra.mxu0 0.0
    %645 = vmatprep.subr.mxu0 0.0
    %646 = vmatpush1.msra.mxu0 0.0
    %647 = vmatprep.subr.mxu0 0.0
    %648 = vmatpush1.msra.mxu0 0.0
    %649 = vmatprep.subr.mxu0 0.0
    %650 = vmatpush1.msra.mxu0 0.0
    %651 = vmatprep.mubr.f32.mxu0 0.0
    %652 = vmatmul.mubr.f32.gmra.mrb[0].mxu0 %v125
    %v653 = vpop.f32.mrb[0].mxu0
    %v654 = vadd.f32 0.0, %v653
    %v655 = vpop.f32.mrb[0].mxu0
    %656 = vdwg.mxu0
    %v657 = vmul.f32 %v358, %v83
    %v658 = vmul.f32 %v432, %v82
    %v659 = vadd.f32 %v657, %v658
    %v660 = vmul.f32 %v506, %v83
    %v661 = vmul.f32 %v580, %v82
    %v662 = vadd.f32 %v660, %v661
    %vm663 = vcmask 130048
    %v665 = vsel %vm663, %v659, 0
    %v668 = vsel %vm663, %v662, 0
    %670 = vmatprep.subr.mxu0 0.0
    %671 = vmatpush1.xpose.msra.mxu0 %v668
    %672 = vmatprep.subr.mxu0 0.0
    %673 = vmatpush1.xpose.msra.mxu0 0.0
    %674 = vmatprep.subr.mxu0 0.0
    %675 = vmatpush1.xpose.msra.mxu0 0.0
    %676 = vmatprep.subr.mxu0 0.0
    %677 = vmatpush1.xpose.msra.mxu0 0.0
    %678 = vmatprep.subr.mxu0 0.0
    %679 = vmatpush1.xpose.msra.mxu0 0.0
    %680 = vmatprep.subr.mxu0 0.0
    %681 = vmatpush1.xpose.msra.mxu0 0.0
    %682 = vmatprep.subr.mxu0 0.0
    %683 = vmatpush1.xpose.msra.mxu0 0.0
    %684 = vmatprep.subr.mxu0 0.0
    %685 = vmatpush1.xpose.msra.mxu0 0.0
    %686 = vmatprep.subr.mxu0 0.0
    %687 = vmatpush1.xpose.msra.mxu0 0.0
    %688 = vmatprep.subr.mxu0 0.0
    %689 = vmatpush1.xpose.msra.mxu0 0.0
    %690 = vmatprep.subr.mxu0 0.0
    %691 = vmatpush1.xpose.msra.mxu0 0.0
    %692 = vmatprep.subr.mxu0 0.0
    %693 = vmatpush1.xpose.msra.mxu0 0.0
    %694 = vmatprep.subr.mxu0 0.0
    %695 = vmatpush1.xpose.msra.mxu0 0.0
    %696 = vmatprep.subr.mxu0 0.0
    %697 = vmatpush1.xpose.msra.mxu0 0.0
    %698 = vmatprep.subr.mxu0 0.0
    %699 = vmatpush1.xpose.msra.mxu0 0.0
    %700 = vmatprep.subr.mxu0 0.0
    %701 = vmatpush1.xpose.msra.mxu0 0.0
    %702 = vmatprep.subr.mxu0 0.0
    %703 = vmatpush1.xpose.msra.mxu0 0.0
    %704 = vmatprep.subr.mxu0 0.0
    %705 = vmatpush1.xpose.msra.mxu0 0.0
    %706 = vmatprep.subr.mxu0 0.0
    %707 = vmatpush1.xpose.msra.mxu0 0.0
    %708 = vmatprep.subr.mxu0 0.0
    %709 = vmatpush1.xpose.msra.mxu0 0.0
    %710 = vmatprep.subr.mxu0 0.0
    %711 = vmatpush1.xpose.msra.mxu0 0.0
    %712 = vmatprep.subr.mxu0 0.0
    %713 = vmatpush1.xpose.msra.mxu0 0.0
    %714 = vmatprep.subr.mxu0 0.0
    %715 = vmatpush1.xpose.msra.mxu0 0.0
    %716 = vmatprep.subr.mxu0 0.0
    %717 = vmatpush1.xpose.msra.mxu0 0.0
    %718 = vmatprep.subr.mxu0 0.0
    %719 = vmatpush1.xpose.msra.mxu0 0.0
    %720 = vmatprep.subr.mxu0 0.0
    %721 = vmatpush1.xpose.msra.mxu0 0.0
    %722 = vmatprep.subr.mxu0 0.0
    %723 = vmatpush1.xpose.msra.mxu0 0.0
    %724 = vmatprep.subr.mxu0 0.0
    %725 = vmatpush1.xpose.msra.mxu0 0.0
    %726 = vmatprep.subr.mxu0 0.0
    %727 = vmatpush1.xpose.msra.mxu0 0.0
    %728 = vmatprep.subr.mxu0 0.0
    %729 = vmatpush1.xpose.msra.mxu0 0.0
    %730 = vmatprep.subr.mxu0 0.0
    %731 = vmatpush1.xpose.msra.mxu0 0.0
    %732 = vmatprep.subr.mxu0 0.0
    %733 = vmatpush1.xpose.msra.mxu0 0.0
    %734 = vmatprep.mubr.f32.mxu0 0.0
    %735 = vmatmul.mubr.f32.gmra.mrb[0].mxu0 %v665
    %v736 = vpop.f32.mrb[0].mxu0
    %v737 = vadd.f32 0.0, %v736
    %v738 = vpop.f32.mrb[0].mxu0
    %739 = vdwg.mxu0
    %v740 = vmul.f32 %v737, 0.25
    %v741 = vadd.f32 %v740, %v79
    %vm742 = vcmask 64512
    %v743 = vsel %vm742, %v741, -inf
    %744 = vmax.xlane.f32.xlu0 %v743
    %v745 = vpop.xlane.xlu0 %744
    %v746 = vsub.f32 %v741, %v745
    %v747 = vmul.f32 %v746, 1.442695
    %v748 = vpow.pop %v747
    %v749 = vsel %vm742, %v748, 0.0
    %750 = vadd.xlane.f32.xlu0 %v749
    %v751 = vpop.xlane.xlu0 %750
    %v752 = vrcp.pop %v751
    %v753 = vmul.f32 %v748, %v752
    %v755 = vsel %vm742, %v753, 0
    %757 = vmatprep.subr.mxu0 0.0
    %758 = vmatpush1.msra.mxu0 %v654
    %759 = vmatprep.subr.mxu0 0.0
    %760 = vmatpush1.msra.mxu0 0.0
    %761 = vmatprep.subr.mxu0 0.0
    %762 = vmatpush1.msra.mxu0 0.0
    %763 = vmatprep.subr.mxu0 0.0
    %764 = vmatpush1.msra.mxu0 0.0
    %765 = vmatprep.subr.mxu0 0.0
    %766 = vmatpush1.msra.mxu0 0.0
    %767 = vmatprep.subr.mxu0 0.0
    %768 = vmatpush1.msra.mxu0 0.0
    %769 = vmatprep.subr.mxu0 0.0
    %770 = vmatpush1.msra.mxu0 0.0
    %771 = vmatprep.subr.mxu0 0.0
    %772 = vmatpush1.msra.mxu0 0.0
    %773 = vmatprep.subr.mxu0 0.0
    %774 = vmatpush1.msra.mxu0 0.0
    %775 = vmatprep.subr.mxu0 0.0
    %776 = vmatpush1.msra.mxu0 0.0
    %777 = vmatprep.subr.mxu0 0.0
    %778 = vmatpush1.msra.mxu0 0.0
    %779 = vmatprep.subr.mxu0 0.0
    %780 = vmatpush1.msra.mxu0 0.0
    %781 = vmatprep.subr.mxu0 0.0
    %782 = vmatpush1.msra.mxu0 0.0
    %783 = vmatprep.subr.mxu0 0.0
    %784 = vmatpush1.msra.mxu0 0.0
    %785 = vmatprep.subr.mxu0 0.0
    %786 = vmatpush1.msra.mxu0 0.0
    %787 = vmatprep.subr.mxu0 0.0
    %788 = vmatpush1.msra.mxu0 0.0
    %789 = vmatprep.subr.mxu0 0.0
    %790 = vmatpush1.msra.mxu0 0.0
    %791 = vmatprep.subr.mxu0 0.0
    %792 = vmatpush1.msra.mxu0 0.0
    %793 = vmatprep.subr.mxu0 0.0
    %794 = vmatpush1.msra.mxu0 0.0
    %795 = vmatprep.subr.mxu0 0.0
    %796 = vmatpush1.msra.mxu0 0.0
    %797 = vmatprep.subr.mxu0 0.0
    %798 = vmatpush1.msra.mxu0 0.0
    %799 = vmatprep.subr.mxu0 0.0
    %800 = vmatpush1.msra.mxu0 0.0
    %801 = vmatprep.subr.mxu0 0.0
    %802 = vmatpush1.msra.mxu0 0.0
    %803 = vmatprep.subr.mxu0 0.0
    %804 = vmatpush1.msra.mxu0 0.0
    %805 = vmatprep.subr.mxu0 0.0
    %806 = vmatpush1.msra.mxu0 0.0
    %807 = vmatprep.subr.mxu0 0.0
    %808 = vmatpush1.msra.mxu0 0.0
    %809 = vmatprep.subr.mxu0 0.0
    %810 = vmatpush1.msra.mxu0 0.0
    %811 = vmatprep.subr.mxu0 0.0
    %812 = vmatpush1.msra.mxu0 0.0
    %813 = vmatprep.subr.mxu0 0.0
    %814 = vmatpush1.msra.mxu0 0.0
    %815 = vmatprep.subr.mxu0 0.0
    %816 = vmatpush1.msra.mxu0 0.0
    %817 = vmatprep.subr.mxu0 0.0
    %818 = vmatpush1.msra.mxu0 0.0
    %819 = vmatprep.subr.mxu0 0.0
    %820 = vmatpush1.msra.mxu0 0.0
    %821 = vmatprep.mubr.f32.mxu0 0.0
    %822 = vmatmul.mubr.f32.gmra.mrb[0].mxu0 %v755
    %v823 = vpop.f32.mrb[0].mxu0
    %v824 = vadd.f32 0.0, %v823
    %v825 = vpop.f32.mrb[0].mxu0
    %826 = vdwg.mxu0
    %v827 = vld [vmem:[%s16] sm:$0xff]
    %v828 = vld [vmem:[%s16 + $0x8] sm:$0xff]
    %v830 = vsel %vm663, %v824, 0
    %832 = vmatprep.subr.mxu0 0.0
    %833 = vmatpush1.msra.mxu0 %v827
    %834 = vmatprep.subr.mxu0 0.0
    %835 = vmatpush1.msra.mxu0 %v828
    %836 = vmatprep.subr.mxu0 0.0
    %837 = vmatpush1.msra.mxu0 0.0
    %838 = vmatprep.subr.mxu0 0.0
    %839 = vmatpush1.msra.mxu0 0.0
    %840 = vmatprep.subr.mxu0 0.0
    %841 = vmatpush1.msra.mxu0 0.0
    %842 = vmatprep.subr.mxu0 0.0
    %843 = vmatpush1.msra.mxu0 0.0
    %844 = vmatprep.subr.mxu0 0.0
    %845 = vmatpush1.msra.mxu0 0.0
    %846 = vmatprep.subr.mxu0 0.0
    %847 = vmatpush1.msra.mxu0 0.0
    %848 = vmatprep.subr.mxu0 0.0
    %849 = vmatpush1.msra.mxu0 0.0
    %850 = vmatprep.subr.mxu0 0.0
    %851 = vmatpush1.msra.mxu0 0.0
    %852 = vmatprep.subr.mxu0 0.0
    %853 = vmatpush1.msra.mxu0 0.0
    %854 = vmatprep.subr.mxu0 0.0
    %855 = vmatpush1.msra.mxu0 0.0
    %856 = vmatprep.subr.mxu0 0.0
    %857 = vmatpush1.msra.mxu0 0.0
    %858 = vmatprep.subr.mxu0 0.0
    %859 = vmatpush1.msra.mxu0 0.0
    %860 = vmatprep.subr.mxu0 0.0
    %861 = vmatpush1.msra.mxu0 0.0
    %862 = vmatprep.subr.mxu0 0.0
    %863 = vmatpush1.msra.mxu0 0.0
    %864 = vmatprep.subr.mxu0 0.0
    %865 = vmatpush1.msra.mxu0 0.0
    %866 = vmatprep.subr.mxu0 0.0
    %867 = vmatpush1.msra.mxu0 0.0
    %868 = vmatprep.subr.mxu0 0.0
    %869 = vmatpush1.msra.mxu0 0.0
    %870 = vmatprep.subr.mxu0 0.0
    %871 = vmatpush1.msra.mxu0 0.0
    %872 = vmatprep.subr.mxu0 0.0
    %873 = vmatpush1.msra.mxu0 0.0
    %874 = vmatprep.subr.mxu0 0.0
    %875 = vmatpush1.msra.mxu0 0.0
    %876 = vmatprep.subr.mxu0 0.0
    %877 = vmatpush1.msra.mxu0 0.0
    %878 = vmatprep.subr.mxu0 0.0
    %879 = vmatpush1.msra.mxu0 0.0
    %880 = vmatprep.subr.mxu0 0.0
    %881 = vmatpush1.msra.mxu0 0.0
    %882 = vmatprep.subr.mxu0 0.0
    %883 = vmatpush1.msra.mxu0 0.0
    %884 = vmatprep.subr.mxu0 0.0
    %885 = vmatpush1.msra.mxu0 0.0
    %886 = vmatprep.subr.mxu0 0.0
    %887 = vmatpush1.msra.mxu0 0.0
    %888 = vmatprep.subr.mxu0 0.0
    %889 = vmatpush1.msra.mxu0 0.0
    %890 = vmatprep.subr.mxu0 0.0
    %891 = vmatpush1.msra.mxu0 0.0
    %892 = vmatprep.subr.mxu0 0.0
    %893 = vmatpush1.msra.mxu0 0.0
    %894 = vmatprep.subr.mxu0 0.0
    %895 = vmatpush1.msra.mxu0 0.0
    %896 = vmatprep.mubr.f32.mxu0 0.0
    %897 = vmatmul.mubr.f32.gmra.mrb[0].mxu0 %v830
    %v898 = vpop.f32.mrb[0].mxu0
    %v899 = vadd.f32 0.0, %v898
    %v900 = vpop.f32.mrb[0].mxu0
    %901 = vdwg.mxu0
    %vm902 = vcmask 523264
    %v904 = vsel %vm902, %v278, 0
    %906 = vmatprep.subr.mxu0 0.0
    %907 = vmatpush1.msra.mxu0 %v279
    %908 = vmatprep.subr.mxu0 0.0
    %909 = vmatpush1.msra.mxu0 %v280
    %910 = vmatprep.subr.mxu0 0.0
    %911 = vmatpush1.msra.mxu0 %v281
    %912 = vmatprep.subr.mxu0 0.0
    %913 = vmatpush1.msra.mxu0 %v282
    %914 = vmatprep.subr.mxu0 0.0
    %915 = vmatpush1.msra.mxu0 %v283
    %916 = vmatprep.subr.mxu0 0.0
    %917 = vmatpush1.msra.mxu0 %v284
    %918 = vmatprep.subr.mxu0 0.0
    %919 = vmatpush1.msra.mxu0 %v285
    %920 = vmatprep.subr.mxu0 0.0
    %921 = vmatpush1.msra.mxu0 %v286
    %922 = vmatprep.subr.mxu0 0.0
    %923 = vmatpush1.msra.mxu0 0.0
    %924 = vmatprep.subr.mxu0 0.0
    %925 = vmatpush1.msra.mxu0 0.0
    %926 = vmatprep.subr.mxu0 0.0
    %927 = vmatpush1.msra.mxu0 0.0
    %928 = vmatprep.subr.mxu0 0.0
    %929 = vmatpush1.msra.mxu0 0.0
    %930 = vmatprep.subr.mxu0 0.0
    %931 = vmatpush1.msra.mxu0 0.0
    %932 = vmatprep.subr.mxu0 0.0
    %933 = vmatpush1.msra.mxu0 0.0
    %934 = vmatprep.subr.mxu0 0.0
    %935 = vmatpush1.msra.mxu0 0.0
    %936 = vmatprep.subr.mxu0 0.0
    %937 = vmatpush1.msra.mxu0 0.0
    %938 = vmatprep.subr.mxu0 0.0
    %939 = vmatpush1.msra.mxu0 0.0
    %940 = vmatprep.subr.mxu0 0.0
    %941 = vmatpush1.msra.mxu0 0.0
    %942 = vmatprep.subr.mxu0 0.0
    %943 = vmatpush1.msra.mxu0 0.0
    %944 = vmatprep.subr.mxu0 0.0
    %945 = vmatpush1.msra.mxu0 0.0
    %946 = vmatprep.subr.mxu0 0.0
    %947 = vmatpush1.msra.mxu0 0.0
    %948 = vmatprep.subr.mxu0 0.0
    %949 = vmatpush1.msra.mxu0 0.0
    %950 = vmatprep.subr.mxu0 0.0
    %951 = vmatpush1.msra.mxu0 0.0
    %952 = vmatprep.subr.mxu0 0.0
    %953 = vmatpush1.msra.mxu0 0.0
    %954 = vmatprep.subr.mxu0 0.0
    %955 = vmatpush1.msra.mxu0 0.0
    %956 = vmatprep.subr.mxu0 0.0
    %957 = vmatpush1.msra.mxu0 0.0
    %958 = vmatprep.subr.mxu0 0.0
    %959 = vmatpush1.msra.mxu0 0.0
    %960 = vmatprep.subr.mxu0 0.0
    %961 = vmatpush1.msra.mxu0 0.0
    %962 = vmatprep.subr.mxu0 0.0
    %963 = vmatpush1.msra.mxu0 0.0
    %964 = vmatprep.subr.mxu0 0.0
    %965 = vmatpush1.msra.mxu0 0.0
    %966 = vmatprep.subr.mxu0 0.0
    %967 = vmatpush1.msra.mxu0 0.0
    %968 = vmatprep.subr.mxu0 0.0
    %969 = vmatpush1.msra.mxu0 0.0
    %970 = vmatprep.mubr.f32.mxu0 0.0
    %971 = vmatmul.mubr.f32.gmra.mrb[0].mxu0 %v904
    %v972 = vpop.f32.mrb[0].mxu0
    %v973 = vadd.f32 %v899, %v972
    %v974 = vpop.f32.mrb[0].mxu0
    %975 = vdwg.mxu0
    %s976 = scalar_lea.vmem %s9, 32
    %v977 = vld [vmem:[%s976] sm:$0xff]
    %v978 = vld [vmem:[%s976 + $0x8] sm:$0xff]
    %v979 = vld [vmem:[%s976 + $0x10] sm:$0xff]
    %v980 = vld [vmem:[%s976 + $0x18] sm:$0xff]
    %981 = vmatprep.subr.mxu0 0.0
    %982 = vmatpush1.msra.mxu0 %v977
    %983 = vmatprep.subr.mxu0 0.0
    %984 = vmatpush1.msra.mxu0 %v978
    %985 = vmatprep.subr.mxu0 0.0
    %986 = vmatpush1.msra.mxu0 %v979
    %987 = vmatprep.subr.mxu0 0.0
    %988 = vmatpush1.msra.mxu0 %v980
    %989 = vmatprep.subr.mxu0 0.0
    %990 = vmatpush1.msra.mxu0 0.0
    %991 = vmatprep.subr.mxu0 0.0
    %992 = vmatpush1.msra.mxu0 0.0
    %993 = vmatprep.subr.mxu0 0.0
    %994 = vmatpush1.msra.mxu0 0.0
    %995 = vmatprep.subr.mxu0 0.0
    %996 = vmatpush1.msra.mxu0 0.0
    %997 = vmatprep.subr.mxu0 0.0
    %998 = vmatpush1.msra.mxu0 0.0
    %999 = vmatprep.subr.mxu0 0.0
    %1000 = vmatpush1.msra.mxu0 0.0
    %1001 = vmatprep.subr.mxu0 0.0
    %1002 = vmatpush1.msra.mxu0 0.0
    %1003 = vmatprep.subr.mxu0 0.0
    %1004 = vmatpush1.msra.mxu0 0.0
    %1005 = vmatprep.subr.mxu0 0.0
    %1006 = vmatpush1.msra.mxu0 0.0
    %1007 = vmatprep.subr.mxu0 0.0
    %1008 = vmatpush1.msra.mxu0 0.0
    %1009 = vmatprep.subr.mxu0 0.0
    %1010 = vmatpush1.msra.mxu0 0.0
    %1011 = vmatprep.subr.mxu0 0.0
    %1012 = vmatpush1.msra.mxu0 0.0
    %1013 = vmatprep.subr.mxu0 0.0
    %1014 = vmatpush1.msra.mxu0 0.0
    %1015 = vmatprep.subr.mxu0 0.0
    %1016 = vmatpush1.msra.mxu0 0.0
    %1017 = vmatprep.subr.mxu0 0.0
    %1018 = vmatpush1.msra.mxu0 0.0
    %1019 = vmatprep.subr.mxu0 0.0
    %1020 = vmatpush1.msra.mxu0 0.0
    %1021 = vmatprep.subr.mxu0 0.0
    %1022 = vmatpush1.msra.mxu0 0.0
    %1023 = vmatprep.subr.mxu0 0.0
    %1024 = vmatpush1.msra.mxu0 0.0
    %1025 = vmatprep.subr.mxu0 0.0
    %1026 = vmatpush1.msra.mxu0 0.0
    %1027 = vmatprep.subr.mxu0 0.0
    %1028 = vmatpush1.msra.mxu0 0.0
    %1029 = vmatprep.subr.mxu0 0.0
    %1030 = vmatpush1.msra.mxu0 0.0
    %1031 = vmatprep.subr.mxu0 0.0
    %1032 = vmatpush1.msra.mxu0 0.0
    %1033 = vmatprep.subr.mxu0 0.0
    %1034 = vmatpush1.msra.mxu0 0.0
    %1035 = vmatprep.subr.mxu0 0.0
    %1036 = vmatpush1.msra.mxu0 0.0
    %1037 = vmatprep.subr.mxu0 0.0
    %1038 = vmatpush1.msra.mxu0 0.0
    %1039 = vmatprep.subr.mxu0 0.0
    %1040 = vmatpush1.msra.mxu0 0.0
    %1041 = vmatprep.subr.mxu0 0.0
    %1042 = vmatpush1.msra.mxu0 0.0
    %1043 = vmatprep.subr.mxu0 0.0
    %1044 = vmatpush1.msra.mxu0 0.0
    %1045 = vmatprep.mubr.f32.mxu0 0.0
    %1046 = vmatmul.mubr.f32.gmra.mrb[0].mxu0 %v125
    %v1047 = vpop.f32.mrb[0].mxu0
    %v1048 = vadd.f32 0.0, %v1047
    %v1049 = vpop.f32.mrb[0].mxu0
    %1050 = vdwg.mxu0
    %s1051 = scalar_lea.vmem %s10, 32
    %v1052 = vld [vmem:[%s1051] sm:$0xff]
    %v1053 = vld [vmem:[%s1051 + $0x8] sm:$0xff]
    %v1054 = vld [vmem:[%s1051 + $0x10] sm:$0xff]
    %v1055 = vld [vmem:[%s1051 + $0x18] sm:$0xff]
    %1056 = vmatprep.subr.mxu0 0.0
    %1057 = vmatpush1.msra.mxu0 %v1052
    %1058 = vmatprep.subr.mxu0 0.0
    %1059 = vmatpush1.msra.mxu0 %v1053
    %1060 = vmatprep.subr.mxu0 0.0
    %1061 = vmatpush1.msra.mxu0 %v1054
    %1062 = vmatprep.subr.mxu0 0.0
    %1063 = vmatpush1.msra.mxu0 %v1055
    %1064 = vmatprep.subr.mxu0 0.0
    %1065 = vmatpush1.msra.mxu0 0.0
    %1066 = vmatprep.subr.mxu0 0.0
    %1067 = vmatpush1.msra.mxu0 0.0
    %1068 = vmatprep.subr.mxu0 0.0
    %1069 = vmatpush1.msra.mxu0 0.0
    %1070 = vmatprep.subr.mxu0 0.0
    %1071 = vmatpush1.msra.mxu0 0.0
    %1072 = vmatprep.subr.mxu0 0.0
    %1073 = vmatpush1.msra.mxu0 0.0
    %1074 = vmatprep.subr.mxu0 0.0
    %1075 = vmatpush1.msra.mxu0 0.0
    %1076 = vmatprep.subr.mxu0 0.0
    %1077 = vmatpush1.msra.mxu0 0.0
    %1078 = vmatprep.subr.mxu0 0.0
    %1079 = vmatpush1.msra.mxu0 0.0
    %1080 = vmatprep.subr.mxu0 0.0
    %1081 = vmatpush1.msra.mxu0 0.0
    %1082 = vmatprep.subr.mxu0 0.0
    %1083 = vmatpush1.msra.mxu0 0.0
    %1084 = vmatprep.subr.mxu0 0.0
    %1085 = vmatpush1.msra.mxu0 0.0
    %1086 = vmatprep.subr.mxu0 0.0
    %1087 = vmatpush1.msra.mxu0 0.0
    %1088 = vmatprep.subr.mxu0 0.0
    %1089 = vmatpush1.msra.mxu0 0.0
    %1090 = vmatprep.subr.mxu0 0.0
    %1091 = vmatpush1.msra.mxu0 0.0
    %1092 = vmatprep.subr.mxu0 0.0
    %1093 = vmatpush1.msra.mxu0 0.0
    %1094 = vmatprep.subr.mxu0 0.0
    %1095 = vmatpush1.msra.mxu0 0.0
    %1096 = vmatprep.subr.mxu0 0.0
    %1097 = vmatpush1.msra.mxu0 0.0
    %1098 = vmatprep.subr.mxu0 0.0
    %1099 = vmatpush1.msra.mxu0 0.0
    %1100 = vmatprep.subr.mxu0 0.0
    %1101 = vmatpush1.msra.mxu0 0.0
    %1102 = vmatprep.subr.mxu0 0.0
    %1103 = vmatpush1.msra.mxu0 0.0
    %1104 = vmatprep.subr.mxu0 0.0
    %1105 = vmatpush1.msra.mxu0 0.0
    %1106 = vmatprep.subr.mxu0 0.0
    %1107 = vmatpush1.msra.mxu0 0.0
    %1108 = vmatprep.subr.mxu0 0.0
    %1109 = vmatpush1.msra.mxu0 0.0
    %1110 = vmatprep.subr.mxu0 0.0
    %1111 = vmatpush1.msra.mxu0 0.0
    %1112 = vmatprep.subr.mxu0 0.0
    %1113 = vmatpush1.msra.mxu0 0.0
    %1114 = vmatprep.subr.mxu0 0.0
    %1115 = vmatpush1.msra.mxu0 0.0
    %1116 = vmatprep.subr.mxu0 0.0
    %1117 = vmatpush1.msra.mxu0 0.0
    %1118 = vmatprep.subr.mxu0 0.0
    %1119 = vmatpush1.msra.mxu0 0.0
    %1120 = vmatprep.mubr.f32.mxu0 0.0
    %1121 = vmatmul.mubr.f32.gmra.mrb[0].mxu0 %v125
    %v1122 = vpop.f32.mrb[0].mxu0
    %v1123 = vadd.f32 0.0, %v1122
    %v1124 = vpop.f32.mrb[0].mxu0
    %1125 = vdwg.mxu0
    %s1126 = scalar_lea.vmem %s11, 32
    %v1127 = vld [vmem:[%s1126] sm:$0xff]
    %v1128 = vld [vmem:[%s1126 + $0x8] sm:$0xff]
    %v1129 = vld [vmem:[%s1126 + $0x10] sm:$0xff]
    %v1130 = vld [vmem:[%s1126 + $0x18] sm:$0xff]
    %1131 = vmatprep.subr.mxu0 0.0
    %1132 = vmatpush1.msra.mxu0 %v1127
    %1133 = vmatprep.subr.mxu0 0.0
    %1134 = vmatpush1.msra.mxu0 %v1128
    %1135 = vmatprep.subr.mxu0 0.0
    %1136 = vmatpush1.msra.mxu0 %v1129
    %1137 = vmatprep.subr.mxu0 0.0
    %1138 = vmatpush1.msra.mxu0 %v1130
    %1139 = vmatprep.subr.mxu0 0.0
    %1140 = vmatpush1.msra.mxu0 0.0
    %1141 = vmatprep.subr.mxu0 0.0
    %1142 = vmatpush1.msra.mxu0 0.0
    %1143 = vmatprep.subr.mxu0 0.0
    %1144 = vmatpush1.msra.mxu0 0.0
    %1145 = vmatprep.subr.mxu0 0.0
    %1146 = vmatpush1.msra.mxu0 0.0
    %1147 = vmatprep.subr.mxu0 0.0
    %1148 = vmatpush1.msra.mxu0 0.0
    %1149 = vmatprep.subr.mxu0 0.0
    %1150 = vmatpush1.msra.mxu0 0.0
    %1151 = vmatprep.subr.mxu0 0.0
    %1152 = vmatpush1.msra.mxu0 0.0
    %1153 = vmatprep.subr.mxu0 0.0
    %1154 = vmatpush1.msra.mxu0 0.0
    %1155 = vmatprep.subr.mxu0 0.0
    %1156 = vmatpush1.msra.mxu0 0.0
    %1157 = vmatprep.subr.mxu0 0.0
    %1158 = vmatpush1.msra.mxu0 0.0
    %1159 = vmatprep.subr.mxu0 0.0
    %1160 = vmatpush1.msra.mxu0 0.0
    %1161 = vmatprep.subr.mxu0 0.0
    %1162 = vmatpush1.msra.mxu0 0.0
    %1163 = vmatprep.subr.mxu0 0.0
    %1164 = vmatpush1.msra.mxu0 0.0
    %1165 = vmatprep.subr.mxu0 0.0
    %1166 = vmatpush1.msra.mxu0 0.0
    %1167 = vmatprep.subr.mxu0 0.0
    %1168 = vmatpush1.msra.mxu0 0.0
    %1169 = vmatprep.subr.mxu0 0.0
    %1170 = vmatpush1.msra.mxu0 0.0
    %1171 = vmatprep.subr.mxu0 0.0
    %1172 = vmatpush1.msra.mxu0 0.0
    %1173 = vmatprep.subr.mxu0 0.0
    %1174 = vmatpush1.msra.mxu0 0.0
    %1175 = vmatprep.subr.mxu0 0.0
    %1176 = vmatpush1.msra.mxu0 0.0
    %1177 = vmatprep.subr.mxu0 0.0
    %1178 = vmatpush1.msra.mxu0 0.0
    %1179 = vmatprep.subr.mxu0 0.0
    %1180 = vmatpush1.msra.mxu0 0.0
    %1181 = vmatprep.subr.mxu0 0.0
    %1182 = vmatpush1.msra.mxu0 0.0
    %1183 = vmatprep.subr.mxu0 0.0
    %1184 = vmatpush1.msra.mxu0 0.0
    %1185 = vmatprep.subr.mxu0 0.0
    %1186 = vmatpush1.msra.mxu0 0.0
    %1187 = vmatprep.subr.mxu0 0.0
    %1188 = vmatpush1.msra.mxu0 0.0
    %1189 = vmatprep.subr.mxu0 0.0
    %1190 = vmatpush1.msra.mxu0 0.0
    %1191 = vmatprep.subr.mxu0 0.0
    %1192 = vmatpush1.msra.mxu0 0.0
    %1193 = vmatprep.subr.mxu0 0.0
    %1194 = vmatpush1.msra.mxu0 0.0
    %1195 = vmatprep.mubr.f32.mxu0 0.0
    %1196 = vmatmul.mubr.f32.gmra.mrb[0].mxu0 %v125
    %v1197 = vpop.f32.mrb[0].mxu0
    %v1198 = vadd.f32 0.0, %v1197
    %v1199 = vpop.f32.mrb[0].mxu0
    %1200 = vdwg.mxu0
    %s1201 = scalar_lea.vmem %s12, 32
    %v1202 = vld [vmem:[%s1201] sm:$0xff]
    %v1203 = vld [vmem:[%s1201 + $0x8] sm:$0xff]
    %v1204 = vld [vmem:[%s1201 + $0x10] sm:$0xff]
    %v1205 = vld [vmem:[%s1201 + $0x18] sm:$0xff]
    %1206 = vmatprep.subr.mxu0 0.0
    %1207 = vmatpush1.msra.mxu0 %v1202
    %1208 = vmatprep.subr.mxu0 0.0
    %1209 = vmatpush1.msra.mxu0 %v1203
    %1210 = vmatprep.subr.mxu0 0.0
    %1211 = vmatpush1.msra.mxu0 %v1204
    %1212 = vmatprep.subr.mxu0 0.0
    %1213 = vmatpush1.msra.mxu0 %v1205
    %1214 = vmatprep.subr.mxu0 0.0
    %1215 = vmatpush1.msra.mxu0 0.0
    %1216 = vmatprep.subr.mxu0 0.0
    %1217 = vmatpush1.msra.mxu0 0.0
    %1218 = vmatprep.subr.mxu0 0.0
    %1219 = vmatpush1.msra.mxu0 0.0
    %1220 = vmatprep.subr.mxu0 0.0
    %1221 = vmatpush1.msra.mxu0 0.0
    %1222 = vmatprep.subr.mxu0 0.0
    %1223 = vmatpush1.msra.mxu0 0.0
    %1224 = vmatprep.subr.mxu0 0.0
    %1225 = vmatpush1.msra.mxu0 0.0
    %1226 = vmatprep.subr.mxu0 0.0
    %1227 = vmatpush1.msra.mxu0 0.0
    %1228 = vmatprep.subr.mxu0 0.0
    %1229 = vmatpush1.msra.mxu0 0.0
    %1230 = vmatprep.subr.mxu0 0.0
    %1231 = vmatpush1.msra.mxu0 0.0
    %1232 = vmatprep.subr.mxu0 0.0
    %1233 = vmatpush1.msra.mxu0 0.0
    %1234 = vmatprep.subr.mxu0 0.0
    %1235 = vmatpush1.msra.mxu0 0.0
    %1236 = vmatprep.subr.mxu0 0.0
    %1237 = vmatpush1.msra.mxu0 0.0
    %1238 = vmatprep.subr.mxu0 0.0
    %1239 = vmatpush1.msra.mxu0 0.0
    %1240 = vmatprep.subr.mxu0 0.0
    %1241 = vmatpush1.msra.mxu0 0.0
    %1242 = vmatprep.subr.mxu0 0.0
    %1243 = vmatpush1.msra.mxu0 0.0
    %1244 = vmatprep.subr.mxu0 0.0
    %1245 = vmatpush1.msra.mxu0 0.0
    %1246 = vmatprep.subr.mxu0 0.0
    %1247 = vmatpush1.msra.mxu0 0.0
    %1248 = vmatprep.subr.mxu0 0.0
    %1249 = vmatpush1.msra.mxu0 0.0
    %1250 = vmatprep.subr.mxu0 0.0
    %1251 = vmatpush1.msra.mxu0 0.0
    %1252 = vmatprep.subr.mxu0 0.0
    %1253 = vmatpush1.msra.mxu0 0.0
    %1254 = vmatprep.subr.mxu0 0.0
    %1255 = vmatpush1.msra.mxu0 0.0
    %1256 = vmatprep.subr.mxu0 0.0
    %1257 = vmatpush1.msra.mxu0 0.0
    %1258 = vmatprep.subr.mxu0 0.0
    %1259 = vmatpush1.msra.mxu0 0.0
    %1260 = vmatprep.subr.mxu0 0.0
    %1261 = vmatpush1.msra.mxu0 0.0
    %1262 = vmatprep.subr.mxu0 0.0
    %1263 = vmatpush1.msra.mxu0 0.0
    %1264 = vmatprep.subr.mxu0 0.0
    %1265 = vmatpush1.msra.mxu0 0.0
    %1266 = vmatprep.subr.mxu0 0.0
    %1267 = vmatpush1.msra.mxu0 0.0
    %1268 = vmatprep.subr.mxu0 0.0
    %1269 = vmatpush1.msra.mxu0 0.0
    %1270 = vmatprep.mubr.f32.mxu0 0.0
    %1271 = vmatmul.mubr.f32.gmra.mrb[0].mxu0 %v125
    %v1272 = vpop.f32.mrb[0].mxu0
    %v1273 = vadd.f32 0.0, %v1272
    %v1274 = vpop.f32.mrb[0].mxu0
    %1275 = vdwg.mxu0
    %s1276 = scalar_lea.vmem %s13, 32
    %v1277 = vld [vmem:[%s1276] sm:$0xff]
    %v1278 = vld [vmem:[%s1276 + $0x8] sm:$0xff]
    %v1279 = vld [vmem:[%s1276 + $0x10] sm:$0xff]
    %v1280 = vld [vmem:[%s1276 + $0x18] sm:$0xff]
    %1281 = vmatprep.subr.mxu0 0.0
    %1282 = vmatpush1.msra.mxu0 %v1277
    %1283 = vmatprep.subr.mxu0 0.0
    %1284 = vmatpush1.msra.mxu0 %v1278
    %1285 = vmatprep.subr.mxu0 0.0
    %1286 = vmatpush1.msra.mxu0 %v1279
    %1287 = vmatprep.subr.mxu0 0.0
    %1288 = vmatpush1.msra.mxu0 %v1280
    %1289 = vmatprep.subr.mxu0 0.0
    %1290 = vmatpush1.msra.mxu0 0.0
    %1291 = vmatprep.subr.mxu0 0.0
    %1292 = vmatpush1.msra.mxu0 0.0
    %1293 = vmatprep.subr.mxu0 0.0
    %1294 = vmatpush1.msra.mxu0 0.0
    %1295 = vmatprep.subr.mxu0 0.0
    %1296 = vmatpush1.msra.mxu0 0.0
    %1297 = vmatprep.subr.mxu0 0.0
    %1298 = vmatpush1.msra.mxu0 0.0
    %1299 = vmatprep.subr.mxu0 0.0
    %1300 = vmatpush1.msra.mxu0 0.0
    %1301 = vmatprep.subr.mxu0 0.0
    %1302 = vmatpush1.msra.mxu0 0.0
    %1303 = vmatprep.subr.mxu0 0.0
    %1304 = vmatpush1.msra.mxu0 0.0
    %1305 = vmatprep.subr.mxu0 0.0
    %1306 = vmatpush1.msra.mxu0 0.0
    %1307 = vmatprep.subr.mxu0 0.0
    %1308 = vmatpush1.msra.mxu0 0.0
    %1309 = vmatprep.subr.mxu0 0.0
    %1310 = vmatpush1.msra.mxu0 0.0
    %1311 = vmatprep.subr.mxu0 0.0
    %1312 = vmatpush1.msra.mxu0 0.0
    %1313 = vmatprep.subr.mxu0 0.0
    %1314 = vmatpush1.msra.mxu0 0.0
    %1315 = vmatprep.subr.mxu0 0.0
    %1316 = vmatpush1.msra.mxu0 0.0
    %1317 = vmatprep.subr.mxu0 0.0
    %1318 = vmatpush1.msra.mxu0 0.0
    %1319 = vmatprep.subr.mxu0 0.0
    %1320 = vmatpush1.msra.mxu0 0.0
    %1321 = vmatprep.subr.mxu0 0.0
    %1322 = vmatpush1.msra.mxu0 0.0
    %1323 = vmatprep.subr.mxu0 0.0
    %1324 = vmatpush1.msra.mxu0 0.0
    %1325 = vmatprep.subr.mxu0 0.0
    %1326 = vmatpush1.msra.mxu0 0.0
    %1327 = vmatprep.subr.mxu0 0.0
    %1328 = vmatpush1.msra.mxu0 0.0
    %1329 = vmatprep.subr.mxu0 0.0
    %1330 = vmatpush1.msra.mxu0 0.0
    %1331 = vmatprep.subr.mxu0 0.0
    %1332 = vmatpush1.msra.mxu0 0.0
    %1333 = vmatprep.subr.mxu0 0.0
    %1334 = vmatpush1.msra.mxu0 0.0
    %1335 = vmatprep.subr.mxu0 0.0
    %1336 = vmatpush1.msra.mxu0 0.0
    %1337 = vmatprep.subr.mxu0 0.0
    %1338 = vmatpush1.msra.mxu0 0.0
    %1339 = vmatprep.subr.mxu0 0.0
    %1340 = vmatpush1.msra.mxu0 0.0
    %1341 = vmatprep.subr.mxu0 0.0
    %1342 = vmatpush1.msra.mxu0 0.0
    %1343 = vmatprep.subr.mxu0 0.0
    %1344 = vmatpush1.msra.mxu0 0.0
    %1345 = vmatprep.mubr.f32.mxu0 0.0
    %1346 = vmatmul.mubr.f32.gmra.mrb[0].mxu0 %v125
    %v1347 = vpop.f32.mrb[0].mxu0
    %v1348 = vadd.f32 0.0, %v1347
    %v1349 = vpop.f32.mrb[0].mxu0
    %1350 = vdwg.mxu0
    %v1351 = vmul.f32 %v1048, %v83
    %v1352 = vmul.f32 %v1123, %v82
    %v1353 = vadd.f32 %v1351, %v1352
    %v1354 = vmul.f32 %v1198, %v83
    %v1355 = vmul.f32 %v1273, %v82
    %v1356 = vadd.f32 %v1354, %v1355
    %v1358 = vsel %vm663, %v1353, 0
    %v1361 = vsel %vm663, %v1356, 0
    %1363 = vmatprep.subr.mxu0 0.0
    %1364 = vmatpush1.xpose.msra.mxu0 %v1361
    %1365 = vmatprep.subr.mxu0 0.0
    %1366 = vmatpush1.xpose.msra.mxu0 0.0
    %1367 = vmatprep.subr.mxu0 0.0
    %1368 = vmatpush1.xpose.msra.mxu0 0.0
    %1369 = vmatprep.subr.mxu0 0.0
    %1370 = vmatpush1.xpose.msra.mxu0 0.0
    %1371 = vmatprep.subr.mxu0 0.0
    %1372 = vmatpush1.xpose.msra.mxu0 0.0
    %1373 = vmatprep.subr.mxu0 0.0
    %1374 = vmatpush1.xpose.msra.mxu0 0.0
    %1375 = vmatprep.subr.mxu0 0.0
    %1376 = vmatpush1.xpose.msra.mxu0 0.0
    %1377 = vmatprep.subr.mxu0 0.0
    %1378 = vmatpush1.xpose.msra.mxu0 0.0
    %1379 = vmatprep.subr.mxu0 0.0
    %1380 = vmatpush1.xpose.msra.mxu0 0.0
    %1381 = vmatprep.subr.mxu0 0.0
    %1382 = vmatpush1.xpose.msra.mxu0 0.0
    %1383 = vmatprep.subr.mxu0 0.0
    %1384 = vmatpush1.xpose.msra.mxu0 0.0
    %1385 = vmatprep.subr.mxu0 0.0
    %1386 = vmatpush1.xpose.msra.mxu0 0.0
    %1387 = vmatprep.subr.mxu0 0.0
    %1388 = vmatpush1.xpose.msra.mxu0 0.0
    %1389 = vmatprep.subr.mxu0 0.0
    %1390 = vmatpush1.xpose.msra.mxu0 0.0
    %1391 = vmatprep.subr.mxu0 0.0
    %1392 = vmatpush1.xpose.msra.mxu0 0.0
    %1393 = vmatprep.subr.mxu0 0.0
    %1394 = vmatpush1.xpose.msra.mxu0 0.0
    %1395 = vmatprep.subr.mxu0 0.0
    %1396 = vmatpush1.xpose.msra.mxu0 0.0
    %1397 = vmatprep.subr.mxu0 0.0
    %1398 = vmatpush1.xpose.msra.mxu0 0.0
    %1399 = vmatprep.subr.mxu0 0.0
    %1400 = vmatpush1.xpose.msra.mxu0 0.0
    %1401 = vmatprep.subr.mxu0 0.0
    %1402 = vmatpush1.xpose.msra.mxu0 0.0
    %1403 = vmatprep.subr.mxu0 0.0
    %1404 = vmatpush1.xpose.msra.mxu0 0.0
    %1405 = vmatprep.subr.mxu0 0.0
    %1406 = vmatpush1.xpose.msra.mxu0 0.0
    %1407 = vmatprep.subr.mxu0 0.0
    %1408 = vmatpush1.xpose.msra.mxu0 0.0
    %1409 = vmatprep.subr.mxu0 0.0
    %1410 = vmatpush1.xpose.msra.mxu0 0.0
    %1411 = vmatprep.subr.mxu0 0.0
    %1412 = vmatpush1.xpose.msra.mxu0 0.0
    %1413 = vmatprep.subr.mxu0 0.0
    %1414 = vmatpush1.xpose.msra.mxu0 0.0
    %1415 = vmatprep.subr.mxu0 0.0
    %1416 = vmatpush1.xpose.msra.mxu0 0.0
    %1417 = vmatprep.subr.mxu0 0.0
    %1418 = vmatpush1.xpose.msra.mxu0 0.0
    %1419 = vmatprep.subr.mxu0 0.0
    %1420 = vmatpush1.xpose.msra.mxu0 0.0
    %1421 = vmatprep.subr.mxu0 0.0
    %1422 = vmatpush1.xpose.msra.mxu0 0.0
    %1423 = vmatprep.subr.mxu0 0.0
    %1424 = vmatpush1.xpose.msra.mxu0 0.0
    %1425 = vmatprep.subr.mxu0 0.0
    %1426 = vmatpush1.xpose.msra.mxu0 0.0
    %1427 = vmatprep.mubr.f32.mxu0 0.0
    %1428 = vmatmul.mubr.f32.gmra.mrb[0].mxu0 %v1358
    %v1429 = vpop.f32.mrb[0].mxu0
    %v1430 = vadd.f32 0.0, %v1429
    %v1431 = vpop.f32.mrb[0].mxu0
    %1432 = vdwg.mxu0
    %v1433 = vmul.f32 %v1430, 0.25
    %v1434 = vadd.f32 %v1433, %v79
    %v1435 = vsel %vm742, %v1434, -inf
    %1436 = vmax.xlane.f32.xlu0 %v1435
    %v1437 = vpop.xlane.xlu0 %1436
    %v1438 = vsub.f32 %v1434, %v1437
    %v1439 = vmul.f32 %v1438, 1.442695
    %v1440 = vpow.pop %v1439
    %v1441 = vsel %vm742, %v1440, 0.0
    %1442 = vadd.xlane.f32.xlu0 %v1441
    %v1443 = vpop.xlane.xlu0 %1442
    %v1444 = vrcp.pop %v1443
    %v1445 = vmul.f32 %v1440, %v1444
    %v1447 = vsel %vm742, %v1445, 0
    %1449 = vmatprep.subr.mxu0 0.0
    %1450 = vmatpush1.msra.mxu0 %v1348
    %1451 = vmatprep.subr.mxu0 0.0
    %1452 = vmatpush1.msra.mxu0 0.0
    %1453 = vmatprep.subr.mxu0 0.0
    %1454 = vmatpush1.msra.mxu0 0.0
    %1455 = vmatprep.subr.mxu0 0.0
    %1456 = vmatpush1.msra.mxu0 0.0
    %1457 = vmatprep.subr.mxu0 0.0
    %1458 = vmatpush1.msra.mxu0 0.0
    %1459 = vmatprep.subr.mxu0 0.0
    %1460 = vmatpush1.msra.mxu0 0.0
    %1461 = vmatprep.subr.mxu0 0.0
    %1462 = vmatpush1.msra.mxu0 0.0
    %1463 = vmatprep.subr.mxu0 0.0
    %1464 = vmatpush1.msra.mxu0 0.0
    %1465 = vmatprep.subr.mxu0 0.0
    %1466 = vmatpush1.msra.mxu0 0.0
    %1467 = vmatprep.subr.mxu0 0.0
    %1468 = vmatpush1.msra.mxu0 0.0
    %1469 = vmatprep.subr.mxu0 0.0
    %1470 = vmatpush1.msra.mxu0 0.0
    %1471 = vmatprep.subr.mxu0 0.0
    %1472 = vmatpush1.msra.mxu0 0.0
    %1473 = vmatprep.subr.mxu0 0.0
    %1474 = vmatpush1.msra.mxu0 0.0
    %1475 = vmatprep.subr.mxu0 0.0
    %1476 = vmatpush1.msra.mxu0 0.0
    %1477 = vmatprep.subr.mxu0 0.0
    %1478 = vmatpush1.msra.mxu0 0.0
    %1479 = vmatprep.subr.mxu0 0.0
    %1480 = vmatpush1.msra.mxu0 0.0
    %1481 = vmatprep.subr.mxu0 0.0
    %1482 = vmatpush1.msra.mxu0 0.0
    %1483 = vmatprep.subr.mxu0 0.0
    %1484 = vmatpush1.msra.mxu0 0.0
    %1485 = vmatprep.subr.mxu0 0.0
    %1486 = vmatpush1.msra.mxu0 0.0
    %1487 = vmatprep.subr.mxu0 0.0
    %1488 = vmatpush1.msra.mxu0 0.0
    %1489 = vmatprep.subr.mxu0 0.0
    %1490 = vmatpush1.msra.mxu0 0.0
    %1491 = vmatprep.subr.mxu0 0.0
    %1492 = vmatpush1.msra.mxu0 0.0
    %1493 = vmatprep.subr.mxu0 0.0
    %1494 = vmatpush1.msra.mxu0 0.0
    %1495 = vmatprep.subr.mxu0 0.0
    %1496 = vmatpush1.msra.mxu0 0.0
    %1497 = vmatprep.subr.mxu0 0.0
    %1498 = vmatpush1.msra.mxu0 0.0
    %1499 = vmatprep.subr.mxu0 0.0
    %1500 = vmatpush1.msra.mxu0 0.0
    %1501 = vmatprep.subr.mxu0 0.0
    %1502 = vmatpush1.msra.mxu0 0.0
    %1503 = vmatprep.subr.mxu0 0.0
    %1504 = vmatpush1.msra.mxu0 0.0
    %1505 = vmatprep.subr.mxu0 0.0
    %1506 = vmatpush1.msra.mxu0 0.0
    %1507 = vmatprep.subr.mxu0 0.0
    %1508 = vmatpush1.msra.mxu0 0.0
    %1509 = vmatprep.subr.mxu0 0.0
    %1510 = vmatpush1.msra.mxu0 0.0
    %1511 = vmatprep.subr.mxu0 0.0
    %1512 = vmatpush1.msra.mxu0 0.0
    %1513 = vmatprep.mubr.f32.mxu0 0.0
    %1514 = vmatmul.mubr.f32.gmra.mrb[0].mxu0 %v1447
    %v1515 = vpop.f32.mrb[0].mxu0
    %v1516 = vadd.f32 0.0, %v1515
    %v1517 = vpop.f32.mrb[0].mxu0
    %1518 = vdwg.mxu0
    %s1519 = scalar_lea.vmem %s16, 16
    %v1520 = vld [vmem:[%s1519] sm:$0xff]
    %v1521 = vld [vmem:[%s1519 + $0x8] sm:$0xff]
    %v1523 = vsel %vm663, %v1516, 0
    %1525 = vmatprep.subr.mxu0 0.0
    %1526 = vmatpush1.msra.mxu0 %v1520
    %1527 = vmatprep.subr.mxu0 0.0
    %1528 = vmatpush1.msra.mxu0 %v1521
    %1529 = vmatprep.subr.mxu0 0.0
    %1530 = vmatpush1.msra.mxu0 0.0
    %1531 = vmatprep.subr.mxu0 0.0
    %1532 = vmatpush1.msra.mxu0 0.0
    %1533 = vmatprep.subr.mxu0 0.0
    %1534 = vmatpush1.msra.mxu0 0.0
    %1535 = vmatprep.subr.mxu0 0.0
    %1536 = vmatpush1.msra.mxu0 0.0
    %1537 = vmatprep.subr.mxu0 0.0
    %1538 = vmatpush1.msra.mxu0 0.0
    %1539 = vmatprep.subr.mxu0 0.0
    %1540 = vmatpush1.msra.mxu0 0.0
    %1541 = vmatprep.subr.mxu0 0.0
    %1542 = vmatpush1.msra.mxu0 0.0
    %1543 = vmatprep.subr.mxu0 0.0
    %1544 = vmatpush1.msra.mxu0 0.0
    %1545 = vmatprep.subr.mxu0 0.0
    %1546 = vmatpush1.msra.mxu0 0.0
    %1547 = vmatprep.subr.mxu0 0.0
    %1548 = vmatpush1.msra.mxu0 0.0
    %1549 = vmatprep.subr.mxu0 0.0
    %1550 = vmatpush1.msra.mxu0 0.0
    %1551 = vmatprep.subr.mxu0 0.0
    %1552 = vmatpush1.msra.mxu0 0.0
    %1553 = vmatprep.subr.mxu0 0.0
    %1554 = vmatpush1.msra.mxu0 0.0
    %1555 = vmatprep.subr.mxu0 0.0
    %1556 = vmatpush1.msra.mxu0 0.0
    %1557 = vmatprep.subr.mxu0 0.0
    %1558 = vmatpush1.msra.mxu0 0.0
    %1559 = vmatprep.subr.mxu0 0.0
    %1560 = vmatpush1.msra.mxu0 0.0
    %1561 = vmatprep.subr.mxu0 0.0
    %1562 = vmatpush1.msra.mxu0 0.0
    %1563 = vmatprep.subr.mxu0 0.0
    %1564 = vmatpush1.msra.mxu0 0.0
    %1565 = vmatprep.subr.mxu0 0.0
    %1566 = vmatpush1.msra.mxu0 0.0
    %1567 = vmatprep.subr.mxu0 0.0
    %1568 = vmatpush1.msra.mxu0 0.0
    %1569 = vmatprep.subr.mxu0 0.0
    %1570 = vmatpush1.msra.mxu0 0.0
    %1571 = vmatprep.subr.mxu0 0.0
    %1572 = vmatpush1.msra.mxu0 0.0
    %1573 = vmatprep.subr.mxu0 0.0
    %1574 = vmatpush1.msra.mxu0 0.0
    %1575 = vmatprep.subr.mxu0 0.0
    %1576 = vmatpush1.msra.mxu0 0.0
    %1577 = vmatprep.subr.mxu0 0.0
    %1578 = vmatpush1.msra.mxu0 0.0
    %1579 = vmatprep.subr.mxu0 0.0
    %1580 = vmatpush1.msra.mxu0 0.0
    %1581 = vmatprep.subr.mxu0 0.0
    %1582 = vmatpush1.msra.mxu0 0.0
    %1583 = vmatprep.subr.mxu0 0.0
    %1584 = vmatpush1.msra.mxu0 0.0
    %1585 = vmatprep.subr.mxu0 0.0
    %1586 = vmatpush1.msra.mxu0 0.0
    %1587 = vmatprep.subr.mxu0 0.0
    %1588 = vmatpush1.msra.mxu0 0.0
    %1589 = vmatprep.mubr.f32.mxu0 0.0
    %1590 = vmatmul.mubr.f32.gmra.mrb[0].mxu0 %v1523
    %v1591 = vpop.f32.mrb[0].mxu0
    %v1592 = vadd.f32 0.0, %v1591
    %v1593 = vpop.f32.mrb[0].mxu0
    %1594 = vdwg.mxu0
    %v1595 = vadd.f32 %v973, %v1592
    %v1596 = vadd.f32 %v102, %v1595
    %s1597 = scalar_lea.vmem %s8, 1
    %v1598 = vld [vmem:[%s1597] sm:$0x1]
    %v1599 = vmul.f32 %v1596, %v1596
    %v1600 = vsel %vm87, %v1599, 0.0
    %1601 = vadd.xlane.f32.xlu0 %v1600
    %v1602 = vpop.xlane.xlu0 %1601
    %v1603 = vmul.f32 %v1602, %v91
    %v1604 = vadd.f32 %v1603, 1e-06
    %v1605 = vrsqrt.pop %v1604
    %v1606 = vmul.f32 %v1596, %v1605
    %v1608 = vlaneseq
    %v1609 = vshrl.u32 %v1608, 7
    %v1610 = vsub.s32 0, %v1609
    %v1611 = vrot.slane %v1598, %v1610
    %v1613 = vmul.f32 %v1606, %v1611
    %v1614 = vsel %vm80, %v81, %v1613
    %s1615 = scalar_lea.vmem %s14, 32
    %v1616 = vld [vmem:[%s1615] sm:$0xff]
    %v1617 = vld [vmem:[%s1615 + $0x8] sm:$0xff]
    %v1618 = vld [vmem:[%s1615 + $0x10] sm:$0xff]
    %v1619 = vld [vmem:[%s1615 + $0x18] sm:$0xff]
    %v1621 = vsel %vm87, %v1614, 0
    %1623 = vmatprep.subr.mxu0 0.0
    %1624 = vmatpush1.msra.mxu0 %v1616
    %1625 = vmatprep.subr.mxu0 0.0
    %1626 = vmatpush1.msra.mxu0 %v1617
    %1627 = vmatprep.subr.mxu0 0.0
    %1628 = vmatpush1.msra.mxu0 %v1618
    %1629 = vmatprep.subr.mxu0 0.0
    %1630 = vmatpush1.msra.mxu0 %v1619
    %1631 = vmatprep.subr.mxu0 0.0
    %1632 = vmatpush1.msra.mxu0 0.0
    %1633 = vmatprep.subr.mxu0 0.0
    %1634 = vmatpush1.msra.mxu0 0.0
    %1635 = vmatprep.subr.mxu0 0.0
    %1636 = vmatpush1.msra.mxu0 0.0
    %1637 = vmatprep.subr.mxu0 0.0
    %1638 = vmatpush1.msra.mxu0 0.0
    %1639 = vmatprep.subr.mxu0 0.0
    %1640 = vmatpush1.msra.mxu0 0.0
    %1641 = vmatprep.subr.mxu0 0.0
    %1642 = vmatpush1.msra.mxu0 0.0
    %1643 = vmatprep.subr.mxu0 0.0
    %1644 = vmatpush1.msra.mxu0 0.0
    %1645 = vmatprep.subr.mxu0 0.0
    %1646 = vmatpush1.msra.mxu0 0.0
    %1647 = vmatprep.subr.mxu0 0.0
    %1648 = vmatpush1.msra.mxu0 0.0
    %1649 = vmatprep.subr.mxu0 0.0
    %1650 = vmatpush1.msra.mxu0 0.0
    %1651 = vmatprep.subr.mxu0 0.0
    %1652 = vmatpush1.msra.mxu0 0.0
    %1653 = vmatprep.subr.mxu0 0.0
    %1654 = vmatpush1.msra.mxu0 0.0
    %1655 = vmatprep.subr.mxu0 0.0
    %1656 = vmatpush1.msra.mxu0 0.0
    %1657 = vmatprep.subr.mxu0 0.0
    %1658 = vmatpush1.msra.mxu0 0.0
    %1659 = vmatprep.subr.mxu0 0.0
    %1660 = vmatpush1.msra.mxu0 0.0
    %1661 = vmatprep.subr.mxu0 0.0
    %1662 = vmatpush1.msra.mxu0 0.0
    %1663 = vmatprep.subr.mxu0 0.0
    %1664 = vmatpush1.msra.mxu0 0.0
    %1665 = vmatprep.subr.mxu0 0.0
    %1666 = vmatpush1.msra.mxu0 0.0
    %1667 = vmatprep.subr.mxu0 0.0
    %1668 = vmatpush1.msra.mxu0 0.0
    %1669 = vmatprep.subr.mxu0 0.0
    %1670 = vmatpush1.msra.mxu0 0.0
    %1671 = vmatprep.subr.mxu0 0.0
    %1672 = vmatpush1.msra.mxu0 0.0
    %1673 = vmatprep.subr.mxu0 0.0
    %1674 = vmatpush1.msra.mxu0 0.0
    %1675 = vmatprep.subr.mxu0 0.0
    %1676 = vmatpush1.msra.mxu0 0.0
    %1677 = vmatprep.subr.mxu0 0.0
    %1678 = vmatpush1.msra.mxu0 0.0
    %1679 = vmatprep.subr.mxu0 0.0
    %1680 = vmatpush1.msra.mxu0 0.0
    %1681 = vmatprep.subr.mxu0 0.0
    %1682 = vmatpush1.msra.mxu0 0.0
    %1683 = vmatprep.subr.mxu0 0.0
    %1684 = vmatpush1.msra.mxu0 0.0
    %1685 = vmatprep.subr.mxu0 0.0
    %1686 = vmatpush1.msra.mxu0 0.0
    %1687 = vmatprep.mubr.f32.mxu0 0.0
    %1688 = vmatmul.mubr.f32.gmra.mrb[0].mxu0 %v1621
    %v1689 = vpop.f32.mrb[0].mxu0
    %v1690 = vadd.f32 0.0, %v1689
    %v1691 = vpop.f32.mrb[0].mxu0
    %1692 = vdwg.mxu0
    %s1693 = scalar_lea.vmem %s15, 32
    %v1694 = vld [vmem:[%s1693] sm:$0xff]
    %v1695 = vld [vmem:[%s1693 + $0x8] sm:$0xff]
    %v1696 = vld [vmem:[%s1693 + $0x10] sm:$0xff]
    %v1697 = vld [vmem:[%s1693 + $0x18] sm:$0xff]
    %1698 = vmatprep.subr.mxu0 0.0
    %1699 = vmatpush1.msra.mxu0 %v1694
    %1700 = vmatprep.subr.mxu0 0.0
    %1701 = vmatpush1.msra.mxu0 %v1695
    %1702 = vmatprep.subr.mxu0 0.0
    %1703 = vmatpush1.msra.mxu0 %v1696
    %1704 = vmatprep.subr.mxu0 0.0
    %1705 = vmatpush1.msra.mxu0 %v1697
    %1706 = vmatprep.subr.mxu0 0.0
    %1707 = vmatpush1.msra.mxu0 0.0
    %1708 = vmatprep.subr.mxu0 0.0
    %1709 = vmatpush1.msra.mxu0 0.0
    %1710 = vmatprep.subr.mxu0 0.0
    %1711 = vmatpush1.msra.mxu0 0.0
    %1712 = vmatprep.subr.mxu0 0.0
    %1713 = vmatpush1.msra.mxu0 0.0
    %1714 = vmatprep.subr.mxu0 0.0
    %1715 = vmatpush1.msra.mxu0 0.0
    %1716 = vmatprep.subr.mxu0 0.0
    %1717 = vmatpush1.msra.mxu0 0.0
    %1718 = vmatprep.subr.mxu0 0.0
    %1719 = vmatpush1.msra.mxu0 0.0
    %1720 = vmatprep.subr.mxu0 0.0
    %1721 = vmatpush1.msra.mxu0 0.0
    %1722 = vmatprep.subr.mxu0 0.0
    %1723 = vmatpush1.msra.mxu0 0.0
    %1724 = vmatprep.subr.mxu0 0.0
    %1725 = vmatpush1.msra.mxu0 0.0
    %1726 = vmatprep.subr.mxu0 0.0
    %1727 = vmatpush1.msra.mxu0 0.0
    %1728 = vmatprep.subr.mxu0 0.0
    %1729 = vmatpush1.msra.mxu0 0.0
    %1730 = vmatprep.subr.mxu0 0.0
    %1731 = vmatpush1.msra.mxu0 0.0
    %1732 = vmatprep.subr.mxu0 0.0
    %1733 = vmatpush1.msra.mxu0 0.0
    %1734 = vmatprep.subr.mxu0 0.0
    %1735 = vmatpush1.msra.mxu0 0.0
    %1736 = vmatprep.subr.mxu0 0.0
    %1737 = vmatpush1.msra.mxu0 0.0
    %1738 = vmatprep.subr.mxu0 0.0
    %1739 = vmatpush1.msra.mxu0 0.0
    %1740 = vmatprep.subr.mxu0 0.0
    %1741 = vmatpush1.msra.mxu0 0.0
    %1742 = vmatprep.subr.mxu0 0.0
    %1743 = vmatpush1.msra.mxu0 0.0
    %1744 = vmatprep.subr.mxu0 0.0
    %1745 = vmatpush1.msra.mxu0 0.0
    %1746 = vmatprep.subr.mxu0 0.0
    %1747 = vmatpush1.msra.mxu0 0.0
    %1748 = vmatprep.subr.mxu0 0.0
    %1749 = vmatpush1.msra.mxu0 0.0
    %1750 = vmatprep.subr.mxu0 0.0
    %1751 = vmatpush1.msra.mxu0 0.0
    %1752 = vmatprep.subr.mxu0 0.0
    %1753 = vmatpush1.msra.mxu0 0.0
    %1754 = vmatprep.subr.mxu0 0.0
    %1755 = vmatpush1.msra.mxu0 0.0
    %1756 = vmatprep.subr.mxu0 0.0
    %1757 = vmatpush1.msra.mxu0 0.0
    %1758 = vmatprep.subr.mxu0 0.0
    %1759 = vmatpush1.msra.mxu0 0.0
    %1760 = vmatprep.subr.mxu0 0.0
    %1761 = vmatpush1.msra.mxu0 0.0
    %1762 = vmatprep.mubr.f32.mxu0 0.0
    %1763 = vmatmul.mubr.f32.gmra.mrb[0].mxu0 %v1621
    %v1764 = vpop.f32.mrb[0].mxu0
    %v1765 = vadd.f32 0.0, %v1764
    %v1766 = vpop.f32.mrb[0].mxu0
    %1767 = vdwg.mxu0
    %v1768 = vxor.u32 %v1690, 2147483648
    %v1769 = vmul.f32 %v1768, 1.442695
    %v1770 = vpow.pop %v1769
    %v1771 = vadd.f32 %v1770, 1.0
    %v1772 = vrcp.pop %v1771
    %v1773 = vmul.f32 1.0, %v1772
    %v1774 = vmul.f32 %v1690, %v1773
    %v1775 = vmul.f32 %v1774, %v1765
    %s1776 = scalar_lea.vmem %s17, 64
    %v1777 = vld [vmem:[%s1776] sm:$0xff]
    %v1778 = vld [vmem:[%s1776 + $0x8] sm:$0xff]
    %v1779 = vld [vmem:[%s1776 + $0x10] sm:$0xff]
    %v1780 = vld [vmem:[%s1776 + $0x18] sm:$0xff]
    %v1781 = vld [vmem:[%s1776 + $0x20] sm:$0xff]
    %v1782 = vld [vmem:[%s1776 + $0x28] sm:$0xff]
    %v1783 = vld [vmem:[%s1776 + $0x30] sm:$0xff]
    %v1784 = vld [vmem:[%s1776 + $0x38] sm:$0xff]
    %s1785 = scalar_lea.vmem %s9, 64
    %v1786 = vld [vmem:[%s1785] sm:$0xff]
    %v1787 = vld [vmem:[%s1785 + $0x8] sm:$0xff]
    %v1788 = vld [vmem:[%s1785 + $0x10] sm:$0xff]
    %v1789 = vld [vmem:[%s1785 + $0x18] sm:$0xff]
    %1790 = vmatprep.subr.mxu0 0.0
    %1791 = vmatpush1.msra.mxu0 %v1786
    %1792 = vmatprep.subr.mxu0 0.0
    %1793 = vmatpush1.msra.mxu0 %v1787
    %1794 = vmatprep.subr.mxu0 0.0
    %1795 = vmatpush1.msra.mxu0 %v1788
    %1796 = vmatprep.subr.mxu0 0.0
    %1797 = vmatpush1.msra.mxu0 %v1789
    %1798 = vmatprep.subr.mxu0 0.0
    %1799 = vmatpush1.msra.mxu0 0.0
    %1800 = vmatprep.subr.mxu0 0.0
    %1801 = vmatpush1.msra.mxu0 0.0
    %1802 = vmatprep.subr.mxu0 0.0
    %1803 = vmatpush1.msra.mxu0 0.0
    %1804 = vmatprep.subr.mxu0 0.0
    %1805 = vmatpush1.msra.mxu0 0.0
    %1806 = vmatprep.subr.mxu0 0.0
    %1807 = vmatpush1.msra.mxu0 0.0
    %1808 = vmatprep.subr.mxu0 0.0
    %1809 = vmatpush1.msra.mxu0 0.0
    %1810 = vmatprep.subr.mxu0 0.0
    %1811 = vmatpush1.msra.mxu0 0.0
    %1812 = vmatprep.subr.mxu0 0.0
    %1813 = vmatpush1.msra.mxu0 0.0
    %1814 = vmatprep.subr.mxu0 0.0
    %1815 = vmatpush1.msra.mxu0 0.0
    %1816 = vmatprep.subr.mxu0 0.0
    %1817 = vmatpush1.msra.mxu0 0.0
    %1818 = vmatprep.subr.mxu0 0.0
    %1819 = vmatpush1.msra.mxu0 0.0
    %1820 = vmatprep.subr.mxu0 0.0
    %1821 = vmatpush1.msra.mxu0 0.0
    %1822 = vmatprep.subr.mxu0 0.0
    %1823 = vmatpush1.msra.mxu0 0.0
    %1824 = vmatprep.subr.mxu0 0.0
    %1825 = vmatpush1.msra.mxu0 0.0
    %1826 = vmatprep.subr.mxu0 0.0
    %1827 = vmatpush1.msra.mxu0 0.0
    %1828 = vmatprep.subr.mxu0 0.0
    %1829 = vmatpush1.msra.mxu0 0.0
    %1830 = vmatprep.subr.mxu0 0.0
    %1831 = vmatpush1.msra.mxu0 0.0
    %1832 = vmatprep.subr.mxu0 0.0
    %1833 = vmatpush1.msra.mxu0 0.0
    %1834 = vmatprep.subr.mxu0 0.0
    %1835 = vmatpush1.msra.mxu0 0.0
    %1836 = vmatprep.subr.mxu0 0.0
    %1837 = vmatpush1.msra.mxu0 0.0
    %1838 = vmatprep.subr.mxu0 0.0
    %1839 = vmatpush1.msra.mxu0 0.0
    %1840 = vmatprep.subr.mxu0 0.0
    %1841 = vmatpush1.msra.mxu0 0.0
    %1842 = vmatprep.subr.mxu0 0.0
    %1843 = vmatpush1.msra.mxu0 0.0
    %1844 = vmatprep.subr.mxu0 0.0
    %1845 = vmatpush1.msra.mxu0 0.0
    %1846 = vmatprep.subr.mxu0 0.0
    %1847 = vmatpush1.msra.mxu0 0.0
    %1848 = vmatprep.subr.mxu0 0.0
    %1849 = vmatpush1.msra.mxu0 0.0
    %1850 = vmatprep.subr.mxu0 0.0
    %1851 = vmatpush1.msra.mxu0 0.0
    %1852 = vmatprep.subr.mxu0 0.0
    %1853 = vmatpush1.msra.mxu0 0.0
    %1854 = vmatprep.mubr.f32.mxu0 0.0
    %1855 = vmatmul.mubr.f32.gmra.mrb[0].mxu0 %v1621
    %v1856 = vpop.f32.mrb[0].mxu0
    %v1857 = vadd.f32 0.0, %v1856
    %v1858 = vpop.f32.mrb[0].mxu0
    %1859 = vdwg.mxu0
    %s1860 = scalar_lea.vmem %s10, 64
    %v1861 = vld [vmem:[%s1860] sm:$0xff]
    %v1862 = vld [vmem:[%s1860 + $0x8] sm:$0xff]
    %v1863 = vld [vmem:[%s1860 + $0x10] sm:$0xff]
    %v1864 = vld [vmem:[%s1860 + $0x18] sm:$0xff]
    %1865 = vmatprep.subr.mxu0 0.0
    %1866 = vmatpush1.msra.mxu0 %v1861
    %1867 = vmatprep.subr.mxu0 0.0
    %1868 = vmatpush1.msra.mxu0 %v1862
    %1869 = vmatprep.subr.mxu0 0.0
    %1870 = vmatpush1.msra.mxu0 %v1863
    %1871 = vmatprep.subr.mxu0 0.0
    %1872 = vmatpush1.msra.mxu0 %v1864
    %1873 = vmatprep.subr.mxu0 0.0
    %1874 = vmatpush1.msra.mxu0 0.0
    %1875 = vmatprep.subr.mxu0 0.0
    %1876 = vmatpush1.msra.mxu0 0.0
    %1877 = vmatprep.subr.mxu0 0.0
    %1878 = vmatpush1.msra.mxu0 0.0
    %1879 = vmatprep.subr.mxu0 0.0
    %1880 = vmatpush1.msra.mxu0 0.0
    %1881 = vmatprep.subr.mxu0 0.0
    %1882 = vmatpush1.msra.mxu0 0.0
    %1883 = vmatprep.subr.mxu0 0.0
    %1884 = vmatpush1.msra.mxu0 0.0
    %1885 = vmatprep.subr.mxu0 0.0
    %1886 = vmatpush1.msra.mxu0 0.0
    %1887 = vmatprep.subr.mxu0 0.0
    %1888 = vmatpush1.msra.mxu0 0.0
    %1889 = vmatprep.subr.mxu0 0.0
    %1890 = vmatpush1.msra.mxu0 0.0
    %1891 = vmatprep.subr.mxu0 0.0
    %1892 = vmatpush1.msra.mxu0 0.0
    %1893 = vmatprep.subr.mxu0 0.0
    %1894 = vmatpush1.msra.mxu0 0.0
    %1895 = vmatprep.subr.mxu0 0.0
    %1896 = vmatpush1.msra.mxu0 0.0
    %1897 = vmatprep.subr.mxu0 0.0
    %1898 = vmatpush1.msra.mxu0 0.0
    %1899 = vmatprep.subr.mxu0 0.0
    %1900 = vmatpush1.msra.mxu0 0.0
    %1901 = vmatprep.subr.mxu0 0.0
    %1902 = vmatpush1.msra.mxu0 0.0
    %1903 = vmatprep.subr.mxu0 0.0
    %1904 = vmatpush1.msra.mxu0 0.0
    %1905 = vmatprep.subr.mxu0 0.0
    %1906 = vmatpush1.msra.mxu0 0.0
    %1907 = vmatprep.subr.mxu0 0.0
    %1908 = vmatpush1.msra.mxu0 0.0
    %1909 = vmatprep.subr.mxu0 0.0
    %1910 = vmatpush1.msra.mxu0 0.0
    %1911 = vmatprep.subr.mxu0 0.0
    %1912 = vmatpush1.msra.mxu0 0.0
    %1913 = vmatprep.subr.mxu0 0.0
    %1914 = vmatpush1.msra.mxu0 0.0
    %1915 = vmatprep.subr.mxu0 0.0
    %1916 = vmatpush1.msra.mxu0 0.0
    %1917 = vmatprep.subr.mxu0 0.0
    %1918 = vmatpush1.msra.mxu0 0.0
    %1919 = vmatprep.subr.mxu0 0.0
    %1920 = vmatpush1.msra.mxu0 0.0
    %1921 = vmatprep.subr.mxu0 0.0
    %1922 = vmatpush1.msra.mxu0 0.0
    %1923 = vmatprep.subr.mxu0 0.0
    %1924 = vmatpush1.msra.mxu0 0.0
    %1925 = vmatprep.subr.mxu0 0.0
    %1926 = vmatpush1.msra.mxu0 0.0
    %1927 = vmatprep.subr.mxu0 0.0
    %1928 = vmatpush1.msra.mxu0 0.0
    %1929 = vmatprep.mubr.f32.mxu0 0.0
    %1930 = vmatmul.mubr.f32.gmra.mrb[0].mxu0 %v1621
    %v1931 = vpop.f32.mrb[0].mxu0
    %v1932 = vadd.f32 0.0, %v1931
    %v1933 = vpop.f32.mrb[0].mxu0
    %1934 = vdwg.mxu0
    %s1935 = scalar_lea.vmem %s11, 64
    %v1936 = vld [vmem:[%s1935] sm:$0xff]
    %v1937 = vld [vmem:[%s1935 + $0x8] sm:$0xff]
    %v1938 = vld [vmem:[%s1935 + $0x10] sm:$0xff]
    %v1939 = vld [vmem:[%s1935 + $0x18] sm:$0xff]
    %1940 = vmatprep.subr.mxu0 0.0
    %1941 = vmatpush1.msra.mxu0 %v1936
    %1942 = vmatprep.subr.mxu0 0.0
    %1943 = vmatpush1.msra.mxu0 %v1937
    %1944 = vmatprep.subr.mxu0 0.0
    %1945 = vmatpush1.msra.mxu0 %v1938
    %1946 = vmatprep.subr.mxu0 0.0
    %1947 = vmatpush1.msra.mxu0 %v1939
    %1948 = vmatprep.subr.mxu0 0.0
    %1949 = vmatpush1.msra.mxu0 0.0
    %1950 = vmatprep.subr.mxu0 0.0
    %1951 = vmatpush1.msra.mxu0 0.0
    %1952 = vmatprep.subr.mxu0 0.0
    %1953 = vmatpush1.msra.mxu0 0.0
    %1954 = vmatprep.subr.mxu0 0.0
    %1955 = vmatpush1.msra.mxu0 0.0
    %1956 = vmatprep.subr.mxu0 0.0
    %1957 = vmatpush1.msra.mxu0 0.0
    %1958 = vmatprep.subr.mxu0 0.0
    %1959 = vmatpush1.msra.mxu0 0.0
    %1960 = vmatprep.subr.mxu0 0.0
    %1961 = vmatpush1.msra.mxu0 0.0
    %1962 = vmatprep.subr.mxu0 0.0
    %1963 = vmatpush1.msra.mxu0 0.0
    %1964 = vmatprep.subr.mxu0 0.0
    %1965 = vmatpush1.msra.mxu0 0.0
    %1966 = vmatprep.subr.mxu0 0.0
    %1967 = vmatpush1.msra.mxu0 0.0
    %1968 = vmatprep.subr.mxu0 0.0
    %1969 = vmatpush1.msra.mxu0 0.0
    %1970 = vmatprep.subr.mxu0 0.0
    %1971 = vmatpush1.msra.mxu0 0.0
    %1972 = vmatprep.subr.mxu0 0.0
    %1973 = vmatpush1.msra.mxu0 0.0
    %1974 = vmatprep.subr.mxu0 0.0
    %1975 = vmatpush1.msra.mxu0 0.0
    %1976 = vmatprep.subr.mxu0 0.0
    %1977 = vmatpush1.msra.mxu0 0.0
    %1978 = vmatprep.subr.mxu0 0.0
    %1979 = vmatpush1.msra.mxu0 0.0
    %1980 = vmatprep.subr.mxu0 0.0
    %1981 = vmatpush1.msra.mxu0 0.0
    %1982 = vmatprep.subr.mxu0 0.0
    %1983 = vmatpush1.msra.mxu0 0.0
    %1984 = vmatprep.subr.mxu0 0.0
    %1985 = vmatpush1.msra.mxu0 0.0
    %1986 = vmatprep.subr.mxu0 0.0
    %1987 = vmatpush1.msra.mxu0 0.0
    %1988 = vmatprep.subr.mxu0 0.0
    %1989 = vmatpush1.msra.mxu0 0.0
    %1990 = vmatprep.subr.mxu0 0.0
    %1991 = vmatpush1.msra.mxu0 0.0
    %1992 = vmatprep.subr.mxu0 0.0
    %1993 = vmatpush1.msra.mxu0 0.0
    %1994 = vmatprep.subr.mxu0 0.0
    %1995 = vmatpush1.msra.mxu0 0.0
    %1996 = vmatprep.subr.mxu0 0.0
    %1997 = vmatpush1.msra.mxu0 0.0
    %1998 = vmatprep.subr.mxu0 0.0
    %1999 = vmatpush1.msra.mxu0 0.0
    %2000 = vmatprep.subr.mxu0 0.0
    %2001 = vmatpush1.msra.mxu0 0.0
    %2002 = vmatprep.subr.mxu0 0.0
    %2003 = vmatpush1.msra.mxu0 0.0
    %2004 = vmatprep.mubr.f32.mxu0 0.0
    %2005 = vmatmul.mubr.f32.gmra.mrb[0].mxu0 %v1621
    %v2006 = vpop.f32.mrb[0].mxu0
    %v2007 = vadd.f32 0.0, %v2006
    %v2008 = vpop.f32.mrb[0].mxu0
    %2009 = vdwg.mxu0
    %s2010 = scalar_lea.vmem %s12, 64
    %v2011 = vld [vmem:[%s2010] sm:$0xff]
    %v2012 = vld [vmem:[%s2010 + $0x8] sm:$0xff]
    %v2013 = vld [vmem:[%s2010 + $0x10] sm:$0xff]
    %v2014 = vld [vmem:[%s2010 + $0x18] sm:$0xff]
    %2015 = vmatprep.subr.mxu0 0.0
    %2016 = vmatpush1.msra.mxu0 %v2011
    %2017 = vmatprep.subr.mxu0 0.0
    %2018 = vmatpush1.msra.mxu0 %v2012
    %2019 = vmatprep.subr.mxu0 0.0
    %2020 = vmatpush1.msra.mxu0 %v2013
    %2021 = vmatprep.subr.mxu0 0.0
    %2022 = vmatpush1.msra.mxu0 %v2014
    %2023 = vmatprep.subr.mxu0 0.0
    %2024 = vmatpush1.msra.mxu0 0.0
    %2025 = vmatprep.subr.mxu0 0.0
    %2026 = vmatpush1.msra.mxu0 0.0
    %2027 = vmatprep.subr.mxu0 0.0
    %2028 = vmatpush1.msra.mxu0 0.0
    %2029 = vmatprep.subr.mxu0 0.0
    %2030 = vmatpush1.msra.mxu0 0.0
    %2031 = vmatprep.subr.mxu0 0.0
    %2032 = vmatpush1.msra.mxu0 0.0
    %2033 = vmatprep.subr.mxu0 0.0
    %2034 = vmatpush1.msra.mxu0 0.0
    %2035 = vmatprep.subr.mxu0 0.0
    %2036 = vmatpush1.msra.mxu0 0.0
    %2037 = vmatprep.subr.mxu0 0.0
    %2038 = vmatpush1.msra.mxu0 0.0
    %2039 = vmatprep.subr.mxu0 0.0
    %2040 = vmatpush1.msra.mxu0 0.0
    %2041 = vmatprep.subr.mxu0 0.0
    %2042 = vmatpush1.msra.mxu0 0.0
    %2043 = vmatprep.subr.mxu0 0.0
    %2044 = vmatpush1.msra.mxu0 0.0
    %2045 = vmatprep.subr.mxu0 0.0
    %2046 = vmatpush1.msra.mxu0 0.0
    %2047 = vmatprep.subr.mxu0 0.0
    %2048 = vmatpush1.msra.mxu0 0.0
    %2049 = vmatprep.subr.mxu0 0.0
    %2050 = vmatpush1.msra.mxu0 0.0
    %2051 = vmatprep.subr.mxu0 0.0
    %2052 = vmatpush1.msra.mxu0 0.0
    %2053 = vmatprep.subr.mxu0 0.0
    %2054 = vmatpush1.msra.mxu0 0.0
    %2055 = vmatprep.subr.mxu0 0.0
    %2056 = vmatpush1.msra.mxu0 0.0
    %2057 = vmatprep.subr.mxu0 0.0
    %2058 = vmatpush1.msra.mxu0 0.0
    %2059 = vmatprep.subr.mxu0 0.0
    %2060 = vmatpush1.msra.mxu0 0.0
    %2061 = vmatprep.subr.mxu0 0.0
    %2062 = vmatpush1.msra.mxu0 0.0
    %2063 = vmatprep.subr.mxu0 0.0
    %2064 = vmatpush1.msra.mxu0 0.0
    %2065 = vmatprep.subr.mxu0 0.0
    %2066 = vmatpush1.msra.mxu0 0.0
    %2067 = vmatprep.subr.mxu0 0.0
    %2068 = vmatpush1.msra.mxu0 0.0
    %2069 = vmatprep.subr.mxu0 0.0
    %2070 = vmatpush1.msra.mxu0 0.0
    %2071 = vmatprep.subr.mxu0 0.0
    %2072 = vmatpush1.msra.mxu0 0.0
    %2073 = vmatprep.subr.mxu0 0.0
    %2074 = vmatpush1.msra.mxu0 0.0
    %2075 = vmatprep.subr.mxu0 0.0
    %2076 = vmatpush1.msra.mxu0 0.0
    %2077 = vmatprep.subr.mxu0 0.0
    %2078 = vmatpush1.msra.mxu0 0.0
    %2079 = vmatprep.mubr.f32.mxu0 0.0
    %2080 = vmatmul.mubr.f32.gmra.mrb[0].mxu0 %v1621
    %v2081 = vpop.f32.mrb[0].mxu0
    %v2082 = vadd.f32 0.0, %v2081
    %v2083 = vpop.f32.mrb[0].mxu0
    %2084 = vdwg.mxu0
    %s2085 = scalar_lea.vmem %s13, 64
    %v2086 = vld [vmem:[%s2085] sm:$0xff]
    %v2087 = vld [vmem:[%s2085 + $0x8] sm:$0xff]
    %v2088 = vld [vmem:[%s2085 + $0x10] sm:$0xff]
    %v2089 = vld [vmem:[%s2085 + $0x18] sm:$0xff]
    %2090 = vmatprep.subr.mxu0 0.0
    %2091 = vmatpush1.msra.mxu0 %v2086
    %2092 = vmatprep.subr.mxu0 0.0
    %2093 = vmatpush1.msra.mxu0 %v2087
    %2094 = vmatprep.subr.mxu0 0.0
    %2095 = vmatpush1.msra.mxu0 %v2088
    %2096 = vmatprep.subr.mxu0 0.0
    %2097 = vmatpush1.msra.mxu0 %v2089
    %2098 = vmatprep.subr.mxu0 0.0
    %2099 = vmatpush1.msra.mxu0 0.0
    %2100 = vmatprep.subr.mxu0 0.0
    %2101 = vmatpush1.msra.mxu0 0.0
    %2102 = vmatprep.subr.mxu0 0.0
    %2103 = vmatpush1.msra.mxu0 0.0
    %2104 = vmatprep.subr.mxu0 0.0
    %2105 = vmatpush1.msra.mxu0 0.0
    %2106 = vmatprep.subr.mxu0 0.0
    %2107 = vmatpush1.msra.mxu0 0.0
    %2108 = vmatprep.subr.mxu0 0.0
    %2109 = vmatpush1.msra.mxu0 0.0
    %2110 = vmatprep.subr.mxu0 0.0
    %2111 = vmatpush1.msra.mxu0 0.0
    %2112 = vmatprep.subr.mxu0 0.0
    %2113 = vmatpush1.msra.mxu0 0.0
    %2114 = vmatprep.subr.mxu0 0.0
    %2115 = vmatpush1.msra.mxu0 0.0
    %2116 = vmatprep.subr.mxu0 0.0
    %2117 = vmatpush1.msra.mxu0 0.0
    %2118 = vmatprep.subr.mxu0 0.0
    %2119 = vmatpush1.msra.mxu0 0.0
    %2120 = vmatprep.subr.mxu0 0.0
    %2121 = vmatpush1.msra.mxu0 0.0
    %2122 = vmatprep.subr.mxu0 0.0
    %2123 = vmatpush1.msra.mxu0 0.0
    %2124 = vmatprep.subr.mxu0 0.0
    %2125 = vmatpush1.msra.mxu0 0.0
    %2126 = vmatprep.subr.mxu0 0.0
    %2127 = vmatpush1.msra.mxu0 0.0
    %2128 = vmatprep.subr.mxu0 0.0
    %2129 = vmatpush1.msra.mxu0 0.0
    %2130 = vmatprep.subr.mxu0 0.0
    %2131 = vmatpush1.msra.mxu0 0.0
    %2132 = vmatprep.subr.mxu0 0.0
    %2133 = vmatpush1.msra.mxu0 0.0
    %2134 = vmatprep.subr.mxu0 0.0
    %2135 = vmatpush1.msra.mxu0 0.0
    %2136 = vmatprep.subr.mxu0 0.0
    %2137 = vmatpush1.msra.mxu0 0.0
    %2138 = vmatprep.subr.mxu0 0.0
    %2139 = vmatpush1.msra.mxu0 0.0
    %2140 = vmatprep.subr.mxu0 0.0
    %2141 = vmatpush1.msra.mxu0 0.0
    %2142 = vmatprep.subr.mxu0 0.0
    %2143 = vmatpush1.msra.mxu0 0.0
    %2144 = vmatprep.subr.mxu0 0.0
    %2145 = vmatpush1.msra.mxu0 0.0
    %2146 = vmatprep.subr.mxu0 0.0
    %2147 = vmatpush1.msra.mxu0 0.0
    %2148 = vmatprep.subr.mxu0 0.0
    %2149 = vmatpush1.msra.mxu0 0.0
    %2150 = vmatprep.subr.mxu0 0.0
    %2151 = vmatpush1.msra.mxu0 0.0
    %2152 = vmatprep.subr.mxu0 0.0
    %2153 = vmatpush1.msra.mxu0 0.0
    %2154 = vmatprep.mubr.f32.mxu0 0.0
    %2155 = vmatmul.mubr.f32.gmra.mrb[0].mxu0 %v1621
    %v2156 = vpop.f32.mrb[0].mxu0
    %v2157 = vadd.f32 0.0, %v2156
    %v2158 = vpop.f32.mrb[0].mxu0
    %2159 = vdwg.mxu0
    %v2160 = vmul.f32 %v1857, %v83
    %v2161 = vmul.f32 %v1932, %v82
    %v2162 = vadd.f32 %v2160, %v2161
    %v2163 = vmul.f32 %v2007, %v83
    %v2164 = vmul.f32 %v2082, %v82
    %v2165 = vadd.f32 %v2163, %v2164
    %v2167 = vsel %vm663, %v2162, 0
    %v2170 = vsel %vm663, %v2165, 0
    %2172 = vmatprep.subr.mxu0 0.0
    %2173 = vmatpush1.xpose.msra.mxu0 %v2170
    %2174 = vmatprep.subr.mxu0 0.0
    %2175 = vmatpush1.xpose.msra.mxu0 0.0
    %2176 = vmatprep.subr.mxu0 0.0
    %2177 = vmatpush1.xpose.msra.mxu0 0.0
    %2178 = vmatprep.subr.mxu0 0.0
    %2179 = vmatpush1.xpose.msra.mxu0 0.0
    %2180 = vmatprep.subr.mxu0 0.0
    %2181 = vmatpush1.xpose.msra.mxu0 0.0
    %2182 = vmatprep.subr.mxu0 0.0
    %2183 = vmatpush1.xpose.msra.mxu0 0.0
    %2184 = vmatprep.subr.mxu0 0.0
    %2185 = vmatpush1.xpose.msra.mxu0 0.0
    %2186 = vmatprep.subr.mxu0 0.0
    %2187 = vmatpush1.xpose.msra.mxu0 0.0
    %2188 = vmatprep.subr.mxu0 0.0
    %2189 = vmatpush1.xpose.msra.mxu0 0.0
    %2190 = vmatprep.subr.mxu0 0.0
    %2191 = vmatpush1.xpose.msra.mxu0 0.0
    %2192 = vmatprep.subr.mxu0 0.0
    %2193 = vmatpush1.xpose.msra.mxu0 0.0
    %2194 = vmatprep.subr.mxu0 0.0
    %2195 = vmatpush1.xpose.msra.mxu0 0.0
    %2196 = vmatprep.subr.mxu0 0.0
    %2197 = vmatpush1.xpose.msra.mxu0 0.0
    %2198 = vmatprep.subr.mxu0 0.0
    %2199 = vmatpush1.xpose.msra.mxu0 0.0
    %2200 = vmatprep.subr.mxu0 0.0
    %2201 = vmatpush1.xpose.msra.mxu0 0.0
    %2202 = vmatprep.subr.mxu0 0.0
    %2203 = vmatpush1.xpose.msra.mxu0 0.0
    %2204 = vmatprep.subr.mxu0 0.0
    %2205 = vmatpush1.xpose.msra.mxu0 0.0
    %2206 = vmatprep.subr.mxu0 0.0
    %2207 = vmatpush1.xpose.msra.mxu0 0.0
    %2208 = vmatprep.subr.mxu0 0.0
    %2209 = vmatpush1.xpose.msra.mxu0 0.0
    %2210 = vmatprep.subr.mxu0 0.0
    %2211 = vmatpush1.xpose.msra.mxu0 0.0
    %2212 = vmatprep.subr.mxu0 0.0
    %2213 = vmatpush1.xpose.msra.mxu0 0.0
    %2214 = vmatprep.subr.mxu0 0.0
    %2215 = vmatpush1.xpose.msra.mxu0 0.0
    %2216 = vmatprep.subr.mxu0 0.0
    %2217 = vmatpush1.xpose.msra.mxu0 0.0
    %2218 = vmatprep.subr.mxu0 0.0
    %2219 = vmatpush1.xpose.msra.mxu0 0.0
    %2220 = vmatprep.subr.mxu0 0.0
    %2221 = vmatpush1.xpose.msra.mxu0 0.0
    %2222 = vmatprep.subr.mxu0 0.0
    %2223 = vmatpush1.xpose.msra.mxu0 0.0
    %2224 = vmatprep.subr.mxu0 0.0
    %2225 = vmatpush1.xpose.msra.mxu0 0.0
    %2226 = vmatprep.subr.mxu0 0.0
    %2227 = vmatpush1.xpose.msra.mxu0 0.0
    %2228 = vmatprep.subr.mxu0 0.0
    %2229 = vmatpush1.xpose.msra.mxu0 0.0
    %2230 = vmatprep.subr.mxu0 0.0
    %2231 = vmatpush1.xpose.msra.mxu0 0.0
    %2232 = vmatprep.subr.mxu0 0.0
    %2233 = vmatpush1.xpose.msra.mxu0 0.0
    %2234 = vmatprep.subr.mxu0 0.0
    %2235 = vmatpush1.xpose.msra.mxu0 0.0
    %2236 = vmatprep.mubr.f32.mxu0 0.0
    %2237 = vmatmul.mubr.f32.gmra.mrb[0].mxu0 %v2167
    %v2238 = vpop.f32.mrb[0].mxu0
    %v2239 = vadd.f32 0.0, %v2238
    %v2240 = vpop.f32.mrb[0].mxu0
    %2241 = vdwg.mxu0
    %v2242 = vmul.f32 %v2239, 0.25
    %v2243 = vadd.f32 %v2242, %v79
    %v2244 = vsel %vm742, %v2243, -inf
    %2245 = vmax.xlane.f32.xlu0 %v2244
    %v2246 = vpop.xlane.xlu0 %2245
    %v2247 = vsub.f32 %v2243, %v2246
    %v2248 = vmul.f32 %v2247, 1.442695
    %v2249 = vpow.pop %v2248
    %v2250 = vsel %vm742, %v2249, 0.0
    %2251 = vadd.xlane.f32.xlu0 %v2250
    %v2252 = vpop.xlane.xlu0 %2251
    %v2253 = vrcp.pop %v2252
    %v2254 = vmul.f32 %v2249, %v2253
    %v2256 = vsel %vm742, %v2254, 0
    %2258 = vmatprep.subr.mxu0 0.0
    %2259 = vmatpush1.msra.mxu0 %v2157
    %2260 = vmatprep.subr.mxu0 0.0
    %2261 = vmatpush1.msra.mxu0 0.0
    %2262 = vmatprep.subr.mxu0 0.0
    %2263 = vmatpush1.msra.mxu0 0.0
    %2264 = vmatprep.subr.mxu0 0.0
    %2265 = vmatpush1.msra.mxu0 0.0
    %2266 = vmatprep.subr.mxu0 0.0
    %2267 = vmatpush1.msra.mxu0 0.0
    %2268 = vmatprep.subr.mxu0 0.0
    %2269 = vmatpush1.msra.mxu0 0.0
    %2270 = vmatprep.subr.mxu0 0.0
    %2271 = vmatpush1.msra.mxu0 0.0
    %2272 = vmatprep.subr.mxu0 0.0
    %2273 = vmatpush1.msra.mxu0 0.0
    %2274 = vmatprep.subr.mxu0 0.0
    %2275 = vmatpush1.msra.mxu0 0.0
    %2276 = vmatprep.subr.mxu0 0.0
    %2277 = vmatpush1.msra.mxu0 0.0
    %2278 = vmatprep.subr.mxu0 0.0
    %2279 = vmatpush1.msra.mxu0 0.0
    %2280 = vmatprep.subr.mxu0 0.0
    %2281 = vmatpush1.msra.mxu0 0.0
    %2282 = vmatprep.subr.mxu0 0.0
    %2283 = vmatpush1.msra.mxu0 0.0
    %2284 = vmatprep.subr.mxu0 0.0
    %2285 = vmatpush1.msra.mxu0 0.0
    %2286 = vmatprep.subr.mxu0 0.0
    %2287 = vmatpush1.msra.mxu0 0.0
    %2288 = vmatprep.subr.mxu0 0.0
    %2289 = vmatpush1.msra.mxu0 0.0
    %2290 = vmatprep.subr.mxu0 0.0
    %2291 = vmatpush1.msra.mxu0 0.0
    %2292 = vmatprep.subr.mxu0 0.0
    %2293 = vmatpush1.msra.mxu0 0.0
    %2294 = vmatprep.subr.mxu0 0.0
    %2295 = vmatpush1.msra.mxu0 0.0
    %2296 = vmatprep.subr.mxu0 0.0
    %2297 = vmatpush1.msra.mxu0 0.0
    %2298 = vmatprep.subr.mxu0 0.0
    %2299 = vmatpush1.msra.mxu0 0.0
    %2300 = vmatprep.subr.mxu0 0.0
    %2301 = vmatpush1.msra.mxu0 0.0
    %2302 = vmatprep.subr.mxu0 0.0
    %2303 = vmatpush1.msra.mxu0 0.0
    %2304 = vmatprep.subr.mxu0 0.0
    %2305 = vmatpush1.msra.mxu0 0.0
    %2306 = vmatprep.subr.mxu0 0.0
    %2307 = vmatpush1.msra.mxu0 0.0
    %2308 = vmatprep.subr.mxu0 0.0
    %2309 = vmatpush1.msra.mxu0 0.0
    %2310 = vmatprep.subr.mxu0 0.0
    %2311 = vmatpush1.msra.mxu0 0.0
    %2312 = vmatprep.subr.mxu0 0.0
    %2313 = vmatpush1.msra.mxu0 0.0
    %2314 = vmatprep.subr.mxu0 0.0
    %2315 = vmatpush1.msra.mxu0 0.0
    %2316 = vmatprep.subr.mxu0 0.0
    %2317 = vmatpush1.msra.mxu0 0.0
    %2318 = vmatprep.subr.mxu0 0.0
    %2319 = vmatpush1.msra.mxu0 0.0
    %2320 = vmatprep.subr.mxu0 0.0
    %2321 = vmatpush1.msra.mxu0 0.0
    %2322 = vmatprep.mubr.f32.mxu0 0.0
    %2323 = vmatmul.mubr.f32.gmra.mrb[0].mxu0 %v2256
    %v2324 = vpop.f32.mrb[0].mxu0
    %v2325 = vadd.f32 0.0, %v2324
    %v2326 = vpop.f32.mrb[0].mxu0
    %2327 = vdwg.mxu0
    %s2328 = scalar_lea.vmem %s16, 32
    %v2329 = vld [vmem:[%s2328] sm:$0xff]
    %v2330 = vld [vmem:[%s2328 + $0x8] sm:$0xff]
    %v2332 = vsel %vm663, %v2325, 0
    %2334 = vmatprep.subr.mxu0 0.0
    %2335 = vmatpush1.msra.mxu0 %v2329
    %2336 = vmatprep.subr.mxu0 0.0
    %2337 = vmatpush1.msra.mxu0 %v2330
    %2338 = vmatprep.subr.mxu0 0.0
    %2339 = vmatpush1.msra.mxu0 0.0
    %2340 = vmatprep.subr.mxu0 0.0
    %2341 = vmatpush1.msra.mxu0 0.0
    %2342 = vmatprep.subr.mxu0 0.0
    %2343 = vmatpush1.msra.mxu0 0.0
    %2344 = vmatprep.subr.mxu0 0.0
    %2345 = vmatpush1.msra.mxu0 0.0
    %2346 = vmatprep.subr.mxu0 0.0
    %2347 = vmatpush1.msra.mxu0 0.0
    %2348 = vmatprep.subr.mxu0 0.0
    %2349 = vmatpush1.msra.mxu0 0.0
    %2350 = vmatprep.subr.mxu0 0.0
    %2351 = vmatpush1.msra.mxu0 0.0
    %2352 = vmatprep.subr.mxu0 0.0
    %2353 = vmatpush1.msra.mxu0 0.0
    %2354 = vmatprep.subr.mxu0 0.0
    %2355 = vmatpush1.msra.mxu0 0.0
    %2356 = vmatprep.subr.mxu0 0.0
    %2357 = vmatpush1.msra.mxu0 0.0
    %2358 = vmatprep.subr.mxu0 0.0
    %2359 = vmatpush1.msra.mxu0 0.0
    %2360 = vmatprep.subr.mxu0 0.0
    %2361 = vmatpush1.msra.mxu0 0.0
    %2362 = vmatprep.subr.mxu0 0.0
    %2363 = vmatpush1.msra.mxu0 0.0
    %2364 = vmatprep.subr.mxu0 0.0
    %2365 = vmatpush1.msra.mxu0 0.0
    %2366 = vmatprep.subr.mxu0 0.0
    %2367 = vmatpush1.msra.mxu0 0.0
    %2368 = vmatprep.subr.mxu0 0.0
    %2369 = vmatpush1.msra.mxu0 0.0
    %2370 = vmatprep.subr.mxu0 0.0
    %2371 = vmatpush1.msra.mxu0 0.0
    %2372 = vmatprep.subr.mxu0 0.0
    %2373 = vmatpush1.msra.mxu0 0.0
    %2374 = vmatprep.subr.mxu0 0.0
    %2375 = vmatpush1.msra.mxu0 0.0
    %2376 = vmatprep.subr.mxu0 0.0
    %2377 = vmatpush1.msra.mxu0 0.0
    %2378 = vmatprep.subr.mxu0 0.0
    %2379 = vmatpush1.msra.mxu0 0.0
    %2380 = vmatprep.subr.mxu0 0.0
    %2381 = vmatpush1.msra.mxu0 0.0
    %2382 = vmatprep.subr.mxu0 0.0
    %2383 = vmatpush1.msra.mxu0 0.0
    %2384 = vmatprep.subr.mxu0 0.0
    %2385 = vmatpush1.msra.mxu0 0.0
    %2386 = vmatprep.subr.mxu0 0.0
    %2387 = vmatpush1.msra.mxu0 0.0
    %2388 = vmatprep.subr.mxu0 0.0
    %2389 = vmatpush1.msra.mxu0 0.0
    %2390 = vmatprep.subr.mxu0 0.0
    %2391 = vmatpush1.msra.mxu0 0.0
    %2392 = vmatprep.subr.mxu0 0.0
    %2393 = vmatpush1.msra.mxu0 0.0
    %2394 = vmatprep.subr.mxu0 0.0
    %2395 = vmatpush1.msra.mxu0 0.0
    %2396 = vmatprep.subr.mxu0 0.0
    %2397 = vmatpush1.msra.mxu0 0.0
    %2398 = vmatprep.mubr.f32.mxu0 0.0
    %2399 = vmatmul.mubr.f32.gmra.mrb[0].mxu0 %v2332
    %v2400 = vpop.f32.mrb[0].mxu0
    %v2401 = vadd.f32 0.0, %v2400
    %v2402 = vpop.f32.mrb[0].mxu0
    %2403 = vdwg.mxu0
    %v2405 = vsel %vm902, %v1775, 0
    %2407 = vmatprep.subr.mxu0 0.0
    %2408 = vmatpush1.msra.mxu0 %v1777
    %2409 = vmatprep.subr.mxu0 0.0
    %2410 = vmatpush1.msra.mxu0 %v1778
    %2411 = vmatprep.subr.mxu0 0.0
    %2412 = vmatpush1.msra.mxu0 %v1779
    %2413 = vmatprep.subr.mxu0 0.0
    %2414 = vmatpush1.msra.mxu0 %v1780
    %2415 = vmatprep.subr.mxu0 0.0
    %2416 = vmatpush1.msra.mxu0 %v1781
    %2417 = vmatprep.subr.mxu0 0.0
    %2418 = vmatpush1.msra.mxu0 %v1782
    %2419 = vmatprep.subr.mxu0 0.0
    %2420 = vmatpush1.msra.mxu0 %v1783
    %2421 = vmatprep.subr.mxu0 0.0
    %2422 = vmatpush1.msra.mxu0 %v1784
    %2423 = vmatprep.subr.mxu0 0.0
    %2424 = vmatpush1.msra.mxu0 0.0
    %2425 = vmatprep.subr.mxu0 0.0
    %2426 = vmatpush1.msra.mxu0 0.0
    %2427 = vmatprep.subr.mxu0 0.0
    %2428 = vmatpush1.msra.mxu0 0.0
    %2429 = vmatprep.subr.mxu0 0.0
    %2430 = vmatpush1.msra.mxu0 0.0
    %2431 = vmatprep.subr.mxu0 0.0
    %2432 = vmatpush1.msra.mxu0 0.0
    %2433 = vmatprep.subr.mxu0 0.0
    %2434 = vmatpush1.msra.mxu0 0.0
    %2435 = vmatprep.subr.mxu0 0.0
    %2436 = vmatpush1.msra.mxu0 0.0
    %2437 = vmatprep.subr.mxu0 0.0
    %2438 = vmatpush1.msra.mxu0 0.0
    %2439 = vmatprep.subr.mxu0 0.0
    %2440 = vmatpush1.msra.mxu0 0.0
    %2441 = vmatprep.subr.mxu0 0.0
    %2442 = vmatpush1.msra.mxu0 0.0
    %2443 = vmatprep.subr.mxu0 0.0
    %2444 = vmatpush1.msra.mxu0 0.0
    %2445 = vmatprep.subr.mxu0 0.0
    %2446 = vmatpush1.msra.mxu0 0.0
    %2447 = vmatprep.subr.mxu0 0.0
    %2448 = vmatpush1.msra.mxu0 0.0
    %2449 = vmatprep.subr.mxu0 0.0
    %2450 = vmatpush1.msra.mxu0 0.0
    %2451 = vmatprep.subr.mxu0 0.0
    %2452 = vmatpush1.msra.mxu0 0.0
    %2453 = vmatprep.subr.mxu0 0.0
    %2454 = vmatpush1.msra.mxu0 0.0
    %2455 = vmatprep.subr.mxu0 0.0
    %2456 = vmatpush1.msra.mxu0 0.0
    %2457 = vmatprep.subr.mxu0 0.0
    %2458 = vmatpush1.msra.mxu0 0.0
    %2459 = vmatprep.subr.mxu0 0.0
    %2460 = vmatpush1.msra.mxu0 0.0
    %2461 = vmatprep.subr.mxu0 0.0
    %2462 = vmatpush1.msra.mxu0 0.0
    %2463 = vmatprep.subr.mxu0 0.0
    %2464 = vmatpush1.msra.mxu0 0.0
    %2465 = vmatprep.subr.mxu0 0.0
    %2466 = vmatpush1.msra.mxu0 0.0
    %2467 = vmatprep.subr.mxu0 0.0
    %2468 = vmatpush1.msra.mxu0 0.0
    %2469 = vmatprep.subr.mxu0 0.0
    %2470 = vmatpush1.msra.mxu0 0.0
    %2471 = vmatprep.mubr.f32.mxu0 0.0
    %2472 = vmatmul.mubr.f32.gmra.mrb[0].mxu0 %v2405
    %v2473 = vpop.f32.mrb[0].mxu0
    %v2474 = vadd.f32 %v2401, %v2473
    %v2475 = vpop.f32.mrb[0].mxu0
    %2476 = vdwg.mxu0
    %s2477 = scalar_lea.vmem %s9, 96
    %v2478 = vld [vmem:[%s2477] sm:$0xff]
    %v2479 = vld [vmem:[%s2477 + $0x8] sm:$0xff]
    %v2480 = vld [vmem:[%s2477 + $0x10] sm:$0xff]
    %v2481 = vld [vmem:[%s2477 + $0x18] sm:$0xff]
    %2482 = vmatprep.subr.mxu0 0.0
    %2483 = vmatpush1.msra.mxu0 %v2478
    %2484 = vmatprep.subr.mxu0 0.0
    %2485 = vmatpush1.msra.mxu0 %v2479
    %2486 = vmatprep.subr.mxu0 0.0
    %2487 = vmatpush1.msra.mxu0 %v2480
    %2488 = vmatprep.subr.mxu0 0.0
    %2489 = vmatpush1.msra.mxu0 %v2481
    %2490 = vmatprep.subr.mxu0 0.0
    %2491 = vmatpush1.msra.mxu0 0.0
    %2492 = vmatprep.subr.mxu0 0.0
    %2493 = vmatpush1.msra.mxu0 0.0
    %2494 = vmatprep.subr.mxu0 0.0
    %2495 = vmatpush1.msra.mxu0 0.0
    %2496 = vmatprep.subr.mxu0 0.0
    %2497 = vmatpush1.msra.mxu0 0.0
    %2498 = vmatprep.subr.mxu0 0.0
    %2499 = vmatpush1.msra.mxu0 0.0
    %2500 = vmatprep.subr.mxu0 0.0
    %2501 = vmatpush1.msra.mxu0 0.0
    %2502 = vmatprep.subr.mxu0 0.0
    %2503 = vmatpush1.msra.mxu0 0.0
    %2504 = vmatprep.subr.mxu0 0.0
    %2505 = vmatpush1.msra.mxu0 0.0
    %2506 = vmatprep.subr.mxu0 0.0
    %2507 = vmatpush1.msra.mxu0 0.0
    %2508 = vmatprep.subr.mxu0 0.0
    %2509 = vmatpush1.msra.mxu0 0.0
    %2510 = vmatprep.subr.mxu0 0.0
    %2511 = vmatpush1.msra.mxu0 0.0
    %2512 = vmatprep.subr.mxu0 0.0
    %2513 = vmatpush1.msra.mxu0 0.0
    %2514 = vmatprep.subr.mxu0 0.0
    %2515 = vmatpush1.msra.mxu0 0.0
    %2516 = vmatprep.subr.mxu0 0.0
    %2517 = vmatpush1.msra.mxu0 0.0
    %2518 = vmatprep.subr.mxu0 0.0
    %2519 = vmatpush1.msra.mxu0 0.0
    %2520 = vmatprep.subr.mxu0 0.0
    %2521 = vmatpush1.msra.mxu0 0.0
    %2522 = vmatprep.subr.mxu0 0.0
    %2523 = vmatpush1.msra.mxu0 0.0
    %2524 = vmatprep.subr.mxu0 0.0
    %2525 = vmatpush1.msra.mxu0 0.0
    %2526 = vmatprep.subr.mxu0 0.0
    %2527 = vmatpush1.msra.mxu0 0.0
    %2528 = vmatprep.subr.mxu0 0.0
    %2529 = vmatpush1.msra.mxu0 0.0
    %2530 = vmatprep.subr.mxu0 0.0
    %2531 = vmatpush1.msra.mxu0 0.0
    %2532 = vmatprep.subr.mxu0 0.0
    %2533 = vmatpush1.msra.mxu0 0.0
    %2534 = vmatprep.subr.mxu0 0.0
    %2535 = vmatpush1.msra.mxu0 0.0
    %2536 = vmatprep.subr.mxu0 0.0
    %2537 = vmatpush1.msra.mxu0 0.0
    %2538 = vmatprep.subr.mxu0 0.0
    %2539 = vmatpush1.msra.mxu0 0.0
    %2540 = vmatprep.subr.mxu0 0.0
    %2541 = vmatpush1.msra.mxu0 0.0
    %2542 = vmatprep.subr.mxu0 0.0
    %2543 = vmatpush1.msra.mxu0 0.0
    %2544 = vmatprep.subr.mxu0 0.0
    %2545 = vmatpush1.msra.mxu0 0.0
    %2546 = vmatprep.mubr.f32.mxu0 0.0
    %2547 = vmatmul.mubr.f32.gmra.mrb[0].mxu0 %v1621
    %v2548 = vpop.f32.mrb[0].mxu0
    %v2549 = vadd.f32 0.0, %v2548
    %v2550 = vpop.f32.mrb[0].mxu0
    %2551 = vdwg.mxu0
    %s2552 = scalar_lea.vmem %s10, 96
    %v2553 = vld [vmem:[%s2552] sm:$0xff]
    %v2554 = vld [vmem:[%s2552 + $0x8] sm:$0xff]
    %v2555 = vld [vmem:[%s2552 + $0x10] sm:$0xff]
    %v2556 = vld [vmem:[%s2552 + $0x18] sm:$0xff]
    %2557 = vmatprep.subr.mxu0 0.0
    %2558 = vmatpush1.msra.mxu0 %v2553
    %2559 = vmatprep.subr.mxu0 0.0
    %2560 = vmatpush1.msra.mxu0 %v2554
    %2561 = vmatprep.subr.mxu0 0.0
    %2562 = vmatpush1.msra.mxu0 %v2555
    %2563 = vmatprep.subr.mxu0 0.0
    %2564 = vmatpush1.msra.mxu0 %v2556
    %2565 = vmatprep.subr.mxu0 0.0
    %2566 = vmatpush1.msra.mxu0 0.0
    %2567 = vmatprep.subr.mxu0 0.0
    %2568 = vmatpush1.msra.mxu0 0.0
    %2569 = vmatprep.subr.mxu0 0.0
    %2570 = vmatpush1.msra.mxu0 0.0
    %2571 = vmatprep.subr.mxu0 0.0
    %2572 = vmatpush1.msra.mxu0 0.0
    %2573 = vmatprep.subr.mxu0 0.0
    %2574 = vmatpush1.msra.mxu0 0.0
    %2575 = vmatprep.subr.mxu0 0.0
    %2576 = vmatpush1.msra.mxu0 0.0
    %2577 = vmatprep.subr.mxu0 0.0
    %2578 = vmatpush1.msra.mxu0 0.0
    %2579 = vmatprep.subr.mxu0 0.0
    %2580 = vmatpush1.msra.mxu0 0.0
    %2581 = vmatprep.subr.mxu0 0.0
    %2582 = vmatpush1.msra.mxu0 0.0
    %2583 = vmatprep.subr.mxu0 0.0
    %2584 = vmatpush1.msra.mxu0 0.0
    %2585 = vmatprep.subr.mxu0 0.0
    %2586 = vmatpush1.msra.mxu0 0.0
    %2587 = vmatprep.subr.mxu0 0.0
    %2588 = vmatpush1.msra.mxu0 0.0
    %2589 = vmatprep.subr.mxu0 0.0
    %2590 = vmatpush1.msra.mxu0 0.0
    %2591 = vmatprep.subr.mxu0 0.0
    %2592 = vmatpush1.msra.mxu0 0.0
    %2593 = vmatprep.subr.mxu0 0.0
    %2594 = vmatpush1.msra.mxu0 0.0
    %2595 = vmatprep.subr.mxu0 0.0
    %2596 = vmatpush1.msra.mxu0 0.0
    %2597 = vmatprep.subr.mxu0 0.0
    %2598 = vmatpush1.msra.mxu0 0.0
    %2599 = vmatprep.subr.mxu0 0.0
    %2600 = vmatpush1.msra.mxu0 0.0
    %2601 = vmatprep.subr.mxu0 0.0
    %2602 = vmatpush1.msra.mxu0 0.0
    %2603 = vmatprep.subr.mxu0 0.0
    %2604 = vmatpush1.msra.mxu0 0.0
    %2605 = vmatprep.subr.mxu0 0.0
    %2606 = vmatpush1.msra.mxu0 0.0
    %2607 = vmatprep.subr.mxu0 0.0
    %2608 = vmatpush1.msra.mxu0 0.0
    %2609 = vmatprep.subr.mxu0 0.0
    %2610 = vmatpush1.msra.mxu0 0.0
    %2611 = vmatprep.subr.mxu0 0.0
    %2612 = vmatpush1.msra.mxu0 0.0
    %2613 = vmatprep.subr.mxu0 0.0
    %2614 = vmatpush1.msra.mxu0 0.0
    %2615 = vmatprep.subr.mxu0 0.0
    %2616 = vmatpush1.msra.mxu0 0.0
    %2617 = vmatprep.subr.mxu0 0.0
    %2618 = vmatpush1.msra.mxu0 0.0
    %2619 = vmatprep.subr.mxu0 0.0
    %2620 = vmatpush1.msra.mxu0 0.0
    %2621 = vmatprep.mubr.f32.mxu0 0.0
    %2622 = vmatmul.mubr.f32.gmra.mrb[0].mxu0 %v1621
    %v2623 = vpop.f32.mrb[0].mxu0
    %v2624 = vadd.f32 0.0, %v2623
    %v2625 = vpop.f32.mrb[0].mxu0
    %2626 = vdwg.mxu0
    %s2627 = scalar_lea.vmem %s11, 96
    %v2628 = vld [vmem:[%s2627] sm:$0xff]
    %v2629 = vld [vmem:[%s2627 + $0x8] sm:$0xff]
    %v2630 = vld [vmem:[%s2627 + $0x10] sm:$0xff]
    %v2631 = vld [vmem:[%s2627 + $0x18] sm:$0xff]
    %2632 = vmatprep.subr.mxu0 0.0
    %2633 = vmatpush1.msra.mxu0 %v2628
    %2634 = vmatprep.subr.mxu0 0.0
    %2635 = vmatpush1.msra.mxu0 %v2629
    %2636 = vmatprep.subr.mxu0 0.0
    %2637 = vmatpush1.msra.mxu0 %v2630
    %2638 = vmatprep.subr.mxu0 0.0
    %2639 = vmatpush1.msra.mxu0 %v2631
    %2640 = vmatprep.subr.mxu0 0.0
    %2641 = vmatpush1.msra.mxu0 0.0
    %2642 = vmatprep.subr.mxu0 0.0
    %2643 = vmatpush1.msra.mxu0 0.0
    %2644 = vmatprep.subr.mxu0 0.0
    %2645 = vmatpush1.msra.mxu0 0.0
    %2646 = vmatprep.subr.mxu0 0.0
    %2647 = vmatpush1.msra.mxu0 0.0
    %2648 = vmatprep.subr.mxu0 0.0
    %2649 = vmatpush1.msra.mxu0 0.0
    %2650 = vmatprep.subr.mxu0 0.0
    %2651 = vmatpush1.msra.mxu0 0.0
    %2652 = vmatprep.subr.mxu0 0.0
    %2653 = vmatpush1.msra.mxu0 0.0
    %2654 = vmatprep.subr.mxu0 0.0
    %2655 = vmatpush1.msra.mxu0 0.0
    %2656 = vmatprep.subr.mxu0 0.0
    %2657 = vmatpush1.msra.mxu0 0.0
    %2658 = vmatprep.subr.mxu0 0.0
    %2659 = vmatpush1.msra.mxu0 0.0
    %2660 = vmatprep.subr.mxu0 0.0
    %2661 = vmatpush1.msra.mxu0 0.0
    %2662 = vmatprep.subr.mxu0 0.0
    %2663 = vmatpush1.msra.mxu0 0.0
    %2664 = vmatprep.subr.mxu0 0.0
    %2665 = vmatpush1.msra.mxu0 0.0
    %2666 = vmatprep.subr.mxu0 0.0
    %2667 = vmatpush1.msra.mxu0 0.0
    %2668 = vmatprep.subr.mxu0 0.0
    %2669 = vmatpush1.msra.mxu0 0.0
    %2670 = vmatprep.subr.mxu0 0.0
    %2671 = vmatpush1.msra.mxu0 0.0
    %2672 = vmatprep.subr.mxu0 0.0
    %2673 = vmatpush1.msra.mxu0 0.0
    %2674 = vmatprep.subr.mxu0 0.0
    %2675 = vmatpush1.msra.mxu0 0.0
    %2676 = vmatprep.subr.mxu0 0.0
    %2677 = vmatpush1.msra.mxu0 0.0
    %2678 = vmatprep.subr.mxu0 0.0
    %2679 = vmatpush1.msra.mxu0 0.0
    %2680 = vmatprep.subr.mxu0 0.0
    %2681 = vmatpush1.msra.mxu0 0.0
    %2682 = vmatprep.subr.mxu0 0.0
    %2683 = vmatpush1.msra.mxu0 0.0
    %2684 = vmatprep.subr.mxu0 0.0
    %2685 = vmatpush1.msra.mxu0 0.0
    %2686 = vmatprep.subr.mxu0 0.0
    %2687 = vmatpush1.msra.mxu0 0.0
    %2688 = vmatprep.subr.mxu0 0.0
    %2689 = vmatpush1.msra.mxu0 0.0
    %2690 = vmatprep.subr.mxu0 0.0
    %2691 = vmatpush1.msra.mxu0 0.0
    %2692 = vmatprep.subr.mxu0 0.0
    %2693 = vmatpush1.msra.mxu0 0.0
    %2694 = vmatprep.subr.mxu0 0.0
    %2695 = vmatpush1.msra.mxu0 0.0
    %2696 = vmatprep.mubr.f32.mxu0 0.0
    %2697 = vmatmul.mubr.f32.gmra.mrb[0].mxu0 %v1621
    %v2698 = vpop.f32.mrb[0].mxu0
    %v2699 = vadd.f32 0.0, %v2698
    %v2700 = vpop.f32.mrb[0].mxu0
    %2701 = vdwg.mxu0
    %s2702 = scalar_lea.vmem %s12, 96
    %v2703 = vld [vmem:[%s2702] sm:$0xff]
    %v2704 = vld [vmem:[%s2702 + $0x8] sm:$0xff]
    %v2705 = vld [vmem:[%s2702 + $0x10] sm:$0xff]
    %v2706 = vld [vmem:[%s2702 + $0x18] sm:$0xff]
    %2707 = vmatprep.subr.mxu0 0.0
    %2708 = vmatpush1.msra.mxu0 %v2703
    %2709 = vmatprep.subr.mxu0 0.0
    %2710 = vmatpush1.msra.mxu0 %v2704
    %2711 = vmatprep.subr.mxu0 0.0
    %2712 = vmatpush1.msra.mxu0 %v2705
    %2713 = vmatprep.subr.mxu0 0.0
    %2714 = vmatpush1.msra.mxu0 %v2706
    %2715 = vmatprep.subr.mxu0 0.0
    %2716 = vmatpush1.msra.mxu0 0.0
    %2717 = vmatprep.subr.mxu0 0.0
    %2718 = vmatpush1.msra.mxu0 0.0
    %2719 = vmatprep.subr.mxu0 0.0
    %2720 = vmatpush1.msra.mxu0 0.0
    %2721 = vmatprep.subr.mxu0 0.0
    %2722 = vmatpush1.msra.mxu0 0.0
    %2723 = vmatprep.subr.mxu0 0.0
    %2724 = vmatpush1.msra.mxu0 0.0
    %2725 = vmatprep.subr.mxu0 0.0
    %2726 = vmatpush1.msra.mxu0 0.0
    %2727 = vmatprep.subr.mxu0 0.0
    %2728 = vmatpush1.msra.mxu0 0.0
    %2729 = vmatprep.subr.mxu0 0.0
    %2730 = vmatpush1.msra.mxu0 0.0
    %2731 = vmatprep.subr.mxu0 0.0
    %2732 = vmatpush1.msra.mxu0 0.0
    %2733 = vmatprep.subr.mxu0 0.0
    %2734 = vmatpush1.msra.mxu0 0.0
    %2735 = vmatprep.subr.mxu0 0.0
    %2736 = vmatpush1.msra.mxu0 0.0
    %2737 = vmatprep.subr.mxu0 0.0
    %2738 = vmatpush1.msra.mxu0 0.0
    %2739 = vmatprep.subr.mxu0 0.0
    %2740 = vmatpush1.msra.mxu0 0.0
    %2741 = vmatprep.subr.mxu0 0.0
    %2742 = vmatpush1.msra.mxu0 0.0
    %2743 = vmatprep.subr.mxu0 0.0
    %2744 = vmatpush1.msra.mxu0 0.0
    %2745 = vmatprep.subr.mxu0 0.0
    %2746 = vmatpush1.msra.mxu0 0.0
    %2747 = vmatprep.subr.mxu0 0.0
    %2748 = vmatpush1.msra.mxu0 0.0
    %2749 = vmatprep.subr.mxu0 0.0
    %2750 = vmatpush1.msra.mxu0 0.0
    %2751 = vmatprep.subr.mxu0 0.0
    %2752 = vmatpush1.msra.mxu0 0.0
    %2753 = vmatprep.subr.mxu0 0.0
    %2754 = vmatpush1.msra.mxu0 0.0
    %2755 = vmatprep.subr.mxu0 0.0
    %2756 = vmatpush1.msra.mxu0 0.0
    %2757 = vmatprep.subr.mxu0 0.0
    %2758 = vmatpush1.msra.mxu0 0.0
    %2759 = vmatprep.subr.mxu0 0.0
    %2760 = vmatpush1.msra.mxu0 0.0
    %2761 = vmatprep.subr.mxu0 0.0
    %2762 = vmatpush1.msra.mxu0 0.0
    %2763 = vmatprep.subr.mxu0 0.0
    %2764 = vmatpush1.msra.mxu0 0.0
    %2765 = vmatprep.subr.mxu0 0.0
    %2766 = vmatpush1.msra.mxu0 0.0
    %2767 = vmatprep.subr.mxu0 0.0
    %2768 = vmatpush1.msra.mxu0 0.0
    %2769 = vmatprep.subr.mxu0 0.0
    %2770 = vmatpush1.msra.mxu0 0.0
    %2771 = vmatprep.mubr.f32.mxu0 0.0
    %2772 = vmatmul.mubr.f32.gmra.mrb[0].mxu0 %v1621
    %v2773 = vpop.f32.mrb[0].mxu0
    %v2774 = vadd.f32 0.0, %v2773
    %v2775 = vpop.f32.mrb[0].mxu0
    %2776 = vdwg.mxu0
    %s2777 = scalar_lea.vmem %s13, 96
    %v2778 = vld [vmem:[%s2777] sm:$0xff]
    %v2779 = vld [vmem:[%s2777 + $0x8] sm:$0xff]
    %v2780 = vld [vmem:[%s2777 + $0x10] sm:$0xff]
    %v2781 = vld [vmem:[%s2777 + $0x18] sm:$0xff]
    %2782 = vmatprep.subr.mxu0 0.0
    %2783 = vmatpush1.msra.mxu0 %v2778
    %2784 = vmatprep.subr.mxu0 0.0
    %2785 = vmatpush1.msra.mxu0 %v2779
    %2786 = vmatprep.subr.mxu0 0.0
    %2787 = vmatpush1.msra.mxu0 %v2780
    %2788 = vmatprep.subr.mxu0 0.0
    %2789 = vmatpush1.msra.mxu0 %v2781
    %2790 = vmatprep.subr.mxu0 0.0
    %2791 = vmatpush1.msra.mxu0 0.0
    %2792 = vmatprep.subr.mxu0 0.0
    %2793 = vmatpush1.msra.mxu0 0.0
    %2794 = vmatprep.subr.mxu0 0.0
    %2795 = vmatpush1.msra.mxu0 0.0
    %2796 = vmatprep.subr.mxu0 0.0
    %2797 = vmatpush1.msra.mxu0 0.0
    %2798 = vmatprep.subr.mxu0 0.0
    %2799 = vmatpush1.msra.mxu0 0.0
    %2800 = vmatprep.subr.mxu0 0.0
    %2801 = vmatpush1.msra.mxu0 0.0
    %2802 = vmatprep.subr.mxu0 0.0
    %2803 = vmatpush1.msra.mxu0 0.0
    %2804 = vmatprep.subr.mxu0 0.0
    %2805 = vmatpush1.msra.mxu0 0.0
    %2806 = vmatprep.subr.mxu0 0.0
    %2807 = vmatpush1.msra.mxu0 0.0
    %2808 = vmatprep.subr.mxu0 0.0
    %2809 = vmatpush1.msra.mxu0 0.0
    %2810 = vmatprep.subr.mxu0 0.0
    %2811 = vmatpush1.msra.mxu0 0.0
    %2812 = vmatprep.subr.mxu0 0.0
    %2813 = vmatpush1.msra.mxu0 0.0
    %2814 = vmatprep.subr.mxu0 0.0
    %2815 = vmatpush1.msra.mxu0 0.0
    %2816 = vmatprep.subr.mxu0 0.0
    %2817 = vmatpush1.msra.mxu0 0.0
    %2818 = vmatprep.subr.mxu0 0.0
    %2819 = vmatpush1.msra.mxu0 0.0
    %2820 = vmatprep.subr.mxu0 0.0
    %2821 = vmatpush1.msra.mxu0 0.0
    %2822 = vmatprep.subr.mxu0 0.0
    %2823 = vmatpush1.msra.mxu0 0.0
    %2824 = vmatprep.subr.mxu0 0.0
    %2825 = vmatpush1.msra.mxu0 0.0
    %2826 = vmatprep.subr.mxu0 0.0
    %2827 = vmatpush1.msra.mxu0 0.0
    %2828 = vmatprep.subr.mxu0 0.0
    %2829 = vmatpush1.msra.mxu0 0.0
    %2830 = vmatprep.subr.mxu0 0.0
    %2831 = vmatpush1.msra.mxu0 0.0
    %2832 = vmatprep.subr.mxu0 0.0
    %2833 = vmatpush1.msra.mxu0 0.0
    %2834 = vmatprep.subr.mxu0 0.0
    %2835 = vmatpush1.msra.mxu0 0.0
    %2836 = vmatprep.subr.mxu0 0.0
    %2837 = vmatpush1.msra.mxu0 0.0
    %2838 = vmatprep.subr.mxu0 0.0
    %2839 = vmatpush1.msra.mxu0 0.0
    %2840 = vmatprep.subr.mxu0 0.0
    %2841 = vmatpush1.msra.mxu0 0.0
    %2842 = vmatprep.subr.mxu0 0.0
    %2843 = vmatpush1.msra.mxu0 0.0
    %2844 = vmatprep.subr.mxu0 0.0
    %2845 = vmatpush1.msra.mxu0 0.0
    %2846 = vmatprep.mubr.f32.mxu0 0.0
    %2847 = vmatmul.mubr.f32.gmra.mrb[0].mxu0 %v1621
    %v2848 = vpop.f32.mrb[0].mxu0
    %v2849 = vadd.f32 0.0, %v2848
    %v2850 = vpop.f32.mrb[0].mxu0
    %2851 = vdwg.mxu0
    %v2852 = vmul.f32 %v2549, %v83
    %v2853 = vmul.f32 %v2624, %v82
    %v2854 = vadd.f32 %v2852, %v2853
    %v2855 = vmul.f32 %v2699, %v83
    %v2856 = vmul.f32 %v2774, %v82
    %v2857 = vadd.f32 %v2855, %v2856
    %v2859 = vsel %vm663, %v2854, 0
    %v2862 = vsel %vm663, %v2857, 0
    %2864 = vmatprep.subr.mxu0 0.0
    %2865 = vmatpush1.xpose.msra.mxu0 %v2862
    %2866 = vmatprep.subr.mxu0 0.0
    %2867 = vmatpush1.xpose.msra.mxu0 0.0
    %2868 = vmatprep.subr.mxu0 0.0
    %2869 = vmatpush1.xpose.msra.mxu0 0.0
    %2870 = vmatprep.subr.mxu0 0.0
    %2871 = vmatpush1.xpose.msra.mxu0 0.0
    %2872 = vmatprep.subr.mxu0 0.0
    %2873 = vmatpush1.xpose.msra.mxu0 0.0
    %2874 = vmatprep.subr.mxu0 0.0
    %2875 = vmatpush1.xpose.msra.mxu0 0.0
    %2876 = vmatprep.subr.mxu0 0.0
    %2877 = vmatpush1.xpose.msra.mxu0 0.0
    %2878 = vmatprep.subr.mxu0 0.0
    %2879 = vmatpush1.xpose.msra.mxu0 0.0
    %2880 = vmatprep.subr.mxu0 0.0
    %2881 = vmatpush1.xpose.msra.mxu0 0.0
    %2882 = vmatprep.subr.mxu0 0.0
    %2883 = vmatpush1.xpose.msra.mxu0 0.0
    %2884 = vmatprep.subr.mxu0 0.0
    %2885 = vmatpush1.xpose.msra.mxu0 0.0
    %2886 = vmatprep.subr.mxu0 0.0
    %2887 = vmatpush1.xpose.msra.mxu0 0.0
    %2888 = vmatprep.subr.mxu0 0.0
    %2889 = vmatpush1.xpose.msra.mxu0 0.0
    %2890 = vmatprep.subr.mxu0 0.0
    %2891 = vmatpush1.xpose.msra.mxu0 0.0
    %2892 = vmatprep.subr.mxu0 0.0
    %2893 = vmatpush1.xpose.msra.mxu0 0.0
    %2894 = vmatprep.subr.mxu0 0.0
    %2895 = vmatpush1.xpose.msra.mxu0 0.0
    %2896 = vmatprep.subr.mxu0 0.0
    %2897 = vmatpush1.xpose.msra.mxu0 0.0
    %2898 = vmatprep.subr.mxu0 0.0
    %2899 = vmatpush1.xpose.msra.mxu0 0.0
    %2900 = vmatprep.subr.mxu0 0.0
    %2901 = vmatpush1.xpose.msra.mxu0 0.0
    %2902 = vmatprep.subr.mxu0 0.0
    %2903 = vmatpush1.xpose.msra.mxu0 0.0
    %2904 = vmatprep.subr.mxu0 0.0
    %2905 = vmatpush1.xpose.msra.mxu0 0.0
    %2906 = vmatprep.subr.mxu0 0.0
    %2907 = vmatpush1.xpose.msra.mxu0 0.0
    %2908 = vmatprep.subr.mxu0 0.0
    %2909 = vmatpush1.xpose.msra.mxu0 0.0
    %2910 = vmatprep.subr.mxu0 0.0
    %2911 = vmatpush1.xpose.msra.mxu0 0.0
    %2912 = vmatprep.subr.mxu0 0.0
    %2913 = vmatpush1.xpose.msra.mxu0 0.0
    %2914 = vmatprep.subr.mxu0 0.0
    %2915 = vmatpush1.xpose.msra.mxu0 0.0
    %2916 = vmatprep.subr.mxu0 0.0
    %2917 = vmatpush1.xpose.msra.mxu0 0.0
    %2918 = vmatprep.subr.mxu0 0.0
    %2919 = vmatpush1.xpose.msra.mxu0 0.0
    %2920 = vmatprep.subr.mxu0 0.0
    %2921 = vmatpush1.xpose.msra.mxu0 0.0
    %2922 = vmatprep.subr.mxu0 0.0
    %2923 = vmatpush1.xpose.msra.mxu0 0.0
    %2924 = vmatprep.subr.mxu0 0.0
    %2925 = vmatpush1.xpose.msra.mxu0 0.0
    %2926 = vmatprep.subr.mxu0 0.0
    %2927 = vmatpush1.xpose.msra.mxu0 0.0
    %2928 = vmatprep.mubr.f32.mxu0 0.0
    %2929 = vmatmul.mubr.f32.gmra.mrb[0].mxu0 %v2859
    %v2930 = vpop.f32.mrb[0].mxu0
    %v2931 = vadd.f32 0.0, %v2930
    %v2932 = vpop.f32.mrb[0].mxu0
    %2933 = vdwg.mxu0
    %v2934 = vmul.f32 %v2931, 0.25
    %v2935 = vadd.f32 %v2934, %v79
    %v2936 = vsel %vm742, %v2935, -inf
    %2937 = vmax.xlane.f32.xlu0 %v2936
    %v2938 = vpop.xlane.xlu0 %2937
    %v2939 = vsub.f32 %v2935, %v2938
    %v2940 = vmul.f32 %v2939, 1.442695
    %v2941 = vpow.pop %v2940
    %v2942 = vsel %vm742, %v2941, 0.0
    %2943 = vadd.xlane.f32.xlu0 %v2942
    %v2944 = vpop.xlane.xlu0 %2943
    %v2945 = vrcp.pop %v2944
    %v2946 = vmul.f32 %v2941, %v2945
    %v2948 = vsel %vm742, %v2946, 0
    %2950 = vmatprep.subr.mxu0 0.0
    %2951 = vmatpush1.msra.mxu0 %v2849
    %2952 = vmatprep.subr.mxu0 0.0
    %2953 = vmatpush1.msra.mxu0 0.0
    %2954 = vmatprep.subr.mxu0 0.0
    %2955 = vmatpush1.msra.mxu0 0.0
    %2956 = vmatprep.subr.mxu0 0.0
    %2957 = vmatpush1.msra.mxu0 0.0
    %2958 = vmatprep.subr.mxu0 0.0
    %2959 = vmatpush1.msra.mxu0 0.0
    %2960 = vmatprep.subr.mxu0 0.0
    %2961 = vmatpush1.msra.mxu0 0.0
    %2962 = vmatprep.subr.mxu0 0.0
    %2963 = vmatpush1.msra.mxu0 0.0
    %2964 = vmatprep.subr.mxu0 0.0
    %2965 = vmatpush1.msra.mxu0 0.0
    %2966 = vmatprep.subr.mxu0 0.0
    %2967 = vmatpush1.msra.mxu0 0.0
    %2968 = vmatprep.subr.mxu0 0.0
    %2969 = vmatpush1.msra.mxu0 0.0
    %2970 = vmatprep.subr.mxu0 0.0
    %2971 = vmatpush1.msra.mxu0 0.0
    %2972 = vmatprep.subr.mxu0 0.0
    %2973 = vmatpush1.msra.mxu0 0.0
    %2974 = vmatprep.subr.mxu0 0.0
    %2975 = vmatpush1.msra.mxu0 0.0
    %2976 = vmatprep.subr.mxu0 0.0
    %2977 = vmatpush1.msra.mxu0 0.0
    %2978 = vmatprep.subr.mxu0 0.0
    %2979 = vmatpush1.msra.mxu0 0.0
    %2980 = vmatprep.subr.mxu0 0.0
    %2981 = vmatpush1.msra.mxu0 0.0
    %2982 = vmatprep.subr.mxu0 0.0
    %2983 = vmatpush1.msra.mxu0 0.0
    %2984 = vmatprep.subr.mxu0 0.0
    %2985 = vmatpush1.msra.mxu0 0.0
    %2986 = vmatprep.subr.mxu0 0.0
    %2987 = vmatpush1.msra.mxu0 0.0
    %2988 = vmatprep.subr.mxu0 0.0
    %2989 = vmatpush1.msra.mxu0 0.0
    %2990 = vmatprep.subr.mxu0 0.0
    %2991 = vmatpush1.msra.mxu0 0.0
    %2992 = vmatprep.subr.mxu0 0.0
    %2993 = vmatpush1.msra.mxu0 0.0
    %2994 = vmatprep.subr.mxu0 0.0
    %2995 = vmatpush1.msra.mxu0 0.0
    %2996 = vmatprep.subr.mxu0 0.0
    %2997 = vmatpush1.msra.mxu0 0.0
    %2998 = vmatprep.subr.mxu0 0.0
    %2999 = vmatpush1.msra.mxu0 0.0
    %3000 = vmatprep.subr.mxu0 0.0
    %3001 = vmatpush1.msra.mxu0 0.0
    %3002 = vmatprep.subr.mxu0 0.0
    %3003 = vmatpush1.msra.mxu0 0.0
    %3004 = vmatprep.subr.mxu0 0.0
    %3005 = vmatpush1.msra.mxu0 0.0
    %3006 = vmatprep.subr.mxu0 0.0
    %3007 = vmatpush1.msra.mxu0 0.0
    %3008 = vmatprep.subr.mxu0 0.0
    %3009 = vmatpush1.msra.mxu0 0.0
    %3010 = vmatprep.subr.mxu0 0.0
    %3011 = vmatpush1.msra.mxu0 0.0
    %3012 = vmatprep.subr.mxu0 0.0
    %3013 = vmatpush1.msra.mxu0 0.0
    %3014 = vmatprep.mubr.f32.mxu0 0.0
    %3015 = vmatmul.mubr.f32.gmra.mrb[0].mxu0 %v2948
    %v3016 = vpop.f32.mrb[0].mxu0
    %v3017 = vadd.f32 0.0, %v3016
    %v3018 = vpop.f32.mrb[0].mxu0
    %3019 = vdwg.mxu0
    %s3020 = scalar_lea.vmem %s16, 48
    %v3021 = vld [vmem:[%s3020] sm:$0xff]
    %v3022 = vld [vmem:[%s3020 + $0x8] sm:$0xff]
    %v3024 = vsel %vm663, %v3017, 0
    %3026 = vmatprep.subr.mxu0 0.0
    %3027 = vmatpush1.msra.mxu0 %v3021
    %3028 = vmatprep.subr.mxu0 0.0
    %3029 = vmatpush1.msra.mxu0 %v3022
    %3030 = vmatprep.subr.mxu0 0.0
    %3031 = vmatpush1.msra.mxu0 0.0
    %3032 = vmatprep.subr.mxu0 0.0
    %3033 = vmatpush1.msra.mxu0 0.0
    %3034 = vmatprep.subr.mxu0 0.0
    %3035 = vmatpush1.msra.mxu0 0.0
    %3036 = vmatprep.subr.mxu0 0.0
    %3037 = vmatpush1.msra.mxu0 0.0
    %3038 = vmatprep.subr.mxu0 0.0
    %3039 = vmatpush1.msra.mxu0 0.0
    %3040 = vmatprep.subr.mxu0 0.0
    %3041 = vmatpush1.msra.mxu0 0.0
    %3042 = vmatprep.subr.mxu0 0.0
    %3043 = vmatpush1.msra.mxu0 0.0
    %3044 = vmatprep.subr.mxu0 0.0
    %3045 = vmatpush1.msra.mxu0 0.0
    %3046 = vmatprep.subr.mxu0 0.0
    %3047 = vmatpush1.msra.mxu0 0.0
    %3048 = vmatprep.subr.mxu0 0.0
    %3049 = vmatpush1.msra.mxu0 0.0
    %3050 = vmatprep.subr.mxu0 0.0
    %3051 = vmatpush1.msra.mxu0 0.0
    %3052 = vmatprep.subr.mxu0 0.0
    %3053 = vmatpush1.msra.mxu0 0.0
    %3054 = vmatprep.subr.mxu0 0.0
    %3055 = vmatpush1.msra.mxu0 0.0
    %3056 = vmatprep.subr.mxu0 0.0
    %3057 = vmatpush1.msra.mxu0 0.0
    %3058 = vmatprep.subr.mxu0 0.0
    %3059 = vmatpush1.msra.mxu0 0.0
    %3060 = vmatprep.subr.mxu0 0.0
    %3061 = vmatpush1.msra.mxu0 0.0
    %3062 = vmatprep.subr.mxu0 0.0
    %3063 = vmatpush1.msra.mxu0 0.0
    %3064 = vmatprep.subr.mxu0 0.0
    %3065 = vmatpush1.msra.mxu0 0.0
    %3066 = vmatprep.subr.mxu0 0.0
    %3067 = vmatpush1.msra.mxu0 0.0
    %3068 = vmatprep.subr.mxu0 0.0
    %3069 = vmatpush1.msra.mxu0 0.0
    %3070 = vmatprep.subr.mxu0 0.0
    %3071 = vmatpush1.msra.mxu0 0.0
    %3072 = vmatprep.subr.mxu0 0.0
    %3073 = vmatpush1.msra.mxu0 0.0
    %3074 = vmatprep.subr.mxu0 0.0
    %3075 = vmatpush1.msra.mxu0 0.0
    %3076 = vmatprep.subr.mxu0 0.0
    %3077 = vmatpush1.msra.mxu0 0.0
    %3078 = vmatprep.subr.mxu0 0.0
    %3079 = vmatpush1.msra.mxu0 0.0
    %3080 = vmatprep.subr.mxu0 0.0
    %3081 = vmatpush1.msra.mxu0 0.0
    %3082 = vmatprep.subr.mxu0 0.0
    %3083 = vmatpush1.msra.mxu0 0.0
    %3084 = vmatprep.subr.mxu0 0.0
    %3085 = vmatpush1.msra.mxu0 0.0
    %3086 = vmatprep.subr.mxu0 0.0
    %3087 = vmatpush1.msra.mxu0 0.0
    %3088 = vmatprep.subr.mxu0 0.0
    %3089 = vmatpush1.msra.mxu0 0.0
    %3090 = vmatprep.mubr.f32.mxu0 0.0
    %3091 = vmatmul.mubr.f32.gmra.mrb[0].mxu0 %v3024
    %v3092 = vpop.f32.mrb[0].mxu0
    %v3093 = vadd.f32 0.0, %v3092
    %v3094 = vpop.f32.mrb[0].mxu0
    %3095 = vdwg.mxu0
    %v3096 = vadd.f32 %v2474, %v3093
    %v3097 = vadd.f32 %v1596, %v3096
    %v3098 = vld [vmem:[%s7] sm:$0x1]
    %v3099 = vmul.f32 %v3097, %v3097
    %v3100 = vsel %vm87, %v3099, 0.0
    %3101 = vadd.xlane.f32.xlu0 %v3100
    %v3102 = vpop.xlane.xlu0 %3101
    %v3103 = vmul.f32 %v3102, %v91
    %v3104 = vadd.f32 %v3103, 1e-06
    %v3105 = vrsqrt.pop %v3104
    %v3106 = vmul.f32 %v3097, %v3105
    %v3108 = vlaneseq
    %v3109 = vshrl.u32 %v3108, 7
    %v3110 = vsub.s32 0, %v3109
    %v3111 = vrot.slane %v3098, %v3110
    %v3113 = vmul.f32 %v3106, %v3111
    %3114 = vst.msk [vmem:[#allocation2] sm:$0xff] %vm87, %v3113
    // Predicated region
    $region74: #{tpu_custom_call.1} parent=1 // pred_check
      _
    $region75: #{tpu_custom_call.1} parent=1 // pred_check_branch
      %3116 = sbr.rel (0) target = $region77
    $region76: #{tpu_custom_call.1} parent=1 // pred_region
      %s3118 = ssub.s32 128, 128
      %3119 = vsyncadd [#allocation3], %s3118
      %s3121 = sshll.u32 [#allocation2], 4
      %s3122 = int_to_ptr.vmem [resolvable:$true] %s3121
      %3124 = dma.vmem_to_hbm [thread:$0]  %s3122, 128, %s18, [#allocation3]
    $region77: #{tpu_custom_call.1} parent=1 // pred_fallthru
      _
    // Predicated region
    $region78: #{tpu_custom_call.1} parent=1 // pred_check
      _
    $region79: #{tpu_custom_call.1} parent=1 // pred_check_branch
      %3126 = sbr.rel (0) target = $region81
    $region80: #{tpu_custom_call.1} parent=1 // pred_region
      %3127 = dma.done [#allocation3], 128
    $region81: #{tpu_custom_call.1} parent=1 // pred_fallthru
      _
    %3128 = vsyncpa [#allocation3], 1

</llo_original>
